<compile_context>
chip_gen: v7x
topology: tpu7x:2x2x1
jax: 0.10.0
libtpu: 0.0.40
codegen_flags: <defaults>
</compile_context>

<pallas_src>
import jax
import jax.numpy as jnp
from jax.experimental import pallas as pl
from jax.experimental.pallas import tpu as pltpu

# Logical (PyTorch) sizes.
INPUT_SIZE = 28 * 28    # 784  (784 = 98*8, lane dim handled as full-array block)
HIDDEN_DIM = 400
LATENT_SIZE = 15

# Padded (TPU-friendly) internal sizes. Input/output stay at 784.
HID_PAD = 512           # 400 -> 512
LAT_PAD = 128           # 15  -> 128

TB_MAX = 1024           # max batch tile (multiple of 8); ~30 MiB VMEM at tb=1024


def _round_up(x, m):
    return ((x + m - 1) // m) * m


def _choose_tile(B):
    """Balanced batch tile: minimal padding, >=2 grid steps when feasible (v7x megacore)."""
    n_steps = max(1, -(-B // TB_MAX))
    if n_steps == 1 and B >= 16:
        n_steps = 2                       # give the 2nd TensorCore work on v7x
    tb = _round_up(-(-B // n_steps), 8)
    b_pad = _round_up(B, tb)
    return tb, b_pad


def ae_contrastive_kernel(x_ref,
                          w1_ref, b1_ref,   # encoder fc1: 784 -> 512
                          w2_ref, b2_ref,   # encoder fc2: 512 -> 128
                          w3_ref, b3_ref,   # decoder fc1: 128 -> 512
                          w4_ref, b4_ref,   # decoder fc2: 512 -> 784
                          o_ref):
    # f32 input tile, cast to bf16 for the MXU in-kernel (no wrapper pad/cast pass).
    x = x_ref[...].astype(jnp.bfloat16)                              # (tb, 784)

    # Encoder (bf16 MXU operands, f32 accumulation; epilogue math stays f32).
    h1 = jnp.dot(x, w1_ref[...], preferred_element_type=jnp.float32) + b1_ref[...]
    h1 = jnp.maximum(h1, 0.0)                                        # relu, f32
    z = jnp.dot(h1.astype(jnp.bfloat16), w2_ref[...],
                preferred_element_type=jnp.float32) + b2_ref[...]
    z = jnp.maximum(z, 0.0)                                          # relu, f32

    # Decoder
    h2 = jnp.dot(z.astype(jnp.bfloat16), w3_ref[...],
                 preferred_element_type=jnp.float32) + b3_ref[...]
    h2 = jnp.maximum(h2, 0.0)                                        # relu, f32
    y = jnp.dot(h2.astype(jnp.bfloat16), w4_ref[...],
                preferred_element_type=jnp.float32) + b4_ref[...]    # (tb, 784)

    # sigmoid = 1 / (1 + exp(-y)): exp + approx reciprocal both go to the EUP,
    # keeping the epilogue off the VALU. Output stored lane-exact at 784 wide.
    o_ref[...] = pl.reciprocal(1.0 + jnp.exp(-y), approx=True).astype(o_ref.dtype)


def init_params(key):
    """PyTorch nn.Linear-style uniform init; logical (unpadded) f32 params."""
    def linear(k, fan_in, fan_out):
        kw, kb = jax.random.split(k)
        bound = 1.0 / (fan_in ** 0.5)
        w = jax.random.uniform(kw, (fan_in, fan_out), jnp.float32, -bound, bound)
        b = jax.random.uniform(kb, (fan_out,), jnp.float32, -bound, bound)
        return w, b

    k1, k2, k3, k4 = jax.random.split(key, 4)
    w1, b1 = linear(k1, INPUT_SIZE, HIDDEN_DIM)    # encoder.fc1
    w2, b2 = linear(k2, HIDDEN_DIM, LATENT_SIZE)   # encoder.fc2
    w3, b3 = linear(k3, LATENT_SIZE, HIDDEN_DIM)   # decoder.fc1
    w4, b4 = linear(k4, HIDDEN_DIM, INPUT_SIZE)    # decoder.fc2
    return (w1, b1, w2, b2, w3, b3, w4, b4)


def _pad_w(w, rows, cols):
    """Zero-pad a (in, out) weight to (rows, cols) and cast to bf16."""
    return jnp.pad(w.astype(jnp.bfloat16),
                   ((0, rows - w.shape[0]), (0, cols - w.shape[1])))


def _pad_b(b, cols):
    """Zero-pad a (out,) bias to (1, cols); kept f32 (added post-accumulation)."""
    return jnp.pad(b.astype(jnp.float32), (0, cols - b.shape[0])).reshape(1, cols)


def pad_params(params):
    w1, b1, w2, b2, w3, b3, w4, b4 = params
    return (_pad_w(w1, INPUT_SIZE, HID_PAD), _pad_b(b1, HID_PAD),
            _pad_w(w2, HID_PAD, LAT_PAD),    _pad_b(b2, LAT_PAD),
            _pad_w(w3, LAT_PAD, HID_PAD),    _pad_b(b3, HID_PAD),
            _pad_w(w4, HID_PAD, INPUT_SIZE), _pad_b(b4, INPUT_SIZE))


@jax.jit
def ae_contrastive_forward(x, params):
    """x: (B, 1, 28, 28) f32 NCHW -> (B, 1, 28, 28) f32."""
    B = x.shape[0]
    tb, b_pad = _choose_tile(B)
    grid = (b_pad // tb,)

    # Raw f32 input, no lane padding; only pad the batch dim when tb doesn't divide B.
    x_flat = x.reshape(B, INPUT_SIZE)
    if b_pad != B:
        x_flat = jnp.pad(x_flat, ((0, b_pad - B), (0, 0)))

    pparams = pad_params(params)   # bf16 weights, f32 biases (tiny vs activations)

    # x / out are tiled over the batch; weights & biases are VMEM-resident
    # (constant index_map -> no re-DMA across grid steps).
    x_spec = pl.BlockSpec((tb, INPUT_SIZE), lambda i: (i, 0))
    out_spec = pl.BlockSpec((tb, INPUT_SIZE), lambda i: (i, 0))
    const2d = lambda i: (0, 0)
    # Note: grid-invariant params could be single-buffered (pl.Buffered(1)) to save
    # ~2 MiB VMEM; omitted since we sit comfortably inside the 48 MiB budget.
    param_specs = [
        pl.BlockSpec((INPUT_SIZE, HID_PAD), const2d), pl.BlockSpec((1, HID_PAD), const2d),
        pl.BlockSpec((HID_PAD, LAT_PAD), const2d),    pl.BlockSpec((1, LAT_PAD), const2d),
        pl.BlockSpec((LAT_PAD, HID_PAD), const2d),    pl.BlockSpec((1, HID_PAD), const2d),
        pl.BlockSpec((HID_PAD, INPUT_SIZE), const2d), pl.BlockSpec((1, INPUT_SIZE), const2d),
    ]

    w_elems = (INPUT_SIZE * HID_PAD + HID_PAD * LAT_PAD
               + LAT_PAD * HID_PAD + HID_PAD * INPUT_SIZE)
    cost = pl.CostEstimate(
        flops=2 * b_pad * w_elems,
        transcendentals=2 * b_pad * INPUT_SIZE,            # exp + reciprocal
        bytes_accessed=(b_pad * INPUT_SIZE * 4              # f32 input read
                        + b_pad * INPUT_SIZE * 4            # f32 output write
                        + w_elems * 2),                     # bf16 weights (read once)
    )

    out = pl.pallas_call(
        ae_contrastive_kernel,
        out_shape=jax.ShapeDtypeStruct((b_pad, INPUT_SIZE), jnp.float32),
        grid_spec=pltpu.PrefetchScalarGridSpec(
            num_scalar_prefetch=0,
            grid=grid,
            in_specs=[x_spec] + param_specs,
            out_specs=out_spec,
        ),
        compiler_params=pltpu.CompilerParams(
            dimension_semantics=("parallel",),   # shard batch tiles across TCs (v7x)
            vmem_limit_bytes=48 << 20,           # <= 48 MiB: safe on v7x's 64 MiB VMEM
        ),
        cost_estimate=cost,
    )(x_flat, *pparams)

    # Only batch padding (if any) to strip; no lane slice pass anymore.
    return out[:B].reshape(B, 1, 28, 28)


def ae_contrastive_reference(x, params):
    """Pure-JAX reference mirroring the kernel's bf16-matmul / f32-accumulate math."""
    w1, b1, w2, b2, w3, b3, w4, b4 = params

    def lin(a, w, b):
        return jnp.dot(a.astype(jnp.bfloat16), w.astype(jnp.bfloat16),
                       preferred_element_type=jnp.float32) + b

    B = x.shape[0]
    h = x.reshape(B, INPUT_SIZE)
    h = jnp.maximum(lin(h, w1, b1), 0.0)
    z = jnp.maximum(lin(h, w2, b2), 0.0)
    d = jnp.maximum(lin(z, w3, b3), 0.0)
    y = jax.nn.sigmoid(lin(d, w4, b4))
    return y.reshape(B, 1, 28, 28)


if __name__ == "__main__":
    key = jax.random.PRNGKey(0)
    k_params, k_x = jax.random.split(key)

    params = init_params(k_params)
    x = jax.random.normal(k_x, (2, 1, 28, 28), dtype=jnp.float32)  # small batch

    out = jax.block_until_ready(ae_contrastive_forward(x, params))
    ref = ae_contrastive_reference(x, params)

    assert out.shape == (2, 1, 28, 28)
    assert bool(jnp.all(jnp.isfinite(out))), "non-finite output"
    # Tolerance covers bf16 MXU operands + approx (EUP) reciprocal in the sigmoid.
    assert jnp.allclose(out, ref, atol=5e-3, rtol=5e-3), "mismatch vs reference"

    print("KERNEL_OK")
</pallas_src>

<mosaic_0001>
module attributes {stable_mosaic.version = 11 : i64} {
  func.func @ae_contrastive_kernel(%arg0: i32, %arg1: memref<8x784xf32, #tpu.memory_space<vmem>>, %arg2: memref<784x512xbf16, #tpu.memory_space<vmem>>, %arg3: memref<1x512xf32, #tpu.memory_space<vmem>>, %arg4: memref<512x128xbf16, #tpu.memory_space<vmem>>, %arg5: memref<1x128xf32, #tpu.memory_space<vmem>>, %arg6: memref<128x512xbf16, #tpu.memory_space<vmem>>, %arg7: memref<1x512xf32, #tpu.memory_space<vmem>>, %arg8: memref<512x784xbf16, #tpu.memory_space<vmem>>, %arg9: memref<1x784xf32, #tpu.memory_space<vmem>>, %arg10: memref<8x784xf32, #tpu.memory_space<vmem>>) attributes {dimension_semantics = [#tpu.dimension_semantics<parallel>], iteration_bounds = array<i64: 1>, scalar_prefetch = 0 : i64, scratch_operands = 0 : i64, tpu.core_type = #tpu.core_type<tc>, window_params = [{transform_indices = @transform_0, window_bounds = array<i64: 8, 784>}, {pipeline_mode = #tpu.pipeline_mode<synchronous>, transform_indices = @transform_1, window_bounds = array<i64: 784, 512>}, {pipeline_mode = #tpu.pipeline_mode<synchronous>, transform_indices = @transform_2, window_bounds = array<i64: 1, 512>}, {pipeline_mode = #tpu.pipeline_mode<synchronous>, transform_indices = @transform_3, window_bounds = array<i64: 512, 128>}, {pipeline_mode = #tpu.pipeline_mode<synchronous>, transform_indices = @transform_4, window_bounds = array<i64: 1, 128>}, {pipeline_mode = #tpu.pipeline_mode<synchronous>, transform_indices = @transform_5, window_bounds = array<i64: 128, 512>}, {pipeline_mode = #tpu.pipeline_mode<synchronous>, transform_indices = @transform_6, window_bounds = array<i64: 1, 512>}, {pipeline_mode = #tpu.pipeline_mode<synchronous>, transform_indices = @transform_7, window_bounds = array<i64: 512, 784>}, {pipeline_mode = #tpu.pipeline_mode<synchronous>, transform_indices = @transform_8, window_bounds = array<i64: 1, 784>}, {transform_indices = @transform_9, window_bounds = array<i64: 8, 784>}]} {
    %c0 = arith.constant 0 : index
    %c0_0 = arith.constant 0 : index
    %0 = vector.load %arg1[%c0, %c0_0] : memref<8x784xf32, #tpu.memory_space<vmem>>, vector<8x784xf32>
    %1 = arith.truncf %0 : vector<8x784xf32> to vector<8x784xbf16>
    %c0_1 = arith.constant 0 : index
    %c0_2 = arith.constant 0 : index
    %2 = vector.load %arg2[%c0_1, %c0_2] : memref<784x512xbf16, #tpu.memory_space<vmem>>, vector<784x512xbf16>
    %cst = arith.constant dense<0.000000e+00> : vector<8x512xf32>
    %3 = tpu.matmul %1, %2, %cst {dimension_numbers = #tpu.dot_dimension_numbers<[1], [0], [0], [1], [0, 0, 1, 1], [], []>} : vector<8x784xbf16>, vector<784x512xbf16>, vector<8x512xf32> -> vector<8x512xf32>
    %c0_3 = arith.constant 0 : index
    %c0_4 = arith.constant 0 : index
    %4 = vector.load %arg3[%c0_3, %c0_4] : memref<1x512xf32, #tpu.memory_space<vmem>>, vector<1x512xf32>
    %5 = vector.broadcast %4 : vector<1x512xf32> to vector<8x512xf32>
    %6 = arith.addf %3, %5 : vector<8x512xf32>
    %cst_5 = arith.constant 0.000000e+00 : f32
    %7 = vector.broadcast %cst_5 : f32 to vector<8x512xf32>
    %8 = arith.maximumf %6, %7 : vector<8x512xf32>
    %9 = arith.truncf %8 : vector<8x512xf32> to vector<8x512xbf16>
    %c0_6 = arith.constant 0 : index
    %c0_7 = arith.constant 0 : index
    %10 = vector.load %arg4[%c0_6, %c0_7] : memref<512x128xbf16, #tpu.memory_space<vmem>>, vector<512x128xbf16>
    %cst_8 = arith.constant dense<0.000000e+00> : vector<8x128xf32>
    %11 = tpu.matmul %9, %10, %cst_8 {dimension_numbers = #tpu.dot_dimension_numbers<[1], [0], [0], [1], [0, 0, 1, 1], [], []>} : vector<8x512xbf16>, vector<512x128xbf16>, vector<8x128xf32> -> vector<8x128xf32>
    %c0_9 = arith.constant 0 : index
    %c0_10 = arith.constant 0 : index
    %12 = vector.load %arg5[%c0_9, %c0_10] : memref<1x128xf32, #tpu.memory_space<vmem>>, vector<1x128xf32>
    %13 = vector.broadcast %12 : vector<1x128xf32> to vector<8x128xf32>
    %14 = arith.addf %11, %13 : vector<8x128xf32>
    %cst_11 = arith.constant 0.000000e+00 : f32
    %15 = vector.broadcast %cst_11 : f32 to vector<8x128xf32>
    %16 = arith.maximumf %14, %15 : vector<8x128xf32>
    %17 = arith.truncf %16 : vector<8x128xf32> to vector<8x128xbf16>
    %c0_12 = arith.constant 0 : index
    %c0_13 = arith.constant 0 : index
    %18 = vector.load %arg6[%c0_12, %c0_13] : memref<128x512xbf16, #tpu.memory_space<vmem>>, vector<128x512xbf16>
    %cst_14 = arith.constant dense<0.000000e+00> : vector<8x512xf32>
    %19 = tpu.matmul %17, %18, %cst_14 {dimension_numbers = #tpu.dot_dimension_numbers<[1], [0], [0], [1], [0, 0, 1, 1], [], []>} : vector<8x128xbf16>, vector<128x512xbf16>, vector<8x512xf32> -> vector<8x512xf32>
    %c0_15 = arith.constant 0 : index
    %c0_16 = arith.constant 0 : index
    %20 = vector.load %arg7[%c0_15, %c0_16] : memref<1x512xf32, #tpu.memory_space<vmem>>, vector<1x512xf32>
    %21 = vector.broadcast %20 : vector<1x512xf32> to vector<8x512xf32>
    %22 = arith.addf %19, %21 : vector<8x512xf32>
    %cst_17 = arith.constant 0.000000e+00 : f32
    %23 = vector.broadcast %cst_17 : f32 to vector<8x512xf32>
    %24 = arith.maximumf %22, %23 : vector<8x512xf32>
    %25 = arith.truncf %24 : vector<8x512xf32> to vector<8x512xbf16>
    %c0_18 = arith.constant 0 : index
    %c0_19 = arith.constant 0 : index
    %26 = vector.load %arg8[%c0_18, %c0_19] : memref<512x784xbf16, #tpu.memory_space<vmem>>, vector<512x784xbf16>
    %cst_20 = arith.constant dense<0.000000e+00> : vector<8x784xf32>
    %27 = tpu.matmul %25, %26, %cst_20 {dimension_numbers = #tpu.dot_dimension_numbers<[1], [0], [0], [1], [0, 0, 1, 1], [], []>} : vector<8x512xbf16>, vector<512x784xbf16>, vector<8x784xf32> -> vector<8x784xf32>
    %c0_21 = arith.constant 0 : index
    %c0_22 = arith.constant 0 : index
    %28 = vector.load %arg9[%c0_21, %c0_22] : memref<1x784xf32, #tpu.memory_space<vmem>>, vector<1x784xf32>
    %29 = vector.broadcast %28 : vector<1x784xf32> to vector<8x784xf32>
    %30 = arith.addf %27, %29 : vector<8x784xf32>
    %cst_23 = arith.constant 0.000000e+00 : f32
    %31 = vector.broadcast %cst_23 : f32 to vector<8x784xf32>
    %32 = arith.subf %31, %30 : vector<8x784xf32>
    %33 = math.exp %32 : vector<8x784xf32>
    %cst_24 = arith.constant 1.000000e+00 : f32
    %34 = vector.broadcast %cst_24 : f32 to vector<8x784xf32>
    %35 = arith.addf %34, %33 : vector<8x784xf32>
    %36 = tpu.reciprocal %35 {approx = true} : vector<8x784xf32> -> vector<8x784xf32>
    %c0_25 = arith.constant 0 : index
    %c0_26 = arith.constant 0 : index
    %37 = vector.load %arg10[%c0_25, %c0_26] : memref<8x784xf32, #tpu.memory_space<vmem>>, vector<8x784xf32>
    tpu.vector_store %arg10[%c0_25, %c0_26], %36 {strides = array<i32>} : memref<8x784xf32, #tpu.memory_space<vmem>>, vector<8x784xf32>,
    return
  }
  func.func @transform_0(%arg0: i32) -> (i32, i32) {
    %c0_i32 = arith.constant 0 : i32
    %c0_i32_0 = arith.constant 0 : i32
    return %arg0, %c0_i32 : i32, i32
  }
  func.func @transform_1(%arg0: i32) -> (i32, i32) {
    %c0_i32 = arith.constant 0 : i32
    %c0_i32_0 = arith.constant 0 : i32
    %c0_i32_1 = arith.constant 0 : i32
    return %c0_i32, %c0_i32_0 : i32, i32
  }
  func.func @transform_2(%arg0: i32) -> (i32, i32) {
    %c0_i32 = arith.constant 0 : i32
    %c0_i32_0 = arith.constant 0 : i32
    %c0_i32_1 = arith.constant 0 : i32
    return %c0_i32, %c0_i32_0 : i32, i32
  }
  func.func @transform_3(%arg0: i32) -> (i32, i32) {
    %c0_i32 = arith.constant 0 : i32
    %c0_i32_0 = arith.constant 0 : i32
    %c0_i32_1 = arith.constant 0 : i32
    return %c0_i32, %c0_i32_0 : i32, i32
  }
  func.func @transform_4(%arg0: i32) -> (i32, i32) {
    %c0_i32 = arith.constant 0 : i32
    %c0_i32_0 = arith.constant 0 : i32
    %c0_i32_1 = arith.constant 0 : i32
    return %c0_i32, %c0_i32_0 : i32, i32
  }
  func.func @transform_5(%arg0: i32) -> (i32, i32) {
    %c0_i32 = arith.constant 0 : i32
    %c0_i32_0 = arith.constant 0 : i32
    %c0_i32_1 = arith.constant 0 : i32
    return %c0_i32, %c0_i32_0 : i32, i32
  }
  func.func @transform_6(%arg0: i32) -> (i32, i32) {
    %c0_i32 = arith.constant 0 : i32
    %c0_i32_0 = arith.constant 0 : i32
    %c0_i32_1 = arith.constant 0 : i32
    return %c0_i32, %c0_i32_0 : i32, i32
  }
  func.func @transform_7(%arg0: i32) -> (i32, i32) {
    %c0_i32 = arith.constant 0 : i32
    %c0_i32_0 = arith.constant 0 : i32
    %c0_i32_1 = arith.constant 0 : i32
    return %c0_i32, %c0_i32_0 : i32, i32
  }
  func.func @transform_8(%arg0: i32) -> (i32, i32) {
    %c0_i32 = arith.constant 0 : i32
    %c0_i32_0 = arith.constant 0 : i32
    %c0_i32_1 = arith.constant 0 : i32
    return %c0_i32, %c0_i32_0 : i32, i32
  }
  func.func @transform_9(%arg0: i32) -> (i32, i32) {
    %c0_i32 = arith.constant 0 : i32
    %c0_i32_0 = arith.constant 0 : i32
    return %arg0, %c0_i32 : i32, i32
  }
}

</mosaic_0001>

<llo_original>
// kernel: ae_contrastive_forward.1
$region0: #{ae_contrastive_forward.1}
  #allocation0 [shape = 'u32[]', space=smem, size = 0x4, offset = 0x4, fixed_abs, tag = 'smem constant byte address 0x4 - core index']
  #allocation1 [shape = 'u32[144,128]{1,0:T(1,128)}', space=vmem, size = 0x12000, scoped, tag = 'internal scratch']
  %s0 = inlined_call_operand.vmem [shape: f32[8,784], index: 0, kind: input, shape index: {}]
  %s1 = inlined_call_operand.vmem [shape: bf16[784,512], index: 1, kind: input, shape index: {}]
  %s2 = inlined_call_operand.vmem [shape: f32[1,512], index: 2, kind: input, shape index: {}]
  %s3 = inlined_call_operand.vmem [shape: bf16[512,128], index: 3, kind: input, shape index: {}]
  %s4 = inlined_call_operand.vmem [shape: f32[1,128], index: 4, kind: input, shape index: {}]
  %s5 = inlined_call_operand.vmem [shape: bf16[128,512], index: 5, kind: input, shape index: {}]
  %s6 = inlined_call_operand.vmem [shape: f32[1,512], index: 6, kind: input, shape index: {}]
  %s7 = inlined_call_operand.vmem [shape: bf16[512,784], index: 7, kind: input, shape index: {}]
  %s8 = inlined_call_operand.vmem [shape: f32[1,784], index: 8, kind: input, shape index: {}]
  %s9 = inlined_call_operand.vmem [shape: f32[8,784], index: 9, kind: output, shape index: {}]
  %s10 = sld [smem:[#allocation0]]
  $region46: #{ae_contrastive_forward.1} parent=0
    _
  %s12 = ssub.s32 1, %s10
  %s13 = scalar_select 0, %s12, %s10
  // Predicated region
  $region2: #{ae_contrastive_forward.1} parent=0 // pred_check
    _
  $region3: #{ae_contrastive_forward.1} parent=0 // pred_check_branch
    %15 = sbr.rel (0) target = $region5
  $region4: #{ae_contrastive_forward.1} parent=0 // pred_region
    _
  $region5: #{ae_contrastive_forward.1} parent=0 // pred_fallthru
    _
  // Predicated region
  $region6: #{ae_contrastive_forward.1} parent=0 // pred_check
    _
  $region7: #{ae_contrastive_forward.1} parent=0 // pred_check_branch
    %17 = sbr.rel (0) target = $region9
  $region8: #{ae_contrastive_forward.1} parent=0 // pred_region
    _
  $region9: #{ae_contrastive_forward.1} parent=0 // pred_fallthru
    _
  // Predicated region
  $region10: #{ae_contrastive_forward.1} parent=0 // pred_check
    _
  $region11: #{ae_contrastive_forward.1} parent=0 // pred_check_branch
    %19 = sbr.rel (0) target = $region13
  $region12: #{ae_contrastive_forward.1} parent=0 // pred_region
    _
  $region13: #{ae_contrastive_forward.1} parent=0 // pred_fallthru
    _
  // Predicated region
  $region14: #{ae_contrastive_forward.1} parent=0 // pred_check
    _
  $region15: #{ae_contrastive_forward.1} parent=0 // pred_check_branch
    %21 = sbr.rel (0) target = $region17
  $region16: #{ae_contrastive_forward.1} parent=0 // pred_region
    _
  $region17: #{ae_contrastive_forward.1} parent=0 // pred_fallthru
    _
  // Predicated region
  $region18: #{ae_contrastive_forward.1} parent=0 // pred_check
    _
  $region19: #{ae_contrastive_forward.1} parent=0 // pred_check_branch
    %23 = sbr.rel (0) target = $region21
  $region20: #{ae_contrastive_forward.1} parent=0 // pred_region
    _
  $region21: #{ae_contrastive_forward.1} parent=0 // pred_fallthru
    _
  // Predicated region
  $region22: #{ae_contrastive_forward.1} parent=0 // pred_check
    _
  $region23: #{ae_contrastive_forward.1} parent=0 // pred_check_branch
    %25 = sbr.rel (0) target = $region25
  $region24: #{ae_contrastive_forward.1} parent=0 // pred_region
    _
  $region25: #{ae_contrastive_forward.1} parent=0 // pred_fallthru
    _
  // Predicated region
  $region26: #{ae_contrastive_forward.1} parent=0 // pred_check
    _
  $region27: #{ae_contrastive_forward.1} parent=0 // pred_check_branch
    %27 = sbr.rel (0) target = $region29
  $region28: #{ae_contrastive_forward.1} parent=0 // pred_region
    _
  $region29: #{ae_contrastive_forward.1} parent=0 // pred_fallthru
    _
  // Predicated region
  $region30: #{ae_contrastive_forward.1} parent=0 // pred_check
    _
  $region31: #{ae_contrastive_forward.1} parent=0 // pred_check_branch
    %29 = sbr.rel (0) target = $region33
  $region32: #{ae_contrastive_forward.1} parent=0 // pred_region
    _
  $region33: #{ae_contrastive_forward.1} parent=0 // pred_fallthru
    _
  // Predicated region
  $region34: #{ae_contrastive_forward.1} parent=0 // pred_check
    _
  $region35: #{ae_contrastive_forward.1} parent=0 // pred_check_branch
    %31 = sbr.rel (0) target = $region37
  $region36: #{ae_contrastive_forward.1} parent=0 // pred_region
    _
  $region37: #{ae_contrastive_forward.1} parent=0 // pred_fallthru
    _
  %v33 = vld [vmem:[%s0] sm:$0xff]
  %v34 = vld [vmem:[%s0 + $0x8] sm:$0xff]
  %v35 = vld [vmem:[%s0 + $0x10] sm:$0xff]
  %v36 = vld [vmem:[%s0 + $0x18] sm:$0xff]
  %v37 = vld [vmem:[%s0 + $0x20] sm:$0xff]
  %v38 = vld [vmem:[%s0 + $0x28] sm:$0xff]
  %v39 = vld [vmem:[%s0 + $0x30] sm:$0xff]
  %v40 = vpack.c.bf16 %v33, %v33
  %v41 = vpack.c.bf16 %v34, %v34
  %v42 = vpack.c.bf16 %v35, %v35
  %v43 = vpack.c.bf16 %v36, %v36
  %v44 = vpack.c.bf16 %v37, %v37
  %v45 = vpack.c.bf16 %v38, %v38
  %v46 = vpack.c.bf16 %v39, %v39
  %v47 = vld [vmem:[%s1] sm:$0xff]
  %v48 = vld [vmem:[%s1 + $0x8] sm:$0xff]
  %v49 = vld [vmem:[%s1 + $0x10] sm:$0xff]
  %v50 = vld [vmem:[%s1 + $0x18] sm:$0xff]
  %v51 = vld [vmem:[%s1 + $0x20] sm:$0xff]
  %v52 = vld [vmem:[%s1 + $0x28] sm:$0xff]
  %v53 = vld [vmem:[%s1 + $0x30] sm:$0xff]
  %v54 = vld [vmem:[%s1 + $0x38] sm:$0xff]
  %v55 = vld [vmem:[%s1 + $0x40] sm:$0xff]
  %v56 = vld [vmem:[%s1 + $0x48] sm:$0xff]
  %v57 = vld [vmem:[%s1 + $0x50] sm:$0xff]
  %v58 = vld [vmem:[%s1 + $0x58] sm:$0xff]
  %v59 = vld [vmem:[%s1 + $0x60] sm:$0xff]
  %v60 = vld [vmem:[%s1 + $0x68] sm:$0xff]
  %v61 = vld [vmem:[%s1 + $0x70] sm:$0xff]
  %v62 = vld [vmem:[%s1 + $0x78] sm:$0xff]
  %v63 = vld [vmem:[%s1 + $0x80] sm:$0xff]
  %v64 = vld [vmem:[%s1 + $0x88] sm:$0xff]
  %v65 = vld [vmem:[%s1 + $0x90] sm:$0xff]
  %v66 = vld [vmem:[%s1 + $0x98] sm:$0xff]
  %v67 = vld [vmem:[%s1 + $0xa0] sm:$0xff]
  %v68 = vld [vmem:[%s1 + $0xa8] sm:$0xff]
  %v69 = vld [vmem:[%s1 + $0xb0] sm:$0xff]
  %v70 = vld [vmem:[%s1 + $0xb8] sm:$0xff]
  %v71 = vld [vmem:[%s1 + $0xc0] sm:$0xff]
  %v72 = vld [vmem:[%s1 + $0xc8] sm:$0xff]
  %v73 = vld [vmem:[%s1 + $0xd0] sm:$0xff]
  %v74 = vld [vmem:[%s1 + $0xd8] sm:$0xff]
  %v75 = vld [vmem:[%s1 + $0xe0] sm:$0xff]
  %v76 = vld [vmem:[%s1 + $0xe8] sm:$0xff]
  %v77 = vld [vmem:[%s1 + $0xf0] sm:$0xff]
  %v78 = vld [vmem:[%s1 + $0xf8] sm:$0xff]
  %v79 = vld [vmem:[%s1 + $0x100] sm:$0xff]
  %v80 = vld [vmem:[%s1 + $0x108] sm:$0xff]
  %v81 = vld [vmem:[%s1 + $0x110] sm:$0xff]
  %v82 = vld [vmem:[%s1 + $0x118] sm:$0xff]
  %v83 = vld [vmem:[%s1 + $0x120] sm:$0xff]
  %v84 = vld [vmem:[%s1 + $0x128] sm:$0xff]
  %v85 = vld [vmem:[%s1 + $0x130] sm:$0xff]
  %v86 = vld [vmem:[%s1 + $0x138] sm:$0xff]
  %v87 = vld [vmem:[%s1 + $0x140] sm:$0xff]
  %v88 = vld [vmem:[%s1 + $0x148] sm:$0xff]
  %v89 = vld [vmem:[%s1 + $0x150] sm:$0xff]
  %v90 = vld [vmem:[%s1 + $0x158] sm:$0xff]
  %v91 = vld [vmem:[%s1 + $0x160] sm:$0xff]
  %v92 = vld [vmem:[%s1 + $0x168] sm:$0xff]
  %v93 = vld [vmem:[%s1 + $0x170] sm:$0xff]
  %v94 = vld [vmem:[%s1 + $0x178] sm:$0xff]
  %v95 = vld [vmem:[%s1 + $0x180] sm:$0xff]
  %v96 = vld [vmem:[%s1 + $0x188] sm:$0xff]
  %v97 = vld [vmem:[%s1 + $0x190] sm:$0xff]
  %v98 = vld [vmem:[%s1 + $0x198] sm:$0xff]
  %v99 = vld [vmem:[%s1 + $0x1a0] sm:$0xff]
  %v100 = vld [vmem:[%s1 + $0x1a8] sm:$0xff]
  %v101 = vld [vmem:[%s1 + $0x1b0] sm:$0xff]
  %v102 = vld [vmem:[%s1 + $0x1b8] sm:$0xff]
  %v103 = vld [vmem:[%s1 + $0x1c0] sm:$0xff]
  %v104 = vld [vmem:[%s1 + $0x1c8] sm:$0xff]
  %v105 = vld [vmem:[%s1 + $0x1d0] sm:$0xff]
  %v106 = vld [vmem:[%s1 + $0x1d8] sm:$0xff]
  %v107 = vld [vmem:[%s1 + $0x1e0] sm:$0xff]
  %v108 = vld [vmem:[%s1 + $0x1e8] sm:$0xff]
  %v109 = vld [vmem:[%s1 + $0x1f0] sm:$0xff]
  %v110 = vld [vmem:[%s1 + $0x1f8] sm:$0xff]
  %v111 = vld [vmem:[%s1 + $0x200] sm:$0xff]
  %v112 = vld [vmem:[%s1 + $0x208] sm:$0xff]
  %v113 = vld [vmem:[%s1 + $0x210] sm:$0xff]
  %v114 = vld [vmem:[%s1 + $0x218] sm:$0xff]
  %v115 = vld [vmem:[%s1 + $0x220] sm:$0xff]
  %v116 = vld [vmem:[%s1 + $0x228] sm:$0xff]
  %v117 = vld [vmem:[%s1 + $0x230] sm:$0xff]
  %v118 = vld [vmem:[%s1 + $0x238] sm:$0xff]
  %v119 = vld [vmem:[%s1 + $0x240] sm:$0xff]
  %v120 = vld [vmem:[%s1 + $0x248] sm:$0xff]
  %v121 = vld [vmem:[%s1 + $0x250] sm:$0xff]
  %v122 = vld [vmem:[%s1 + $0x258] sm:$0xff]
  %v123 = vld [vmem:[%s1 + $0x260] sm:$0xff]
  %v124 = vld [vmem:[%s1 + $0x268] sm:$0xff]
  %v125 = vld [vmem:[%s1 + $0x270] sm:$0xff]
  %v126 = vld [vmem:[%s1 + $0x278] sm:$0xff]
  %v127 = vld [vmem:[%s1 + $0x280] sm:$0xff]
  %v128 = vld [vmem:[%s1 + $0x288] sm:$0xff]
  %v129 = vld [vmem:[%s1 + $0x290] sm:$0xff]
  %v130 = vld [vmem:[%s1 + $0x298] sm:$0xff]
  %v131 = vld [vmem:[%s1 + $0x2a0] sm:$0xff]
  %v132 = vld [vmem:[%s1 + $0x2a8] sm:$0xff]
  %v133 = vld [vmem:[%s1 + $0x2b0] sm:$0xff]
  %v134 = vld [vmem:[%s1 + $0x2b8] sm:$0xff]
  %v135 = vld [vmem:[%s1 + $0x2c0] sm:$0xff]
  %v136 = vld [vmem:[%s1 + $0x2c8] sm:$0xff]
  %v137 = vld [vmem:[%s1 + $0x2d0] sm:$0xff]
  %v138 = vld [vmem:[%s1 + $0x2d8] sm:$0xff]
  %v139 = vld [vmem:[%s1 + $0x2e0] sm:$0xff]
  %v140 = vld [vmem:[%s1 + $0x2e8] sm:$0xff]
  %v141 = vld [vmem:[%s1 + $0x2f0] sm:$0xff]
  %v142 = vld [vmem:[%s1 + $0x2f8] sm:$0xff]
  %v143 = vld [vmem:[%s1 + $0x300] sm:$0xff]
  %v144 = vld [vmem:[%s1 + $0x308] sm:$0xff]
  %v145 = vld [vmem:[%s1 + $0x310] sm:$0xff]
  %v146 = vld [vmem:[%s1 + $0x318] sm:$0xff]
  %v147 = vld [vmem:[%s1 + $0x320] sm:$0xff]
  %v148 = vld [vmem:[%s1 + $0x328] sm:$0xff]
  %v149 = vld [vmem:[%s1 + $0x330] sm:$0xff]
  %v150 = vld [vmem:[%s1 + $0x338] sm:$0xff]
  %v151 = vld [vmem:[%s1 + $0x340] sm:$0xff]
  %v152 = vld [vmem:[%s1 + $0x348] sm:$0xff]
  %v153 = vld [vmem:[%s1 + $0x350] sm:$0xff]
  %v154 = vld [vmem:[%s1 + $0x358] sm:$0xff]
  %v155 = vld [vmem:[%s1 + $0x360] sm:$0xff]
  %v156 = vld [vmem:[%s1 + $0x368] sm:$0xff]
  %v157 = vld [vmem:[%s1 + $0x370] sm:$0xff]
  %v158 = vld [vmem:[%s1 + $0x378] sm:$0xff]
  %v159 = vld [vmem:[%s1 + $0x380] sm:$0xff]
  %v160 = vld [vmem:[%s1 + $0x388] sm:$0xff]
  %v161 = vld [vmem:[%s1 + $0x390] sm:$0xff]
  %v162 = vld [vmem:[%s1 + $0x398] sm:$0xff]
  %v163 = vld [vmem:[%s1 + $0x3a0] sm:$0xff]
  %v164 = vld [vmem:[%s1 + $0x3a8] sm:$0xff]
  %v165 = vld [vmem:[%s1 + $0x3b0] sm:$0xff]
  %v166 = vld [vmem:[%s1 + $0x3b8] sm:$0xff]
  %v167 = vld [vmem:[%s1 + $0x3c0] sm:$0xff]
  %v168 = vld [vmem:[%s1 + $0x3c8] sm:$0xff]
  %v169 = vld [vmem:[%s1 + $0x3d0] sm:$0xff]
  %v170 = vld [vmem:[%s1 + $0x3d8] sm:$0xff]
  %v171 = vld [vmem:[%s1 + $0x3e0] sm:$0xff]
  %v172 = vld [vmem:[%s1 + $0x3e8] sm:$0xff]
  %v173 = vld [vmem:[%s1 + $0x3f0] sm:$0xff]
  %v174 = vld [vmem:[%s1 + $0x3f8] sm:$0xff]
  %v175 = vld [vmem:[%s1 + $0x400] sm:$0xff]
  %v176 = vld [vmem:[%s1 + $0x408] sm:$0xff]
  %v177 = vld [vmem:[%s1 + $0x410] sm:$0xff]
  %v178 = vld [vmem:[%s1 + $0x418] sm:$0xff]
  %v179 = vld [vmem:[%s1 + $0x420] sm:$0xff]
  %v180 = vld [vmem:[%s1 + $0x428] sm:$0xff]
  %v181 = vld [vmem:[%s1 + $0x430] sm:$0xff]
  %v182 = vld [vmem:[%s1 + $0x438] sm:$0xff]
  %v183 = vld [vmem:[%s1 + $0x440] sm:$0xff]
  %v184 = vld [vmem:[%s1 + $0x448] sm:$0xff]
  %v185 = vld [vmem:[%s1 + $0x450] sm:$0xff]
  %v186 = vld [vmem:[%s1 + $0x458] sm:$0xff]
  %v187 = vld [vmem:[%s1 + $0x460] sm:$0xff]
  %v188 = vld [vmem:[%s1 + $0x468] sm:$0xff]
  %v189 = vld [vmem:[%s1 + $0x470] sm:$0xff]
  %v190 = vld [vmem:[%s1 + $0x478] sm:$0xff]
  %v191 = vld [vmem:[%s1 + $0x480] sm:$0xff]
  %v192 = vld [vmem:[%s1 + $0x488] sm:$0xff]
  %v193 = vld [vmem:[%s1 + $0x490] sm:$0xff]
  %v194 = vld [vmem:[%s1 + $0x498] sm:$0xff]
  %v195 = vld [vmem:[%s1 + $0x4a0] sm:$0xff]
  %v196 = vld [vmem:[%s1 + $0x4a8] sm:$0xff]
  %v197 = vld [vmem:[%s1 + $0x4b0] sm:$0xff]
  %v198 = vld [vmem:[%s1 + $0x4b8] sm:$0xff]
  %v199 = vld [vmem:[%s1 + $0x4c0] sm:$0xff]
  %v200 = vld [vmem:[%s1 + $0x4c8] sm:$0xff]
  %v201 = vld [vmem:[%s1 + $0x4d0] sm:$0xff]
  %v202 = vld [vmem:[%s1 + $0x4d8] sm:$0xff]
  %v203 = vld [vmem:[%s1 + $0x4e0] sm:$0xff]
  %v204 = vld [vmem:[%s1 + $0x4e8] sm:$0xff]
  %v205 = vld [vmem:[%s1 + $0x4f0] sm:$0xff]
  %v206 = vld [vmem:[%s1 + $0x4f8] sm:$0xff]
  %v207 = vld [vmem:[%s1 + $0x500] sm:$0xff]
  %v208 = vld [vmem:[%s1 + $0x508] sm:$0xff]
  %v209 = vld [vmem:[%s1 + $0x510] sm:$0xff]
  %v210 = vld [vmem:[%s1 + $0x518] sm:$0xff]
  %v211 = vld [vmem:[%s1 + $0x520] sm:$0xff]
  %v212 = vld [vmem:[%s1 + $0x528] sm:$0xff]
  %v213 = vld [vmem:[%s1 + $0x530] sm:$0xff]
  %v214 = vld [vmem:[%s1 + $0x538] sm:$0xff]
  %v215 = vld [vmem:[%s1 + $0x540] sm:$0xff]
  %v216 = vld [vmem:[%s1 + $0x548] sm:$0xff]
  %v217 = vld [vmem:[%s1 + $0x550] sm:$0xff]
  %v218 = vld [vmem:[%s1 + $0x558] sm:$0xff]
  %v219 = vld [vmem:[%s1 + $0x560] sm:$0xff]
  %v220 = vld [vmem:[%s1 + $0x568] sm:$0xff]
  %v221 = vld [vmem:[%s1 + $0x570] sm:$0xff]
  %v222 = vld [vmem:[%s1 + $0x578] sm:$0xff]
  %v223 = vld [vmem:[%s1 + $0x580] sm:$0xff]
  %v224 = vld [vmem:[%s1 + $0x588] sm:$0xff]
  %v225 = vld [vmem:[%s1 + $0x590] sm:$0xff]
  %v226 = vld [vmem:[%s1 + $0x598] sm:$0xff]
  %v227 = vld [vmem:[%s1 + $0x5a0] sm:$0xff]
  %v228 = vld [vmem:[%s1 + $0x5a8] sm:$0xff]
  %v229 = vld [vmem:[%s1 + $0x5b0] sm:$0xff]
  %v230 = vld [vmem:[%s1 + $0x5b8] sm:$0xff]
  %v231 = vld [vmem:[%s1 + $0x5c0] sm:$0xff]
  %v232 = vld [vmem:[%s1 + $0x5c8] sm:$0xff]
  %v233 = vld [vmem:[%s1 + $0x5d0] sm:$0xff]
  %v234 = vld [vmem:[%s1 + $0x5d8] sm:$0xff]
  %v235 = vld [vmem:[%s1 + $0x5e0] sm:$0xff]
  %v236 = vld [vmem:[%s1 + $0x5e8] sm:$0xff]
  %v237 = vld [vmem:[%s1 + $0x5f0] sm:$0xff]
  %v238 = vld [vmem:[%s1 + $0x5f8] sm:$0xff]
  %v239 = vld [vmem:[%s1 + $0x600] sm:$0xff]
  %v240 = vld [vmem:[%s1 + $0x608] sm:$0xff]
  %v241 = vld [vmem:[%s1 + $0x610] sm:$0xff]
  %v242 = vld [vmem:[%s1 + $0x618] sm:$0xff]
  %v243 = vld [vmem:[%s2] sm:$0xf]
  %v245 = vlaneseq
  %v246 = vshrl.u32 %v245, 7
  %v247 = vsub.s32 0, %v246
  %v248 = vrot.slane %v243, %v247
  %v249 = vlaneseq
  %v250 = vshrl.u32 %v249, 7
  %v251 = vsub.s32 1, %v250
  %v252 = vrot.slane %v243, %v251
  %v253 = vlaneseq
  %v254 = vshrl.u32 %v253, 7
  %v255 = vsub.s32 2, %v254
  %v256 = vrot.slane %v243, %v255
  %v257 = vlaneseq
  %v258 = vshrl.u32 %v257, 7
  %v259 = vsub.s32 3, %v258
  %v260 = vrot.slane %v243, %v259
  %v461 = vunpack.c.l.b16 %v47
  %v462 = vunpack.c.h.b16 %v47
  %v463 = vunpack.c.l.b16 %v48
  %v464 = vunpack.c.h.b16 %v48
  %v465 = vunpack.c.l.b16 %v49
  %v466 = vunpack.c.h.b16 %v49
  %v467 = vunpack.c.l.b16 %v50
  %v468 = vunpack.c.h.b16 %v50
  %v469 = vunpack.c.l.b16 %v51
  %v470 = vunpack.c.h.b16 %v51
  %v471 = vunpack.c.l.b16 %v52
  %v472 = vunpack.c.h.b16 %v52
  %v473 = vunpack.c.l.b16 %v53
  %v474 = vunpack.c.h.b16 %v53
  %v475 = vunpack.c.l.b16 %v54
  %v476 = vunpack.c.h.b16 %v54
  %v477 = vunpack.c.l.b16 %v55
  %v478 = vunpack.c.h.b16 %v55
  %v479 = vunpack.c.l.b16 %v56
  %v480 = vunpack.c.h.b16 %v56
  %v481 = vunpack.c.l.b16 %v57
  %v482 = vunpack.c.h.b16 %v57
  %v483 = vunpack.c.l.b16 %v58
  %v484 = vunpack.c.h.b16 %v58
  %v485 = vunpack.c.l.b16 %v59
  %v486 = vunpack.c.h.b16 %v59
  %v487 = vunpack.c.l.b16 %v60
  %v488 = vunpack.c.h.b16 %v60
  %v489 = vunpack.c.l.b16 %v61
  %v490 = vunpack.c.h.b16 %v61
  %v491 = vunpack.c.l.b16 %v62
  %v492 = vunpack.c.h.b16 %v62
  %v493 = vunpack.c.l.b16 %v63
  %v494 = vunpack.c.h.b16 %v63
  %v495 = vunpack.c.l.b16 %v64
  %v496 = vunpack.c.h.b16 %v64
  %v497 = vunpack.c.l.b16 %v65
  %v498 = vunpack.c.h.b16 %v65
  %v499 = vunpack.c.l.b16 %v66
  %v500 = vunpack.c.h.b16 %v66
  %v501 = vunpack.c.l.b16 %v67
  %v502 = vunpack.c.h.b16 %v67
  %v503 = vunpack.c.l.b16 %v68
  %v504 = vunpack.c.h.b16 %v68
  %v505 = vunpack.c.l.b16 %v69
  %v506 = vunpack.c.h.b16 %v69
  %v507 = vunpack.c.l.b16 %v70
  %v508 = vunpack.c.h.b16 %v70
  %v509 = vunpack.c.l.b16 %v71
  %v510 = vunpack.c.h.b16 %v71
  %v511 = vunpack.c.l.b16 %v72
  %v512 = vunpack.c.h.b16 %v72
  %v513 = vunpack.c.l.b16 %v73
  %v514 = vunpack.c.h.b16 %v73
  %v515 = vunpack.c.l.b16 %v74
  %v516 = vunpack.c.h.b16 %v74
  %v517 = vunpack.c.l.b16 %v75
  %v518 = vunpack.c.h.b16 %v75
  %v519 = vunpack.c.l.b16 %v76
  %v520 = vunpack.c.h.b16 %v76
  %v521 = vunpack.c.l.b16 %v77
  %v522 = vunpack.c.h.b16 %v77
  %v523 = vunpack.c.l.b16 %v78
  %v524 = vunpack.c.h.b16 %v78
  %v525 = vunpack.c.l.b16 %v79
  %v526 = vunpack.c.h.b16 %v79
  %v527 = vunpack.c.l.b16 %v80
  %v528 = vunpack.c.h.b16 %v80
  %v529 = vunpack.c.l.b16 %v81
  %v530 = vunpack.c.h.b16 %v81
  %v531 = vunpack.c.l.b16 %v82
  %v532 = vunpack.c.h.b16 %v82
  %v533 = vunpack.c.l.b16 %v83
  %v534 = vunpack.c.h.b16 %v83
  %v535 = vunpack.c.l.b16 %v84
  %v536 = vunpack.c.h.b16 %v84
  %v537 = vunpack.c.l.b16 %v85
  %v538 = vunpack.c.h.b16 %v85
  %v539 = vunpack.c.l.b16 %v86
  %v540 = vunpack.c.h.b16 %v86
  %v541 = vunpack.c.l.b16 %v87
  %v542 = vunpack.c.h.b16 %v87
  %v543 = vunpack.c.l.b16 %v88
  %v544 = vunpack.c.h.b16 %v88
  %v545 = vunpack.c.l.b16 %v89
  %v546 = vunpack.c.h.b16 %v89
  %v547 = vunpack.c.l.b16 %v90
  %v548 = vunpack.c.h.b16 %v90
  %v549 = vunpack.c.l.b16 %v91
  %v550 = vunpack.c.h.b16 %v91
  %v551 = vunpack.c.l.b16 %v92
  %v552 = vunpack.c.h.b16 %v92
  %v553 = vunpack.c.l.b16 %v93
  %v554 = vunpack.c.h.b16 %v93
  %v555 = vunpack.c.l.b16 %v94
  %v556 = vunpack.c.h.b16 %v94
  %v557 = vunpack.c.l.b16 %v95
  %v558 = vunpack.c.h.b16 %v95
  %v559 = vunpack.c.l.b16 %v96
  %v560 = vunpack.c.h.b16 %v96
  %v561 = vunpack.c.l.b16 %v97
  %v562 = vunpack.c.h.b16 %v97
  %v563 = vunpack.c.l.b16 %v98
  %v564 = vunpack.c.h.b16 %v98
  %v565 = vunpack.c.l.b16 %v99
  %v566 = vunpack.c.h.b16 %v99
  %v567 = vunpack.c.l.b16 %v100
  %v568 = vunpack.c.h.b16 %v100
  %v569 = vunpack.c.l.b16 %v101
  %v570 = vunpack.c.h.b16 %v101
  %v571 = vunpack.c.l.b16 %v102
  %v572 = vunpack.c.h.b16 %v102
  %v573 = vunpack.c.l.b16 %v103
  %v574 = vunpack.c.h.b16 %v103
  %v575 = vunpack.c.l.b16 %v104
  %v576 = vunpack.c.h.b16 %v104
  %v577 = vunpack.c.l.b16 %v105
  %v578 = vunpack.c.h.b16 %v105
  %v579 = vunpack.c.l.b16 %v106
  %v580 = vunpack.c.h.b16 %v106
  %v581 = vunpack.c.l.b16 %v107
  %v582 = vunpack.c.h.b16 %v107
  %v583 = vunpack.c.l.b16 %v108
  %v584 = vunpack.c.h.b16 %v108
  %v585 = vunpack.c.l.b16 %v109
  %v586 = vunpack.c.h.b16 %v109
  %v587 = vunpack.c.l.b16 %v110
  %v588 = vunpack.c.h.b16 %v110
  %v589 = vunpack.c.l.b16 %v111
  %v590 = vunpack.c.h.b16 %v111
  %v591 = vunpack.c.l.b16 %v112
  %v592 = vunpack.c.h.b16 %v112
  %v593 = vunpack.c.l.b16 %v113
  %v594 = vunpack.c.h.b16 %v113
  %v595 = vunpack.c.l.b16 %v114
  %v596 = vunpack.c.h.b16 %v114
  %v597 = vunpack.c.l.b16 %v115
  %v598 = vunpack.c.h.b16 %v115
  %v599 = vunpack.c.l.b16 %v116
  %v600 = vunpack.c.h.b16 %v116
  %v601 = vunpack.c.l.b16 %v117
  %v602 = vunpack.c.h.b16 %v117
  %v603 = vunpack.c.l.b16 %v118
  %v604 = vunpack.c.h.b16 %v118
  %v605 = vunpack.c.l.b16 %v119
  %v606 = vunpack.c.h.b16 %v119
  %v607 = vunpack.c.l.b16 %v120
  %v608 = vunpack.c.h.b16 %v120
  %v609 = vunpack.c.l.b16 %v121
  %v610 = vunpack.c.h.b16 %v121
  %v611 = vunpack.c.l.b16 %v122
  %v612 = vunpack.c.h.b16 %v122
  %v613 = vunpack.c.l.b16 %v123
  %v614 = vunpack.c.h.b16 %v123
  %v615 = vunpack.c.l.b16 %v124
  %v616 = vunpack.c.h.b16 %v124
  %v617 = vunpack.c.l.b16 %v125
  %v618 = vunpack.c.h.b16 %v125
  %v619 = vunpack.c.l.b16 %v126
  %v620 = vunpack.c.h.b16 %v126
  %v621 = vunpack.c.l.b16 %v127
  %v622 = vunpack.c.h.b16 %v127
  %v623 = vunpack.c.l.b16 %v128
  %v624 = vunpack.c.h.b16 %v128
  %v625 = vunpack.c.l.b16 %v129
  %v626 = vunpack.c.h.b16 %v129
  %v627 = vunpack.c.l.b16 %v130
  %v628 = vunpack.c.h.b16 %v130
  %v629 = vunpack.c.l.b16 %v131
  %v630 = vunpack.c.h.b16 %v131
  %v631 = vunpack.c.l.b16 %v132
  %v632 = vunpack.c.h.b16 %v132
  %v633 = vunpack.c.l.b16 %v133
  %v634 = vunpack.c.h.b16 %v133
  %v635 = vunpack.c.l.b16 %v134
  %v636 = vunpack.c.h.b16 %v134
  %v637 = vunpack.c.l.b16 %v135
  %v638 = vunpack.c.h.b16 %v135
  %v639 = vunpack.c.l.b16 %v136
  %v640 = vunpack.c.h.b16 %v136
  %v641 = vunpack.c.l.b16 %v137
  %v642 = vunpack.c.h.b16 %v137
  %v643 = vunpack.c.l.b16 %v138
  %v644 = vunpack.c.h.b16 %v138
  %v645 = vunpack.c.l.b16 %v139
  %v646 = vunpack.c.h.b16 %v139
  %v647 = vunpack.c.l.b16 %v140
  %v648 = vunpack.c.h.b16 %v140
  %v649 = vunpack.c.l.b16 %v141
  %v650 = vunpack.c.h.b16 %v141
  %v651 = vunpack.c.l.b16 %v142
  %v652 = vunpack.c.h.b16 %v142
  %v653 = vunpack.c.l.b16 %v143
  %v654 = vunpack.c.h.b16 %v143
  %v655 = vunpack.c.l.b16 %v144
  %v656 = vunpack.c.h.b16 %v144
  %v657 = vunpack.c.l.b16 %v145
  %v658 = vunpack.c.h.b16 %v145
  %v659 = vunpack.c.l.b16 %v146
  %v660 = vunpack.c.h.b16 %v146
  %v661 = vunpack.c.l.b16 %v147
  %v662 = vunpack.c.h.b16 %v147
  %v663 = vunpack.c.l.b16 %v148
  %v664 = vunpack.c.h.b16 %v148
  %v665 = vunpack.c.l.b16 %v149
  %v666 = vunpack.c.h.b16 %v149
  %v667 = vunpack.c.l.b16 %v150
  %v668 = vunpack.c.h.b16 %v150
  %v669 = vunpack.c.l.b16 %v151
  %v670 = vunpack.c.h.b16 %v151
  %v671 = vunpack.c.l.b16 %v152
  %v672 = vunpack.c.h.b16 %v152
  %v673 = vunpack.c.l.b16 %v153
  %v674 = vunpack.c.h.b16 %v153
  %v675 = vunpack.c.l.b16 %v154
  %v676 = vunpack.c.h.b16 %v154
  %v677 = vunpack.c.l.b16 %v155
  %v678 = vunpack.c.h.b16 %v155
  %v679 = vunpack.c.l.b16 %v156
  %v680 = vunpack.c.h.b16 %v156
  %v681 = vunpack.c.l.b16 %v157
  %v682 = vunpack.c.h.b16 %v157
  %v683 = vunpack.c.l.b16 %v158
  %v684 = vunpack.c.h.b16 %v158
  %v685 = vunpack.c.l.b16 %v159
  %v686 = vunpack.c.h.b16 %v159
  %v687 = vunpack.c.l.b16 %v160
  %v688 = vunpack.c.h.b16 %v160
  %v689 = vunpack.c.l.b16 %v161
  %v690 = vunpack.c.h.b16 %v161
  %v691 = vunpack.c.l.b16 %v162
  %v692 = vunpack.c.h.b16 %v162
  %v693 = vunpack.c.l.b16 %v163
  %v694 = vunpack.c.h.b16 %v163
  %v695 = vunpack.c.l.b16 %v164
  %v696 = vunpack.c.h.b16 %v164
  %v697 = vunpack.c.l.b16 %v165
  %v698 = vunpack.c.h.b16 %v165
  %v699 = vunpack.c.l.b16 %v166
  %v700 = vunpack.c.h.b16 %v166
  %v701 = vunpack.c.l.b16 %v167
  %v702 = vunpack.c.h.b16 %v167
  %v703 = vunpack.c.l.b16 %v168
  %v704 = vunpack.c.h.b16 %v168
  %v705 = vunpack.c.l.b16 %v169
  %v706 = vunpack.c.h.b16 %v169
  %v707 = vunpack.c.l.b16 %v170
  %v708 = vunpack.c.h.b16 %v170
  %v709 = vunpack.c.l.b16 %v171
  %v710 = vunpack.c.h.b16 %v171
  %v711 = vunpack.c.l.b16 %v172
  %v712 = vunpack.c.h.b16 %v172
  %v713 = vunpack.c.l.b16 %v173
  %v714 = vunpack.c.h.b16 %v173
  %v715 = vunpack.c.l.b16 %v174
  %v716 = vunpack.c.h.b16 %v174
  %v717 = vunpack.c.l.b16 %v175
  %v718 = vunpack.c.h.b16 %v175
  %v719 = vunpack.c.l.b16 %v176
  %v720 = vunpack.c.h.b16 %v176
  %v721 = vunpack.c.l.b16 %v177
  %v722 = vunpack.c.h.b16 %v177
  %v723 = vunpack.c.l.b16 %v178
  %v724 = vunpack.c.h.b16 %v178
  %v725 = vunpack.c.l.b16 %v179
  %v726 = vunpack.c.h.b16 %v179
  %v727 = vunpack.c.l.b16 %v180
  %v728 = vunpack.c.h.b16 %v180
  %v729 = vunpack.c.l.b16 %v181
  %v730 = vunpack.c.h.b16 %v181
  %v731 = vunpack.c.l.b16 %v182
  %v732 = vunpack.c.h.b16 %v182
  %v733 = vunpack.c.l.b16 %v183
  %v734 = vunpack.c.h.b16 %v183
  %v735 = vunpack.c.l.b16 %v184
  %v736 = vunpack.c.h.b16 %v184
  %v737 = vunpack.c.l.b16 %v185
  %v738 = vunpack.c.h.b16 %v185
  %v739 = vunpack.c.l.b16 %v186
  %v740 = vunpack.c.h.b16 %v186
  %v741 = vunpack.c.l.b16 %v187
  %v742 = vunpack.c.h.b16 %v187
  %v743 = vunpack.c.l.b16 %v188
  %v744 = vunpack.c.h.b16 %v188
  %v745 = vunpack.c.l.b16 %v189
  %v746 = vunpack.c.h.b16 %v189
  %v747 = vunpack.c.l.b16 %v190
  %v748 = vunpack.c.h.b16 %v190
  %v749 = vunpack.c.l.b16 %v191
  %v750 = vunpack.c.h.b16 %v191
  %v751 = vunpack.c.l.b16 %v192
  %v752 = vunpack.c.h.b16 %v192
  %v753 = vunpack.c.l.b16 %v193
  %v754 = vunpack.c.h.b16 %v193
  %v755 = vunpack.c.l.b16 %v194
  %v756 = vunpack.c.h.b16 %v194
  %v757 = vunpack.c.l.b16 %v195
  %v758 = vunpack.c.h.b16 %v195
  %v759 = vunpack.c.l.b16 %v196
  %v760 = vunpack.c.h.b16 %v196
  %v761 = vunpack.c.l.b16 %v197
  %v762 = vunpack.c.h.b16 %v197
  %v763 = vunpack.c.l.b16 %v198
  %v764 = vunpack.c.h.b16 %v198
  %v765 = vunpack.c.l.b16 %v199
  %v766 = vunpack.c.h.b16 %v199
  %v767 = vunpack.c.l.b16 %v200
  %v768 = vunpack.c.h.b16 %v200
  %v769 = vunpack.c.l.b16 %v201
  %v770 = vunpack.c.h.b16 %v201
  %v771 = vunpack.c.l.b16 %v202
  %v772 = vunpack.c.h.b16 %v202
  %v773 = vunpack.c.l.b16 %v203
  %v774 = vunpack.c.h.b16 %v203
  %v775 = vunpack.c.l.b16 %v204
  %v776 = vunpack.c.h.b16 %v204
  %v777 = vunpack.c.l.b16 %v205
  %v778 = vunpack.c.h.b16 %v205
  %v779 = vunpack.c.l.b16 %v206
  %v780 = vunpack.c.h.b16 %v206
  %v781 = vunpack.c.l.b16 %v207
  %v782 = vunpack.c.h.b16 %v207
  %v783 = vunpack.c.l.b16 %v208
  %v784 = vunpack.c.h.b16 %v208
  %v785 = vunpack.c.l.b16 %v209
  %v786 = vunpack.c.h.b16 %v209
  %v787 = vunpack.c.l.b16 %v210
  %v788 = vunpack.c.h.b16 %v210
  %v789 = vunpack.c.l.b16 %v211
  %v790 = vunpack.c.h.b16 %v211
  %v791 = vunpack.c.l.b16 %v212
  %v792 = vunpack.c.h.b16 %v212
  %v793 = vunpack.c.l.b16 %v213
  %v794 = vunpack.c.h.b16 %v213
  %v795 = vunpack.c.l.b16 %v214
  %v796 = vunpack.c.h.b16 %v214
  %v797 = vunpack.c.l.b16 %v215
  %v798 = vunpack.c.h.b16 %v215
  %v799 = vunpack.c.l.b16 %v216
  %v800 = vunpack.c.h.b16 %v216
  %v801 = vunpack.c.l.b16 %v217
  %v802 = vunpack.c.h.b16 %v217
  %v803 = vunpack.c.l.b16 %v218
  %v804 = vunpack.c.h.b16 %v218
  %v805 = vunpack.c.l.b16 %v219
  %v806 = vunpack.c.h.b16 %v219
  %v807 = vunpack.c.l.b16 %v220
  %v808 = vunpack.c.h.b16 %v220
  %v809 = vunpack.c.l.b16 %v221
  %v810 = vunpack.c.h.b16 %v221
  %v811 = vunpack.c.l.b16 %v222
  %v812 = vunpack.c.h.b16 %v222
  %v813 = vunpack.c.l.b16 %v223
  %v814 = vunpack.c.h.b16 %v223
  %v815 = vunpack.c.l.b16 %v224
  %v816 = vunpack.c.h.b16 %v224
  %v817 = vunpack.c.l.b16 %v225
  %v818 = vunpack.c.h.b16 %v225
  %v819 = vunpack.c.l.b16 %v226
  %v820 = vunpack.c.h.b16 %v226
  %v821 = vunpack.c.l.b16 %v227
  %v822 = vunpack.c.h.b16 %v227
  %v823 = vunpack.c.l.b16 %v228
  %v824 = vunpack.c.h.b16 %v228
  %v825 = vunpack.c.l.b16 %v229
  %v826 = vunpack.c.h.b16 %v229
  %v827 = vunpack.c.l.b16 %v230
  %v828 = vunpack.c.h.b16 %v230
  %v829 = vunpack.c.l.b16 %v231
  %v830 = vunpack.c.h.b16 %v231
  %v831 = vunpack.c.l.b16 %v232
  %v832 = vunpack.c.h.b16 %v232
  %v833 = vunpack.c.l.b16 %v233
  %v834 = vunpack.c.h.b16 %v233
  %v835 = vunpack.c.l.b16 %v234
  %v836 = vunpack.c.h.b16 %v234
  %v837 = vunpack.c.l.b16 %v235
  %v838 = vunpack.c.h.b16 %v235
  %v839 = vunpack.c.l.b16 %v236
  %v840 = vunpack.c.h.b16 %v236
  %v841 = vunpack.c.l.b16 %v237
  %v842 = vunpack.c.h.b16 %v237
  %v843 = vunpack.c.l.b16 %v238
  %v844 = vunpack.c.h.b16 %v238
  %v845 = vunpack.c.l.b16 %v239
  %v846 = vunpack.c.h.b16 %v239
  %v847 = vunpack.c.l.b16 %v240
  %v848 = vunpack.c.h.b16 %v240
  %v849 = vunpack.c.l.b16 %v241
  %v850 = vunpack.c.h.b16 %v241
  %v851 = vunpack.c.l.b16 %v242
  %v852 = vunpack.c.h.b16 %v242
  %v853 = vpack.c.b16 %v465, %v461
  %v854 = vpack.c.b16 %v466, %v462
  %v855 = vpack.c.b16 %v467, %v463
  %v856 = vpack.c.b16 %v468, %v464
  %v857 = vpack.c.b16 %v473, %v469
  %v858 = vpack.c.b16 %v474, %v470
  %v859 = vpack.c.b16 %v475, %v471
  %v860 = vpack.c.b16 %v476, %v472
  %v861 = vpack.c.b16 %v481, %v477
  %v862 = vpack.c.b16 %v482, %v478
  %v863 = vpack.c.b16 %v483, %v479
  %v864 = vpack.c.b16 %v484, %v480
  %v865 = vpack.c.b16 %v489, %v485
  %v866 = vpack.c.b16 %v490, %v486
  %v867 = vpack.c.b16 %v491, %v487
  %v868 = vpack.c.b16 %v492, %v488
  %v869 = vpack.c.b16 %v497, %v493
  %v870 = vpack.c.b16 %v498, %v494
  %v871 = vpack.c.b16 %v499, %v495
  %v872 = vpack.c.b16 %v500, %v496
  %v873 = vpack.c.b16 %v505, %v501
  %v874 = vpack.c.b16 %v506, %v502
  %v875 = vpack.c.b16 %v507, %v503
  %v876 = vpack.c.b16 %v508, %v504
  %v877 = vpack.c.b16 %v513, %v509
  %v878 = vpack.c.b16 %v514, %v510
  %v879 = vpack.c.b16 %v515, %v511
  %v880 = vpack.c.b16 %v516, %v512
  %v881 = vpack.c.b16 %v521, %v517
  %v882 = vpack.c.b16 %v522, %v518
  %v883 = vpack.c.b16 %v523, %v519
  %v884 = vpack.c.b16 %v524, %v520
  %v885 = vpack.c.b16 %v529, %v525
  %v886 = vpack.c.b16 %v530, %v526
  %v887 = vpack.c.b16 %v531, %v527
  %v888 = vpack.c.b16 %v532, %v528
  %v889 = vpack.c.b16 %v537, %v533
  %v890 = vpack.c.b16 %v538, %v534
  %v891 = vpack.c.b16 %v539, %v535
  %v892 = vpack.c.b16 %v540, %v536
  %v893 = vpack.c.b16 %v545, %v541
  %v894 = vpack.c.b16 %v546, %v542
  %v895 = vpack.c.b16 %v547, %v543
  %v896 = vpack.c.b16 %v548, %v544
  %v897 = vpack.c.b16 %v553, %v549
  %v898 = vpack.c.b16 %v554, %v550
  %v899 = vpack.c.b16 %v555, %v551
  %v900 = vpack.c.b16 %v556, %v552
  %v901 = vpack.c.b16 %v561, %v557
  %v902 = vpack.c.b16 %v562, %v558
  %v903 = vpack.c.b16 %v563, %v559
  %v904 = vpack.c.b16 %v564, %v560
  %v905 = vpack.c.b16 %v569, %v565
  %v906 = vpack.c.b16 %v570, %v566
  %v907 = vpack.c.b16 %v571, %v567
  %v908 = vpack.c.b16 %v572, %v568
  %v909 = vpack.c.b16 %v577, %v573
  %v910 = vpack.c.b16 %v578, %v574
  %v911 = vpack.c.b16 %v579, %v575
  %v912 = vpack.c.b16 %v580, %v576
  %v913 = vpack.c.b16 %v585, %v581
  %v914 = vpack.c.b16 %v586, %v582
  %v915 = vpack.c.b16 %v587, %v583
  %v916 = vpack.c.b16 %v588, %v584
  %v917 = vpack.c.b16 %v593, %v589
  %v918 = vpack.c.b16 %v594, %v590
  %v919 = vpack.c.b16 %v595, %v591
  %v920 = vpack.c.b16 %v596, %v592
  %v921 = vpack.c.b16 %v601, %v597
  %v922 = vpack.c.b16 %v602, %v598
  %v923 = vpack.c.b16 %v603, %v599
  %v924 = vpack.c.b16 %v604, %v600
  %v925 = vpack.c.b16 %v609, %v605
  %v926 = vpack.c.b16 %v610, %v606
  %v927 = vpack.c.b16 %v611, %v607
  %v928 = vpack.c.b16 %v612, %v608
  %v929 = vpack.c.b16 %v617, %v613
  %v930 = vpack.c.b16 %v618, %v614
  %v931 = vpack.c.b16 %v619, %v615
  %v932 = vpack.c.b16 %v620, %v616
  %v933 = vpack.c.b16 %v625, %v621
  %v934 = vpack.c.b16 %v626, %v622
  %v935 = vpack.c.b16 %v627, %v623
  %v936 = vpack.c.b16 %v628, %v624
  %v937 = vpack.c.b16 %v633, %v629
  %v938 = vpack.c.b16 %v634, %v630
  %v939 = vpack.c.b16 %v635, %v631
  %v940 = vpack.c.b16 %v636, %v632
  %v941 = vpack.c.b16 %v641, %v637
  %v942 = vpack.c.b16 %v642, %v638
  %v943 = vpack.c.b16 %v643, %v639
  %v944 = vpack.c.b16 %v644, %v640
  %v945 = vpack.c.b16 %v649, %v645
  %v946 = vpack.c.b16 %v650, %v646
  %v947 = vpack.c.b16 %v651, %v647
  %v948 = vpack.c.b16 %v652, %v648
  %v949 = vpack.c.b16 %v657, %v653
  %v950 = vpack.c.b16 %v658, %v654
  %v951 = vpack.c.b16 %v659, %v655
  %v952 = vpack.c.b16 %v660, %v656
  %v953 = vpack.c.b16 %v665, %v661
  %v954 = vpack.c.b16 %v666, %v662
  %v955 = vpack.c.b16 %v667, %v663
  %v956 = vpack.c.b16 %v668, %v664
  %v957 = vpack.c.b16 %v673, %v669
  %v958 = vpack.c.b16 %v674, %v670
  %v959 = vpack.c.b16 %v675, %v671
  %v960 = vpack.c.b16 %v676, %v672
  %v961 = vpack.c.b16 %v681, %v677
  %v962 = vpack.c.b16 %v682, %v678
  %v963 = vpack.c.b16 %v683, %v679
  %v964 = vpack.c.b16 %v684, %v680
  %v965 = vpack.c.b16 %v689, %v685
  %v966 = vpack.c.b16 %v690, %v686
  %v967 = vpack.c.b16 %v691, %v687
  %v968 = vpack.c.b16 %v692, %v688
  %v969 = vpack.c.b16 %v697, %v693
  %v970 = vpack.c.b16 %v698, %v694
  %v971 = vpack.c.b16 %v699, %v695
  %v972 = vpack.c.b16 %v700, %v696
  %v973 = vpack.c.b16 %v705, %v701
  %v974 = vpack.c.b16 %v706, %v702
  %v975 = vpack.c.b16 %v707, %v703
  %v976 = vpack.c.b16 %v708, %v704
  %v977 = vpack.c.b16 %v713, %v709
  %v978 = vpack.c.b16 %v714, %v710
  %v979 = vpack.c.b16 %v715, %v711
  %v980 = vpack.c.b16 %v716, %v712
  %v981 = vpack.c.b16 %v721, %v717
  %v982 = vpack.c.b16 %v722, %v718
  %v983 = vpack.c.b16 %v723, %v719
  %v984 = vpack.c.b16 %v724, %v720
  %v985 = vpack.c.b16 %v729, %v725
  %v986 = vpack.c.b16 %v730, %v726
  %v987 = vpack.c.b16 %v731, %v727
  %v988 = vpack.c.b16 %v732, %v728
  %v989 = vpack.c.b16 %v737, %v733
  %v990 = vpack.c.b16 %v738, %v734
  %v991 = vpack.c.b16 %v739, %v735
  %v992 = vpack.c.b16 %v740, %v736
  %v993 = vpack.c.b16 %v745, %v741
  %v994 = vpack.c.b16 %v746, %v742
  %v995 = vpack.c.b16 %v747, %v743
  %v996 = vpack.c.b16 %v748, %v744
  %v997 = vpack.c.b16 %v753, %v749
  %v998 = vpack.c.b16 %v754, %v750
  %v999 = vpack.c.b16 %v755, %v751
  %v1000 = vpack.c.b16 %v756, %v752
  %v1001 = vpack.c.b16 %v761, %v757
  %v1002 = vpack.c.b16 %v762, %v758
  %v1003 = vpack.c.b16 %v763, %v759
  %v1004 = vpack.c.b16 %v764, %v760
  %v1005 = vpack.c.b16 %v769, %v765
  %v1006 = vpack.c.b16 %v770, %v766
  %v1007 = vpack.c.b16 %v771, %v767
  %v1008 = vpack.c.b16 %v772, %v768
  %v1009 = vpack.c.b16 %v777, %v773
  %v1010 = vpack.c.b16 %v778, %v774
  %v1011 = vpack.c.b16 %v779, %v775
  %v1012 = vpack.c.b16 %v780, %v776
  %v1013 = vpack.c.b16 %v785, %v781
  %v1014 = vpack.c.b16 %v786, %v782
  %v1015 = vpack.c.b16 %v787, %v783
  %v1016 = vpack.c.b16 %v788, %v784
  %v1017 = vpack.c.b16 %v793, %v789
  %v1018 = vpack.c.b16 %v794, %v790
  %v1019 = vpack.c.b16 %v795, %v791
  %v1020 = vpack.c.b16 %v796, %v792
  %v1021 = vpack.c.b16 %v801, %v797
  %v1022 = vpack.c.b16 %v802, %v798
  %v1023 = vpack.c.b16 %v803, %v799
  %v1024 = vpack.c.b16 %v804, %v800
  %v1025 = vpack.c.b16 %v809, %v805
  %v1026 = vpack.c.b16 %v810, %v806
  %v1027 = vpack.c.b16 %v811, %v807
  %v1028 = vpack.c.b16 %v812, %v808
  %v1029 = vpack.c.b16 %v817, %v813
  %v1030 = vpack.c.b16 %v818, %v814
  %v1031 = vpack.c.b16 %v819, %v815
  %v1032 = vpack.c.b16 %v820, %v816
  %v1033 = vpack.c.b16 %v825, %v821
  %v1034 = vpack.c.b16 %v826, %v822
  %v1035 = vpack.c.b16 %v827, %v823
  %v1036 = vpack.c.b16 %v828, %v824
  %v1037 = vpack.c.b16 %v833, %v829
  %v1038 = vpack.c.b16 %v834, %v830
  %v1039 = vpack.c.b16 %v835, %v831
  %v1040 = vpack.c.b16 %v836, %v832
  %v1041 = vpack.c.b16 %v841, %v837
  %v1042 = vpack.c.b16 %v842, %v838
  %v1043 = vpack.c.b16 %v843, %v839
  %v1044 = vpack.c.b16 %v844, %v840
  %v1045 = vpack.c.b16 %v849, %v845
  %v1046 = vpack.c.b16 %v850, %v846
  %v1047 = vpack.c.b16 %v851, %v847
  %v1048 = vpack.c.b16 %v852, %v848
  %vm1245 = vcmask 130048
  %v1247 = vsel %vm1245, %v46, 0
  %1249 = vmatprep.subr.bf16.mxu0 %v854
  %1250 = vmatpush1.bf16.msra.mxu0 %v853
  %1251 = vmatprep.subr.bf16.mxu0 %v858
  %1252 = vmatpush1.bf16.msra.mxu0 %v857
  %1253 = vmatprep.subr.bf16.mxu0 %v862
  %1254 = vmatpush1.bf16.msra.mxu0 %v861
  %1255 = vmatprep.subr.bf16.mxu0 %v866
  %1256 = vmatpush1.bf16.msra.mxu0 %v865
  %1257 = vmatprep.subr.bf16.mxu0 %v870
  %1258 = vmatpush1.bf16.msra.mxu0 %v869
  %1259 = vmatprep.subr.bf16.mxu0 %v874
  %1260 = vmatpush1.bf16.msra.mxu0 %v873
  %1261 = vmatprep.subr.bf16.mxu0 %v878
  %1262 = vmatpush1.bf16.msra.mxu0 %v877
  %1263 = vmatprep.subr.bf16.mxu0 %v882
  %1264 = vmatpush1.bf16.msra.mxu0 %v881
  %1265 = vmatprep.subr.bf16.mxu0 %v886
  %1266 = vmatpush1.bf16.msra.mxu0 %v885
  %1267 = vmatprep.subr.bf16.mxu0 %v890
  %1268 = vmatpush1.bf16.msra.mxu0 %v889
  %1269 = vmatprep.subr.bf16.mxu0 %v894
  %1270 = vmatpush1.bf16.msra.mxu0 %v893
  %1271 = vmatprep.subr.bf16.mxu0 %v898
  %1272 = vmatpush1.bf16.msra.mxu0 %v897
  %1273 = vmatprep.subr.bf16.mxu0 %v902
  %1274 = vmatpush1.bf16.msra.mxu0 %v901
  %1275 = vmatprep.subr.bf16.mxu0 %v906
  %1276 = vmatpush1.bf16.msra.mxu0 %v905
  %1277 = vmatprep.subr.bf16.mxu0 %v910
  %1278 = vmatpush1.bf16.msra.mxu0 %v909
  %1279 = vmatprep.subr.bf16.mxu0 %v914
  %1280 = vmatpush1.bf16.msra.mxu0 %v913
  %1281 = vmatprep.mubr.bf16.mxu0 %v41
  %1282 = vmatmul.mubr.bf16.gmra.mrb[0].mxu0 %v40
  %v1283 = vpop.f32.mrb[0].mxu0
  %v1284 = vadd.f32 %v248, %v1283
  %v1285 = vpop.f32.mrb[0].mxu0
  %v1286 = vadd.f32 %v252, %v1285
  %v1287 = vpop.f32.mrb[0].mxu0
  %v1288 = vpop.f32.mrb[0].mxu0
  %1289 = vdwg.mxu0
  %1290 = vmatprep.subr.bf16.mxu0 %v918
  %1291 = vmatpush1.bf16.msra.mxu0 %v917
  %1292 = vmatprep.subr.bf16.mxu0 %v922
  %1293 = vmatpush1.bf16.msra.mxu0 %v921
  %1294 = vmatprep.subr.bf16.mxu0 %v926
  %1295 = vmatpush1.bf16.msra.mxu0 %v925
  %1296 = vmatprep.subr.bf16.mxu0 %v930
  %1297 = vmatpush1.bf16.msra.mxu0 %v929
  %1298 = vmatprep.subr.bf16.mxu0 %v934
  %1299 = vmatpush1.bf16.msra.mxu0 %v933
  %1300 = vmatprep.subr.bf16.mxu0 %v938
  %1301 = vmatpush1.bf16.msra.mxu0 %v937
  %1302 = vmatprep.subr.bf16.mxu0 %v942
  %1303 = vmatpush1.bf16.msra.mxu0 %v941
  %1304 = vmatprep.subr.bf16.mxu0 %v946
  %1305 = vmatpush1.bf16.msra.mxu0 %v945
  %1306 = vmatprep.subr.bf16.mxu0 %v950
  %1307 = vmatpush1.bf16.msra.mxu0 %v949
  %1308 = vmatprep.subr.bf16.mxu0 %v954
  %1309 = vmatpush1.bf16.msra.mxu0 %v953
  %1310 = vmatprep.subr.bf16.mxu0 %v958
  %1311 = vmatpush1.bf16.msra.mxu0 %v957
  %1312 = vmatprep.subr.bf16.mxu0 %v962
  %1313 = vmatpush1.bf16.msra.mxu0 %v961
  %1314 = vmatprep.subr.bf16.mxu0 %v966
  %1315 = vmatpush1.bf16.msra.mxu0 %v965
  %1316 = vmatprep.subr.bf16.mxu0 %v970
  %1317 = vmatpush1.bf16.msra.mxu0 %v969
  %1318 = vmatprep.subr.bf16.mxu0 %v974
  %1319 = vmatpush1.bf16.msra.mxu0 %v973
  %1320 = vmatprep.subr.bf16.mxu0 %v978
  %1321 = vmatpush1.bf16.msra.mxu0 %v977
  %1322 = vmatprep.mubr.bf16.mxu0 %v43
  %1323 = vmatmul.mubr.bf16.gmra.mrb[0].mxu0 %v42
  %v1324 = vpop.f32.mrb[0].mxu0
  %v1325 = vadd.f32 %v1284, %v1324
  %v1326 = vpop.f32.mrb[0].mxu0
  %v1327 = vadd.f32 %v1286, %v1326
  %v1328 = vpop.f32.mrb[0].mxu0
  %v1329 = vpop.f32.mrb[0].mxu0
  %1330 = vdwg.mxu0
  %1331 = vmatprep.subr.bf16.mxu0 %v982
  %1332 = vmatpush1.bf16.msra.mxu0 %v981
  %1333 = vmatprep.subr.bf16.mxu0 %v986
  %1334 = vmatpush1.bf16.msra.mxu0 %v985
  %1335 = vmatprep.subr.bf16.mxu0 %v990
  %1336 = vmatpush1.bf16.msra.mxu0 %v989
  %1337 = vmatprep.subr.bf16.mxu0 %v994
  %1338 = vmatpush1.bf16.msra.mxu0 %v993
  %1339 = vmatprep.subr.bf16.mxu0 %v998
  %1340 = vmatpush1.bf16.msra.mxu0 %v997
  %1341 = vmatprep.subr.bf16.mxu0 %v1002
  %1342 = vmatpush1.bf16.msra.mxu0 %v1001
  %1343 = vmatprep.subr.bf16.mxu0 %v1006
  %1344 = vmatpush1.bf16.msra.mxu0 %v1005
  %1345 = vmatprep.subr.bf16.mxu0 %v1010
  %1346 = vmatpush1.bf16.msra.mxu0 %v1009
  %1347 = vmatprep.subr.bf16.mxu0 %v1014
  %1348 = vmatpush1.bf16.msra.mxu0 %v1013
  %1349 = vmatprep.subr.bf16.mxu0 %v1018
  %1350 = vmatpush1.bf16.msra.mxu0 %v1017
  %1351 = vmatprep.subr.bf16.mxu0 %v1022
  %1352 = vmatpush1.bf16.msra.mxu0 %v1021
  %1353 = vmatprep.subr.bf16.mxu0 %v1026
  %1354 = vmatpush1.bf16.msra.mxu0 %v1025
  %1355 = vmatprep.subr.bf16.mxu0 %v1030
  %1356 = vmatpush1.bf16.msra.mxu0 %v1029
  %1357 = vmatprep.subr.bf16.mxu0 %v1034
  %1358 = vmatpush1.bf16.msra.mxu0 %v1033
  %1359 = vmatprep.subr.bf16.mxu0 %v1038
  %1360 = vmatpush1.bf16.msra.mxu0 %v1037
  %1361 = vmatprep.subr.bf16.mxu0 %v1042
  %1362 = vmatpush1.bf16.msra.mxu0 %v1041
  %1363 = vmatprep.mubr.bf16.mxu0 %v45
  %1364 = vmatmul.mubr.bf16.gmra.mrb[0].mxu0 %v44
  %v1365 = vpop.f32.mrb[0].mxu0
  %v1366 = vadd.f32 %v1325, %v1365
  %v1367 = vpop.f32.mrb[0].mxu0
  %v1368 = vadd.f32 %v1327, %v1367
  %v1369 = vpop.f32.mrb[0].mxu0
  %v1370 = vpop.f32.mrb[0].mxu0
  %1371 = vdwg.mxu0
  %1372 = vmatprep.subr.bf16.mxu0 %v1046
  %1373 = vmatpush1.bf16.msra.mxu0 %v1045
  %1374 = vmatprep.subr.bf16.mxu0 0
  %1375 = vmatpush1.bf16.msra.mxu0 0
  %1376 = vmatprep.subr.bf16.mxu0 0
  %1377 = vmatpush1.bf16.msra.mxu0 0
  %1378 = vmatprep.subr.bf16.mxu0 0
  %1379 = vmatpush1.bf16.msra.mxu0 0
  %1380 = vmatprep.subr.bf16.mxu0 0
  %1381 = vmatpush1.bf16.msra.mxu0 0
  %1382 = vmatprep.subr.bf16.mxu0 0
  %1383 = vmatpush1.bf16.msra.mxu0 0
  %1384 = vmatprep.subr.bf16.mxu0 0
  %1385 = vmatpush1.bf16.msra.mxu0 0
  %1386 = vmatprep.subr.bf16.mxu0 0
  %1387 = vmatpush1.bf16.msra.mxu0 0
  %1388 = vmatprep.subr.bf16.mxu0 0
  %1389 = vmatpush1.bf16.msra.mxu0 0
  %1390 = vmatprep.subr.bf16.mxu0 0
  %1391 = vmatpush1.bf16.msra.mxu0 0
  %1392 = vmatprep.subr.bf16.mxu0 0
  %1393 = vmatpush1.bf16.msra.mxu0 0
  %1394 = vmatprep.subr.bf16.mxu0 0
  %1395 = vmatpush1.bf16.msra.mxu0 0
  %1396 = vmatprep.subr.bf16.mxu0 0
  %1397 = vmatpush1.bf16.msra.mxu0 0
  %1398 = vmatprep.subr.bf16.mxu0 0
  %1399 = vmatpush1.bf16.msra.mxu0 0
  %1400 = vmatprep.subr.bf16.mxu0 0
  %1401 = vmatpush1.bf16.msra.mxu0 0
  %1402 = vmatprep.subr.bf16.mxu0 0
  %1403 = vmatpush1.bf16.msra.mxu0 0
  %1404 = vmatprep.mubr.bf16.mxu0 0
  %1405 = vmatmul.mubr.bf16.gmra.mrb[0].mxu0 %v1247
  %v1406 = vpop.f32.mrb[0].mxu0
  %v1407 = vadd.f32 %v1366, %v1406
  %v1408 = vpop.f32.mrb[0].mxu0
  %v1409 = vadd.f32 %v1368, %v1408
  %v1410 = vpop.f32.mrb[0].mxu0
  %v1411 = vpop.f32.mrb[0].mxu0
  %1412 = vdwg.mxu0
  %1413 = vmatprep.subr.bf16.mxu0 %v856
  %1414 = vmatpush1.bf16.msra.mxu0 %v855
  %1415 = vmatprep.subr.bf16.mxu0 %v860
  %1416 = vmatpush1.bf16.msra.mxu0 %v859
  %1417 = vmatprep.subr.bf16.mxu0 %v864
  %1418 = vmatpush1.bf16.msra.mxu0 %v863
  %1419 = vmatprep.subr.bf16.mxu0 %v868
  %1420 = vmatpush1.bf16.msra.mxu0 %v867
  %1421 = vmatprep.subr.bf16.mxu0 %v872
  %1422 = vmatpush1.bf16.msra.mxu0 %v871
  %1423 = vmatprep.subr.bf16.mxu0 %v876
  %1424 = vmatpush1.bf16.msra.mxu0 %v875
  %1425 = vmatprep.subr.bf16.mxu0 %v880
  %1426 = vmatpush1.bf16.msra.mxu0 %v879
  %1427 = vmatprep.subr.bf16.mxu0 %v884
  %1428 = vmatpush1.bf16.msra.mxu0 %v883
  %1429 = vmatprep.subr.bf16.mxu0 %v888
  %1430 = vmatpush1.bf16.msra.mxu0 %v887
  %1431 = vmatprep.subr.bf16.mxu0 %v892
  %1432 = vmatpush1.bf16.msra.mxu0 %v891
  %1433 = vmatprep.subr.bf16.mxu0 %v896
  %1434 = vmatpush1.bf16.msra.mxu0 %v895
  %1435 = vmatprep.subr.bf16.mxu0 %v900
  %1436 = vmatpush1.bf16.msra.mxu0 %v899
  %1437 = vmatprep.subr.bf16.mxu0 %v904
  %1438 = vmatpush1.bf16.msra.mxu0 %v903
  %1439 = vmatprep.subr.bf16.mxu0 %v908
  %1440 = vmatpush1.bf16.msra.mxu0 %v907
  %1441 = vmatprep.subr.bf16.mxu0 %v912
  %1442 = vmatpush1.bf16.msra.mxu0 %v911
  %1443 = vmatprep.subr.bf16.mxu0 %v916
  %1444 = vmatpush1.bf16.msra.mxu0 %v915
  %1445 = vmatprep.mubr.bf16.mxu0 %v41
  %1446 = vmatmul.mubr.bf16.gmra.mrb[0].mxu0 %v40
  %v1447 = vpop.f32.mrb[0].mxu0
  %v1448 = vadd.f32 %v256, %v1447
  %v1449 = vpop.f32.mrb[0].mxu0
  %v1450 = vadd.f32 %v260, %v1449
  %v1451 = vpop.f32.mrb[0].mxu0
  %v1452 = vpop.f32.mrb[0].mxu0
  %1453 = vdwg.mxu0
  %1454 = vmatprep.subr.bf16.mxu0 %v920
  %1455 = vmatpush1.bf16.msra.mxu0 %v919
  %1456 = vmatprep.subr.bf16.mxu0 %v924
  %1457 = vmatpush1.bf16.msra.mxu0 %v923
  %1458 = vmatprep.subr.bf16.mxu0 %v928
  %1459 = vmatpush1.bf16.msra.mxu0 %v927
  %1460 = vmatprep.subr.bf16.mxu0 %v932
  %1461 = vmatpush1.bf16.msra.mxu0 %v931
  %1462 = vmatprep.subr.bf16.mxu0 %v936
  %1463 = vmatpush1.bf16.msra.mxu0 %v935
  %1464 = vmatprep.subr.bf16.mxu0 %v940
  %1465 = vmatpush1.bf16.msra.mxu0 %v939
  %1466 = vmatprep.subr.bf16.mxu0 %v944
  %1467 = vmatpush1.bf16.msra.mxu0 %v943
  %1468 = vmatprep.subr.bf16.mxu0 %v948
  %1469 = vmatpush1.bf16.msra.mxu0 %v947
  %1470 = vmatprep.subr.bf16.mxu0 %v952
  %1471 = vmatpush1.bf16.msra.mxu0 %v951
  %1472 = vmatprep.subr.bf16.mxu0 %v956
  %1473 = vmatpush1.bf16.msra.mxu0 %v955
  %1474 = vmatprep.subr.bf16.mxu0 %v960
  %1475 = vmatpush1.bf16.msra.mxu0 %v959
  %1476 = vmatprep.subr.bf16.mxu0 %v964
  %1477 = vmatpush1.bf16.msra.mxu0 %v963
  %1478 = vmatprep.subr.bf16.mxu0 %v968
  %1479 = vmatpush1.bf16.msra.mxu0 %v967
  %1480 = vmatprep.subr.bf16.mxu0 %v972
  %1481 = vmatpush1.bf16.msra.mxu0 %v971
  %1482 = vmatprep.subr.bf16.mxu0 %v976
  %1483 = vmatpush1.bf16.msra.mxu0 %v975
  %1484 = vmatprep.subr.bf16.mxu0 %v980
  %1485 = vmatpush1.bf16.msra.mxu0 %v979
  %1486 = vmatprep.mubr.bf16.mxu0 %v43
  %1487 = vmatmul.mubr.bf16.gmra.mrb[0].mxu0 %v42
  %v1488 = vpop.f32.mrb[0].mxu0
  %v1489 = vadd.f32 %v1448, %v1488
  %v1490 = vpop.f32.mrb[0].mxu0
  %v1491 = vadd.f32 %v1450, %v1490
  %v1492 = vpop.f32.mrb[0].mxu0
  %v1493 = vpop.f32.mrb[0].mxu0
  %1494 = vdwg.mxu0
  %1495 = vmatprep.subr.bf16.mxu0 %v984
  %1496 = vmatpush1.bf16.msra.mxu0 %v983
  %1497 = vmatprep.subr.bf16.mxu0 %v988
  %1498 = vmatpush1.bf16.msra.mxu0 %v987
  %1499 = vmatprep.subr.bf16.mxu0 %v992
  %1500 = vmatpush1.bf16.msra.mxu0 %v991
  %1501 = vmatprep.subr.bf16.mxu0 %v996
  %1502 = vmatpush1.bf16.msra.mxu0 %v995
  %1503 = vmatprep.subr.bf16.mxu0 %v1000
  %1504 = vmatpush1.bf16.msra.mxu0 %v999
  %1505 = vmatprep.subr.bf16.mxu0 %v1004
  %1506 = vmatpush1.bf16.msra.mxu0 %v1003
  %1507 = vmatprep.subr.bf16.mxu0 %v1008
  %1508 = vmatpush1.bf16.msra.mxu0 %v1007
  %1509 = vmatprep.subr.bf16.mxu0 %v1012
  %1510 = vmatpush1.bf16.msra.mxu0 %v1011
  %1511 = vmatprep.subr.bf16.mxu0 %v1016
  %1512 = vmatpush1.bf16.msra.mxu0 %v1015
  %1513 = vmatprep.subr.bf16.mxu0 %v1020
  %1514 = vmatpush1.bf16.msra.mxu0 %v1019
  %1515 = vmatprep.subr.bf16.mxu0 %v1024
  %1516 = vmatpush1.bf16.msra.mxu0 %v1023
  %1517 = vmatprep.subr.bf16.mxu0 %v1028
  %1518 = vmatpush1.bf16.msra.mxu0 %v1027
  %1519 = vmatprep.subr.bf16.mxu0 %v1032
  %1520 = vmatpush1.bf16.msra.mxu0 %v1031
  %1521 = vmatprep.subr.bf16.mxu0 %v1036
  %1522 = vmatpush1.bf16.msra.mxu0 %v1035
  %1523 = vmatprep.subr.bf16.mxu0 %v1040
  %1524 = vmatpush1.bf16.msra.mxu0 %v1039
  %1525 = vmatprep.subr.bf16.mxu0 %v1044
  %1526 = vmatpush1.bf16.msra.mxu0 %v1043
  %1527 = vmatprep.mubr.bf16.mxu0 %v45
  %1528 = vmatmul.mubr.bf16.gmra.mrb[0].mxu0 %v44
  %v1529 = vpop.f32.mrb[0].mxu0
  %v1530 = vadd.f32 %v1489, %v1529
  %v1531 = vpop.f32.mrb[0].mxu0
  %v1532 = vadd.f32 %v1491, %v1531
  %v1533 = vpop.f32.mrb[0].mxu0
  %v1534 = vpop.f32.mrb[0].mxu0
  %1535 = vdwg.mxu0
  %1536 = vmatprep.subr.bf16.mxu0 %v1048
  %1537 = vmatpush1.bf16.msra.mxu0 %v1047
  %1538 = vmatprep.subr.bf16.mxu0 0
  %1539 = vmatpush1.bf16.msra.mxu0 0
  %1540 = vmatprep.subr.bf16.mxu0 0
  %1541 = vmatpush1.bf16.msra.mxu0 0
  %1542 = vmatprep.subr.bf16.mxu0 0
  %1543 = vmatpush1.bf16.msra.mxu0 0
  %1544 = vmatprep.subr.bf16.mxu0 0
  %1545 = vmatpush1.bf16.msra.mxu0 0
  %1546 = vmatprep.subr.bf16.mxu0 0
  %1547 = vmatpush1.bf16.msra.mxu0 0
  %1548 = vmatprep.subr.bf16.mxu0 0
  %1549 = vmatpush1.bf16.msra.mxu0 0
  %1550 = vmatprep.subr.bf16.mxu0 0
  %1551 = vmatpush1.bf16.msra.mxu0 0
  %1552 = vmatprep.subr.bf16.mxu0 0
  %1553 = vmatpush1.bf16.msra.mxu0 0
  %1554 = vmatprep.subr.bf16.mxu0 0
  %1555 = vmatpush1.bf16.msra.mxu0 0
  %1556 = vmatprep.subr.bf16.mxu0 0
  %1557 = vmatpush1.bf16.msra.mxu0 0
  %1558 = vmatprep.subr.bf16.mxu0 0
  %1559 = vmatpush1.bf16.msra.mxu0 0
  %1560 = vmatprep.subr.bf16.mxu0 0
  %1561 = vmatpush1.bf16.msra.mxu0 0
  %1562 = vmatprep.subr.bf16.mxu0 0
  %1563 = vmatpush1.bf16.msra.mxu0 0
  %1564 = vmatprep.subr.bf16.mxu0 0
  %1565 = vmatpush1.bf16.msra.mxu0 0
  %1566 = vmatprep.subr.bf16.mxu0 0
  %1567 = vmatpush1.bf16.msra.mxu0 0
  %1568 = vmatprep.mubr.bf16.mxu0 0
  %1569 = vmatmul.mubr.bf16.gmra.mrb[0].mxu0 %v1247
  %v1570 = vpop.f32.mrb[0].mxu0
  %v1571 = vadd.f32 %v1530, %v1570
  %v1572 = vpop.f32.mrb[0].mxu0
  %v1573 = vadd.f32 %v1532, %v1572
  %v1574 = vpop.f32.mrb[0].mxu0
  %v1575 = vpop.f32.mrb[0].mxu0
  %1576 = vdwg.mxu0
  %v1577 = vmax.f32 %v1407, 0.0
  %v1578 = vmax.f32 %v1409, 0.0
  %v1579 = vmax.f32 %v1571, 0.0
  %v1580 = vmax.f32 %v1573, 0.0
  %v1581 = vpack.c.bf16 %v1577, %v1577
  %v1582 = vpack.c.bf16 %v1578, %v1578
  %v1583 = vpack.c.bf16 %v1579, %v1579
  %v1584 = vpack.c.bf16 %v1580, %v1580
  %v1585 = vld [vmem:[%s3] sm:$0xf]
  %v1586 = vld [vmem:[%s3 + $0x4] sm:$0xf]
  %v1587 = vld [vmem:[%s3 + $0x8] sm:$0xf]
  %v1588 = vld [vmem:[%s3 + $0xc] sm:$0xf]
  %v1589 = vld [vmem:[%s3 + $0x10] sm:$0xf]
  %v1590 = vld [vmem:[%s3 + $0x14] sm:$0xf]
  %v1591 = vld [vmem:[%s3 + $0x18] sm:$0xf]
  %v1592 = vld [vmem:[%s3 + $0x1c] sm:$0xf]
  %v1593 = vld [vmem:[%s3 + $0x20] sm:$0xf]
  %v1594 = vld [vmem:[%s3 + $0x24] sm:$0xf]
  %v1595 = vld [vmem:[%s3 + $0x28] sm:$0xf]
  %v1596 = vld [vmem:[%s3 + $0x2c] sm:$0xf]
  %v1597 = vld [vmem:[%s3 + $0x30] sm:$0xf]
  %v1598 = vld [vmem:[%s3 + $0x34] sm:$0xf]
  %v1599 = vld [vmem:[%s3 + $0x38] sm:$0xf]
  %v1600 = vld [vmem:[%s3 + $0x3c] sm:$0xf]
  %v1601 = vld [vmem:[%s3 + $0x40] sm:$0xf]
  %v1602 = vld [vmem:[%s3 + $0x44] sm:$0xf]
  %v1603 = vld [vmem:[%s3 + $0x48] sm:$0xf]
  %v1604 = vld [vmem:[%s3 + $0x4c] sm:$0xf]
  %v1605 = vld [vmem:[%s3 + $0x50] sm:$0xf]
  %v1606 = vld [vmem:[%s3 + $0x54] sm:$0xf]
  %v1607 = vld [vmem:[%s3 + $0x58] sm:$0xf]
  %v1608 = vld [vmem:[%s3 + $0x5c] sm:$0xf]
  %v1609 = vld [vmem:[%s3 + $0x60] sm:$0xf]
  %v1610 = vld [vmem:[%s3 + $0x64] sm:$0xf]
  %v1611 = vld [vmem:[%s3 + $0x68] sm:$0xf]
  %v1612 = vld [vmem:[%s3 + $0x6c] sm:$0xf]
  %v1613 = vld [vmem:[%s3 + $0x70] sm:$0xf]
  %v1614 = vld [vmem:[%s3 + $0x74] sm:$0xf]
  %v1615 = vld [vmem:[%s3 + $0x78] sm:$0xf]
  %v1616 = vld [vmem:[%s3 + $0x7c] sm:$0xf]
  %v1617 = vld [vmem:[%s3 + $0x80] sm:$0xf]
  %v1618 = vld [vmem:[%s3 + $0x84] sm:$0xf]
  %v1619 = vld [vmem:[%s3 + $0x88] sm:$0xf]
  %v1620 = vld [vmem:[%s3 + $0x8c] sm:$0xf]
  %v1621 = vld [vmem:[%s3 + $0x90] sm:$0xf]
  %v1622 = vld [vmem:[%s3 + $0x94] sm:$0xf]
  %v1623 = vld [vmem:[%s3 + $0x98] sm:$0xf]
  %v1624 = vld [vmem:[%s3 + $0x9c] sm:$0xf]
  %v1625 = vld [vmem:[%s3 + $0xa0] sm:$0xf]
  %v1626 = vld [vmem:[%s3 + $0xa4] sm:$0xf]
  %v1627 = vld [vmem:[%s3 + $0xa8] sm:$0xf]
  %v1628 = vld [vmem:[%s3 + $0xac] sm:$0xf]
  %v1629 = vld [vmem:[%s3 + $0xb0] sm:$0xf]
  %v1630 = vld [vmem:[%s3 + $0xb4] sm:$0xf]
  %v1631 = vld [vmem:[%s3 + $0xb8] sm:$0xf]
  %v1632 = vld [vmem:[%s3 + $0xbc] sm:$0xf]
  %v1633 = vld [vmem:[%s3 + $0xc0] sm:$0xf]
  %v1634 = vld [vmem:[%s3 + $0xc4] sm:$0xf]
  %v1635 = vld [vmem:[%s3 + $0xc8] sm:$0xf]
  %v1636 = vld [vmem:[%s3 + $0xcc] sm:$0xf]
  %v1637 = vld [vmem:[%s3 + $0xd0] sm:$0xf]
  %v1638 = vld [vmem:[%s3 + $0xd4] sm:$0xf]
  %v1639 = vld [vmem:[%s3 + $0xd8] sm:$0xf]
  %v1640 = vld [vmem:[%s3 + $0xdc] sm:$0xf]
  %v1641 = vld [vmem:[%s3 + $0xe0] sm:$0xf]
  %v1642 = vld [vmem:[%s3 + $0xe4] sm:$0xf]
  %v1643 = vld [vmem:[%s3 + $0xe8] sm:$0xf]
  %v1644 = vld [vmem:[%s3 + $0xec] sm:$0xf]
  %v1645 = vld [vmem:[%s3 + $0xf0] sm:$0xf]
  %v1646 = vld [vmem:[%s3 + $0xf4] sm:$0xf]
  %v1647 = vld [vmem:[%s3 + $0xf8] sm:$0xf]
  %v1648 = vld [vmem:[%s3 + $0xfc] sm:$0xf]
  %v1649 = vld [vmem:[%s4] sm:$0x1]
  %v1651 = vlaneseq
  %v1652 = vshrl.u32 %v1651, 7
  %v1653 = vsub.s32 0, %v1652
  %v1654 = vrot.slane %v1649, %v1653
  %v1720 = vunpack.c.l.b16 %v1585
  %v1721 = vunpack.c.l.b16 %v1586
  %v1722 = vunpack.c.l.b16 %v1587
  %v1723 = vunpack.c.l.b16 %v1588
  %v1724 = vunpack.c.l.b16 %v1589
  %v1725 = vunpack.c.l.b16 %v1590
  %v1726 = vunpack.c.l.b16 %v1591
  %v1727 = vunpack.c.l.b16 %v1592
  %v1728 = vunpack.c.l.b16 %v1593
  %v1729 = vunpack.c.l.b16 %v1594
  %v1730 = vunpack.c.l.b16 %v1595
  %v1731 = vunpack.c.l.b16 %v1596
  %v1732 = vunpack.c.l.b16 %v1597
  %v1733 = vunpack.c.l.b16 %v1598
  %v1734 = vunpack.c.l.b16 %v1599
  %v1735 = vunpack.c.l.b16 %v1600
  %v1736 = vunpack.c.l.b16 %v1601
  %v1737 = vunpack.c.l.b16 %v1602
  %v1738 = vunpack.c.l.b16 %v1603
  %v1739 = vunpack.c.l.b16 %v1604
  %v1740 = vunpack.c.l.b16 %v1605
  %v1741 = vunpack.c.l.b16 %v1606
  %v1742 = vunpack.c.l.b16 %v1607
  %v1743 = vunpack.c.l.b16 %v1608
  %v1744 = vunpack.c.l.b16 %v1609
  %v1745 = vunpack.c.l.b16 %v1610
  %v1746 = vunpack.c.l.b16 %v1611
  %v1747 = vunpack.c.l.b16 %v1612
  %v1748 = vunpack.c.l.b16 %v1613
  %v1749 = vunpack.c.l.b16 %v1614
  %v1750 = vunpack.c.l.b16 %v1615
  %v1751 = vunpack.c.l.b16 %v1616
  %v1752 = vunpack.c.l.b16 %v1617
  %v1753 = vunpack.c.l.b16 %v1618
  %v1754 = vunpack.c.l.b16 %v1619
  %v1755 = vunpack.c.l.b16 %v1620
  %v1756 = vunpack.c.l.b16 %v1621
  %v1757 = vunpack.c.l.b16 %v1622
  %v1758 = vunpack.c.l.b16 %v1623
  %v1759 = vunpack.c.l.b16 %v1624
  %v1760 = vunpack.c.l.b16 %v1625
  %v1761 = vunpack.c.l.b16 %v1626
  %v1762 = vunpack.c.l.b16 %v1627
  %v1763 = vunpack.c.l.b16 %v1628
  %v1764 = vunpack.c.l.b16 %v1629
  %v1765 = vunpack.c.l.b16 %v1630
  %v1766 = vunpack.c.l.b16 %v1631
  %v1767 = vunpack.c.l.b16 %v1632
  %v1768 = vunpack.c.l.b16 %v1633
  %v1769 = vunpack.c.l.b16 %v1634
  %v1770 = vunpack.c.l.b16 %v1635
  %v1771 = vunpack.c.l.b16 %v1636
  %v1772 = vunpack.c.l.b16 %v1637
  %v1773 = vunpack.c.l.b16 %v1638
  %v1774 = vunpack.c.l.b16 %v1639
  %v1775 = vunpack.c.l.b16 %v1640
  %v1776 = vunpack.c.l.b16 %v1641
  %v1777 = vunpack.c.l.b16 %v1642
  %v1778 = vunpack.c.l.b16 %v1643
  %v1779 = vunpack.c.l.b16 %v1644
  %v1780 = vunpack.c.l.b16 %v1645
  %v1781 = vunpack.c.l.b16 %v1646
  %v1782 = vunpack.c.l.b16 %v1647
  %v1783 = vunpack.c.l.b16 %v1648
  %v1784 = vpack.c.b16 %v1721, %v1720
  %v1785 = vpack.c.b16 %v1723, %v1722
  %v1786 = vpack.c.b16 %v1725, %v1724
  %v1787 = vpack.c.b16 %v1727, %v1726
  %v1788 = vpack.c.b16 %v1729, %v1728
  %v1789 = vpack.c.b16 %v1731, %v1730
  %v1790 = vpack.c.b16 %v1733, %v1732
  %v1791 = vpack.c.b16 %v1735, %v1734
  %v1792 = vpack.c.b16 %v1737, %v1736
  %v1793 = vpack.c.b16 %v1739, %v1738
  %v1794 = vpack.c.b16 %v1741, %v1740
  %v1795 = vpack.c.b16 %v1743, %v1742
  %v1796 = vpack.c.b16 %v1745, %v1744
  %v1797 = vpack.c.b16 %v1747, %v1746
  %v1798 = vpack.c.b16 %v1749, %v1748
  %v1799 = vpack.c.b16 %v1751, %v1750
  %v1800 = vpack.c.b16 %v1753, %v1752
  %v1801 = vpack.c.b16 %v1755, %v1754
  %v1802 = vpack.c.b16 %v1757, %v1756
  %v1803 = vpack.c.b16 %v1759, %v1758
  %v1804 = vpack.c.b16 %v1761, %v1760
  %v1805 = vpack.c.b16 %v1763, %v1762
  %v1806 = vpack.c.b16 %v1765, %v1764
  %v1807 = vpack.c.b16 %v1767, %v1766
  %v1808 = vpack.c.b16 %v1769, %v1768
  %v1809 = vpack.c.b16 %v1771, %v1770
  %v1810 = vpack.c.b16 %v1773, %v1772
  %v1811 = vpack.c.b16 %v1775, %v1774
  %v1812 = vpack.c.b16 %v1777, %v1776
  %v1813 = vpack.c.b16 %v1779, %v1778
  %v1814 = vpack.c.b16 %v1781, %v1780
  %v1815 = vpack.c.b16 %v1783, %v1782
  %1848 = vmatprep.subr.bf16.mxu0 0
  %1849 = vmatpush1.bf16.msra.mxu0 %v1784
  %1850 = vmatprep.subr.bf16.mxu0 0
  %1851 = vmatpush1.bf16.msra.mxu0 %v1785
  %1852 = vmatprep.subr.bf16.mxu0 0
  %1853 = vmatpush1.bf16.msra.mxu0 %v1786
  %1854 = vmatprep.subr.bf16.mxu0 0
  %1855 = vmatpush1.bf16.msra.mxu0 %v1787
  %1856 = vmatprep.subr.bf16.mxu0 0
  %1857 = vmatpush1.bf16.msra.mxu0 %v1788
  %1858 = vmatprep.subr.bf16.mxu0 0
  %1859 = vmatpush1.bf16.msra.mxu0 %v1789
  %1860 = vmatprep.subr.bf16.mxu0 0
  %1861 = vmatpush1.bf16.msra.mxu0 %v1790
  %1862 = vmatprep.subr.bf16.mxu0 0
  %1863 = vmatpush1.bf16.msra.mxu0 %v1791
  %1864 = vmatprep.subr.bf16.mxu0 0
  %1865 = vmatpush1.bf16.msra.mxu0 %v1792
  %1866 = vmatprep.subr.bf16.mxu0 0
  %1867 = vmatpush1.bf16.msra.mxu0 %v1793
  %1868 = vmatprep.subr.bf16.mxu0 0
  %1869 = vmatpush1.bf16.msra.mxu0 %v1794
  %1870 = vmatprep.subr.bf16.mxu0 0
  %1871 = vmatpush1.bf16.msra.mxu0 %v1795
  %1872 = vmatprep.subr.bf16.mxu0 0
  %1873 = vmatpush1.bf16.msra.mxu0 %v1796
  %1874 = vmatprep.subr.bf16.mxu0 0
  %1875 = vmatpush1.bf16.msra.mxu0 %v1797
  %1876 = vmatprep.subr.bf16.mxu0 0
  %1877 = vmatpush1.bf16.msra.mxu0 %v1798
  %1878 = vmatprep.subr.bf16.mxu0 0
  %1879 = vmatpush1.bf16.msra.mxu0 %v1799
  %1880 = vmatprep.mubr.bf16.mxu0 %v1582
  %1881 = vmatmul.mubr.bf16.gmra.mrb[0].mxu0 %v1581
  %v1882 = vpop.f32.mrb[0].mxu0
  %v1883 = vadd.f32 %v1654, %v1882
  %v1884 = vpop.f32.mrb[0].mxu0
  %v1885 = vpop.f32.mrb[0].mxu0
  %v1886 = vpop.f32.mrb[0].mxu0
  %1887 = vdwg.mxu0
  %1888 = vmatprep.subr.bf16.mxu0 0
  %1889 = vmatpush1.bf16.msra.mxu0 %v1800
  %1890 = vmatprep.subr.bf16.mxu0 0
  %1891 = vmatpush1.bf16.msra.mxu0 %v1801
  %1892 = vmatprep.subr.bf16.mxu0 0
  %1893 = vmatpush1.bf16.msra.mxu0 %v1802
  %1894 = vmatprep.subr.bf16.mxu0 0
  %1895 = vmatpush1.bf16.msra.mxu0 %v1803
  %1896 = vmatprep.subr.bf16.mxu0 0
  %1897 = vmatpush1.bf16.msra.mxu0 %v1804
  %1898 = vmatprep.subr.bf16.mxu0 0
  %1899 = vmatpush1.bf16.msra.mxu0 %v1805
  %1900 = vmatprep.subr.bf16.mxu0 0
  %1901 = vmatpush1.bf16.msra.mxu0 %v1806
  %1902 = vmatprep.subr.bf16.mxu0 0
  %1903 = vmatpush1.bf16.msra.mxu0 %v1807
  %1904 = vmatprep.subr.bf16.mxu0 0
  %1905 = vmatpush1.bf16.msra.mxu0 %v1808
  %1906 = vmatprep.subr.bf16.mxu0 0
  %1907 = vmatpush1.bf16.msra.mxu0 %v1809
  %1908 = vmatprep.subr.bf16.mxu0 0
  %1909 = vmatpush1.bf16.msra.mxu0 %v1810
  %1910 = vmatprep.subr.bf16.mxu0 0
  %1911 = vmatpush1.bf16.msra.mxu0 %v1811
  %1912 = vmatprep.subr.bf16.mxu0 0
  %1913 = vmatpush1.bf16.msra.mxu0 %v1812
  %1914 = vmatprep.subr.bf16.mxu0 0
  %1915 = vmatpush1.bf16.msra.mxu0 %v1813
  %1916 = vmatprep.subr.bf16.mxu0 0
  %1917 = vmatpush1.bf16.msra.mxu0 %v1814
  %1918 = vmatprep.subr.bf16.mxu0 0
  %1919 = vmatpush1.bf16.msra.mxu0 %v1815
  %1920 = vmatprep.mubr.bf16.mxu0 %v1584
  %1921 = vmatmul.mubr.bf16.gmra.mrb[0].mxu0 %v1583
  %v1922 = vpop.f32.mrb[0].mxu0
  %v1923 = vadd.f32 %v1883, %v1922
  %v1924 = vpop.f32.mrb[0].mxu0
  %v1925 = vpop.f32.mrb[0].mxu0
  %v1926 = vpop.f32.mrb[0].mxu0
  %1927 = vdwg.mxu0
  %v1928 = vmax.f32 %v1923, 0.0
  %v1929 = vpack.c.bf16 %v1928, %v1928
  %v1930 = vld [vmem:[%s5] sm:$0xff]
  %v1931 = vld [vmem:[%s5 + $0x8] sm:$0xff]
  %v1932 = vld [vmem:[%s5 + $0x10] sm:$0xff]
  %v1933 = vld [vmem:[%s5 + $0x18] sm:$0xff]
  %v1934 = vld [vmem:[%s5 + $0x20] sm:$0xff]
  %v1935 = vld [vmem:[%s5 + $0x28] sm:$0xff]
  %v1936 = vld [vmem:[%s5 + $0x30] sm:$0xff]
  %v1937 = vld [vmem:[%s5 + $0x38] sm:$0xff]
  %v1938 = vld [vmem:[%s5 + $0x40] sm:$0xff]
  %v1939 = vld [vmem:[%s5 + $0x48] sm:$0xff]
  %v1940 = vld [vmem:[%s5 + $0x50] sm:$0xff]
  %v1941 = vld [vmem:[%s5 + $0x58] sm:$0xff]
  %v1942 = vld [vmem:[%s5 + $0x60] sm:$0xff]
  %v1943 = vld [vmem:[%s5 + $0x68] sm:$0xff]
  %v1944 = vld [vmem:[%s5 + $0x70] sm:$0xff]
  %v1945 = vld [vmem:[%s5 + $0x78] sm:$0xff]
  %v1946 = vld [vmem:[%s5 + $0x80] sm:$0xff]
  %v1947 = vld [vmem:[%s5 + $0x88] sm:$0xff]
  %v1948 = vld [vmem:[%s5 + $0x90] sm:$0xff]
  %v1949 = vld [vmem:[%s5 + $0x98] sm:$0xff]
  %v1950 = vld [vmem:[%s5 + $0xa0] sm:$0xff]
  %v1951 = vld [vmem:[%s5 + $0xa8] sm:$0xff]
  %v1952 = vld [vmem:[%s5 + $0xb0] sm:$0xff]
  %v1953 = vld [vmem:[%s5 + $0xb8] sm:$0xff]
  %v1954 = vld [vmem:[%s5 + $0xc0] sm:$0xff]
  %v1955 = vld [vmem:[%s5 + $0xc8] sm:$0xff]
  %v1956 = vld [vmem:[%s5 + $0xd0] sm:$0xff]
  %v1957 = vld [vmem:[%s5 + $0xd8] sm:$0xff]
  %v1958 = vld [vmem:[%s5 + $0xe0] sm:$0xff]
  %v1959 = vld [vmem:[%s5 + $0xe8] sm:$0xff]
  %v1960 = vld [vmem:[%s5 + $0xf0] sm:$0xff]
  %v1961 = vld [vmem:[%s5 + $0xf8] sm:$0xff]
  %v1962 = vld [vmem:[%s6] sm:$0xf]
  %v1964 = vlaneseq
  %v1965 = vshrl.u32 %v1964, 7
  %v1966 = vsub.s32 0, %v1965
  %v1967 = vrot.slane %v1962, %v1966
  %v1968 = vlaneseq
  %v1969 = vshrl.u32 %v1968, 7
  %v1970 = vsub.s32 1, %v1969
  %v1971 = vrot.slane %v1962, %v1970
  %v1972 = vlaneseq
  %v1973 = vshrl.u32 %v1972, 7
  %v1974 = vsub.s32 2, %v1973
  %v1975 = vrot.slane %v1962, %v1974
  %v1976 = vlaneseq
  %v1977 = vshrl.u32 %v1976, 7
  %v1978 = vsub.s32 3, %v1977
  %v1979 = vrot.slane %v1962, %v1978
  %v2016 = vunpack.c.l.b16 %v1930
  %v2017 = vunpack.c.h.b16 %v1930
  %v2018 = vunpack.c.l.b16 %v1931
  %v2019 = vunpack.c.h.b16 %v1931
  %v2020 = vunpack.c.l.b16 %v1932
  %v2021 = vunpack.c.h.b16 %v1932
  %v2022 = vunpack.c.l.b16 %v1933
  %v2023 = vunpack.c.h.b16 %v1933
  %v2024 = vunpack.c.l.b16 %v1934
  %v2025 = vunpack.c.h.b16 %v1934
  %v2026 = vunpack.c.l.b16 %v1935
  %v2027 = vunpack.c.h.b16 %v1935
  %v2028 = vunpack.c.l.b16 %v1936
  %v2029 = vunpack.c.h.b16 %v1936
  %v2030 = vunpack.c.l.b16 %v1937
  %v2031 = vunpack.c.h.b16 %v1937
  %v2032 = vunpack.c.l.b16 %v1938
  %v2033 = vunpack.c.h.b16 %v1938
  %v2034 = vunpack.c.l.b16 %v1939
  %v2035 = vunpack.c.h.b16 %v1939
  %v2036 = vunpack.c.l.b16 %v1940
  %v2037 = vunpack.c.h.b16 %v1940
  %v2038 = vunpack.c.l.b16 %v1941
  %v2039 = vunpack.c.h.b16 %v1941
  %v2040 = vunpack.c.l.b16 %v1942
  %v2041 = vunpack.c.h.b16 %v1942
  %v2042 = vunpack.c.l.b16 %v1943
  %v2043 = vunpack.c.h.b16 %v1943
  %v2044 = vunpack.c.l.b16 %v1944
  %v2045 = vunpack.c.h.b16 %v1944
  %v2046 = vunpack.c.l.b16 %v1945
  %v2047 = vunpack.c.h.b16 %v1945
  %v2048 = vunpack.c.l.b16 %v1946
  %v2049 = vunpack.c.h.b16 %v1946
  %v2050 = vunpack.c.l.b16 %v1947
  %v2051 = vunpack.c.h.b16 %v1947
  %v2052 = vunpack.c.l.b16 %v1948
  %v2053 = vunpack.c.h.b16 %v1948
  %v2054 = vunpack.c.l.b16 %v1949
  %v2055 = vunpack.c.h.b16 %v1949
  %v2056 = vunpack.c.l.b16 %v1950
  %v2057 = vunpack.c.h.b16 %v1950
  %v2058 = vunpack.c.l.b16 %v1951
  %v2059 = vunpack.c.h.b16 %v1951
  %v2060 = vunpack.c.l.b16 %v1952
  %v2061 = vunpack.c.h.b16 %v1952
  %v2062 = vunpack.c.l.b16 %v1953
  %v2063 = vunpack.c.h.b16 %v1953
  %v2064 = vunpack.c.l.b16 %v1954
  %v2065 = vunpack.c.h.b16 %v1954
  %v2066 = vunpack.c.l.b16 %v1955
  %v2067 = vunpack.c.h.b16 %v1955
  %v2068 = vunpack.c.l.b16 %v1956
  %v2069 = vunpack.c.h.b16 %v1956
  %v2070 = vunpack.c.l.b16 %v1957
  %v2071 = vunpack.c.h.b16 %v1957
  %v2072 = vunpack.c.l.b16 %v1958
  %v2073 = vunpack.c.h.b16 %v1958
  %v2074 = vunpack.c.l.b16 %v1959
  %v2075 = vunpack.c.h.b16 %v1959
  %v2076 = vunpack.c.l.b16 %v1960
  %v2077 = vunpack.c.h.b16 %v1960
  %v2078 = vunpack.c.l.b16 %v1961
  %v2079 = vunpack.c.h.b16 %v1961
  %v2080 = vpack.c.b16 %v2020, %v2016
  %v2081 = vpack.c.b16 %v2021, %v2017
  %v2082 = vpack.c.b16 %v2022, %v2018
  %v2083 = vpack.c.b16 %v2023, %v2019
  %v2084 = vpack.c.b16 %v2028, %v2024
  %v2085 = vpack.c.b16 %v2029, %v2025
  %v2086 = vpack.c.b16 %v2030, %v2026
  %v2087 = vpack.c.b16 %v2031, %v2027
  %v2088 = vpack.c.b16 %v2036, %v2032
  %v2089 = vpack.c.b16 %v2037, %v2033
  %v2090 = vpack.c.b16 %v2038, %v2034
  %v2091 = vpack.c.b16 %v2039, %v2035
  %v2092 = vpack.c.b16 %v2044, %v2040
  %v2093 = vpack.c.b16 %v2045, %v2041
  %v2094 = vpack.c.b16 %v2046, %v2042
  %v2095 = vpack.c.b16 %v2047, %v2043
  %v2096 = vpack.c.b16 %v2052, %v2048
  %v2097 = vpack.c.b16 %v2053, %v2049
  %v2098 = vpack.c.b16 %v2054, %v2050
  %v2099 = vpack.c.b16 %v2055, %v2051
  %v2100 = vpack.c.b16 %v2060, %v2056
  %v2101 = vpack.c.b16 %v2061, %v2057
  %v2102 = vpack.c.b16 %v2062, %v2058
  %v2103 = vpack.c.b16 %v2063, %v2059
  %v2104 = vpack.c.b16 %v2068, %v2064
  %v2105 = vpack.c.b16 %v2069, %v2065
  %v2106 = vpack.c.b16 %v2070, %v2066
  %v2107 = vpack.c.b16 %v2071, %v2067
  %v2108 = vpack.c.b16 %v2076, %v2072
  %v2109 = vpack.c.b16 %v2077, %v2073
  %v2110 = vpack.c.b16 %v2078, %v2074
  %v2111 = vpack.c.b16 %v2079, %v2075
  %2144 = vmatprep.subr.bf16.mxu0 %v2081
  %2145 = vmatpush1.bf16.msra.mxu0 %v2080
  %2146 = vmatprep.subr.bf16.mxu0 %v2085
  %2147 = vmatpush1.bf16.msra.mxu0 %v2084
  %2148 = vmatprep.subr.bf16.mxu0 %v2089
  %2149 = vmatpush1.bf16.msra.mxu0 %v2088
  %2150 = vmatprep.subr.bf16.mxu0 %v2093
  %2151 = vmatpush1.bf16.msra.mxu0 %v2092
  %2152 = vmatprep.subr.bf16.mxu0 %v2097
  %2153 = vmatpush1.bf16.msra.mxu0 %v2096
  %2154 = vmatprep.subr.bf16.mxu0 %v2101
  %2155 = vmatpush1.bf16.msra.mxu0 %v2100
  %2156 = vmatprep.subr.bf16.mxu0 %v2105
  %2157 = vmatpush1.bf16.msra.mxu0 %v2104
  %2158 = vmatprep.subr.bf16.mxu0 %v2109
  %2159 = vmatpush1.bf16.msra.mxu0 %v2108
  %2160 = vmatprep.subr.bf16.mxu0 0
  %2161 = vmatpush1.bf16.msra.mxu0 0
  %2162 = vmatprep.subr.bf16.mxu0 0
  %2163 = vmatpush1.bf16.msra.mxu0 0
  %2164 = vmatprep.subr.bf16.mxu0 0
  %2165 = vmatpush1.bf16.msra.mxu0 0
  %2166 = vmatprep.subr.bf16.mxu0 0
  %2167 = vmatpush1.bf16.msra.mxu0 0
  %2168 = vmatprep.subr.bf16.mxu0 0
  %2169 = vmatpush1.bf16.msra.mxu0 0
  %2170 = vmatprep.subr.bf16.mxu0 0
  %2171 = vmatpush1.bf16.msra.mxu0 0
  %2172 = vmatprep.subr.bf16.mxu0 0
  %2173 = vmatpush1.bf16.msra.mxu0 0
  %2174 = vmatprep.subr.bf16.mxu0 0
  %2175 = vmatpush1.bf16.msra.mxu0 0
  %2176 = vmatprep.mubr.bf16.mxu0 0
  %2177 = vmatmul.mubr.bf16.gmra.mrb[0].mxu0 %v1929
  %v2178 = vpop.f32.mrb[0].mxu0
  %v2179 = vadd.f32 %v1967, %v2178
  %v2180 = vpop.f32.mrb[0].mxu0
  %v2181 = vadd.f32 %v1971, %v2180
  %v2182 = vpop.f32.mrb[0].mxu0
  %v2183 = vpop.f32.mrb[0].mxu0
  %2184 = vdwg.mxu0
  %2185 = vmatprep.subr.bf16.mxu0 %v2083
  %2186 = vmatpush1.bf16.msra.mxu0 %v2082
  %2187 = vmatprep.subr.bf16.mxu0 %v2087
  %2188 = vmatpush1.bf16.msra.mxu0 %v2086
  %2189 = vmatprep.subr.bf16.mxu0 %v2091
  %2190 = vmatpush1.bf16.msra.mxu0 %v2090
  %2191 = vmatprep.subr.bf16.mxu0 %v2095
  %2192 = vmatpush1.bf16.msra.mxu0 %v2094
  %2193 = vmatprep.subr.bf16.mxu0 %v2099
  %2194 = vmatpush1.bf16.msra.mxu0 %v2098
  %2195 = vmatprep.subr.bf16.mxu0 %v2103
  %2196 = vmatpush1.bf16.msra.mxu0 %v2102
  %2197 = vmatprep.subr.bf16.mxu0 %v2107
  %2198 = vmatpush1.bf16.msra.mxu0 %v2106
  %2199 = vmatprep.subr.bf16.mxu0 %v2111
  %2200 = vmatpush1.bf16.msra.mxu0 %v2110
  %2201 = vmatprep.subr.bf16.mxu0 0
  %2202 = vmatpush1.bf16.msra.mxu0 0
  %2203 = vmatprep.subr.bf16.mxu0 0
  %2204 = vmatpush1.bf16.msra.mxu0 0
  %2205 = vmatprep.subr.bf16.mxu0 0
  %2206 = vmatpush1.bf16.msra.mxu0 0
  %2207 = vmatprep.subr.bf16.mxu0 0
  %2208 = vmatpush1.bf16.msra.mxu0 0
  %2209 = vmatprep.subr.bf16.mxu0 0
  %2210 = vmatpush1.bf16.msra.mxu0 0
  %2211 = vmatprep.subr.bf16.mxu0 0
  %2212 = vmatpush1.bf16.msra.mxu0 0
  %2213 = vmatprep.subr.bf16.mxu0 0
  %2214 = vmatpush1.bf16.msra.mxu0 0
  %2215 = vmatprep.subr.bf16.mxu0 0
  %2216 = vmatpush1.bf16.msra.mxu0 0
  %2217 = vmatprep.mubr.bf16.mxu0 0
  %2218 = vmatmul.mubr.bf16.gmra.mrb[0].mxu0 %v1929
  %v2219 = vpop.f32.mrb[0].mxu0
  %v2220 = vadd.f32 %v1975, %v2219
  %v2221 = vpop.f32.mrb[0].mxu0
  %v2222 = vadd.f32 %v1979, %v2221
  %v2223 = vpop.f32.mrb[0].mxu0
  %v2224 = vpop.f32.mrb[0].mxu0
  %2225 = vdwg.mxu0
  %v2226 = vmax.f32 %v2179, 0.0
  %v2227 = vmax.f32 %v2181, 0.0
  %v2228 = vmax.f32 %v2220, 0.0
  %v2229 = vmax.f32 %v2222, 0.0
  %v2230 = vpack.c.bf16 %v2226, %v2226
  %v2231 = vpack.c.bf16 %v2227, %v2227
  %v2232 = vpack.c.bf16 %v2228, %v2228
  %v2233 = vpack.c.bf16 %v2229, %v2229
  %v2234 = vld [vmem:[%s7] sm:$0xff]
  %v2235 = vld [vmem:[%s7 + $0x8] sm:$0xff]
  %v2236 = vld [vmem:[%s7 + $0x10] sm:$0xff]
  %v2237 = vld [vmem:[%s7 + $0x18] sm:$0xf]
  %v2238 = vld [vmem:[%s7 + $0x1c] sm:$0xff]
  %v2239 = vld [vmem:[%s7 + $0x24] sm:$0xff]
  %v2240 = vld [vmem:[%s7 + $0x2c] sm:$0xff]
  %v2241 = vld [vmem:[%s7 + $0x34] sm:$0xf]
  %v2242 = vld [vmem:[%s7 + $0x38] sm:$0xff]
  %v2243 = vld [vmem:[%s7 + $0x40] sm:$0xff]
  %v2244 = vld [vmem:[%s7 + $0x48] sm:$0xff]
  %v2245 = vld [vmem:[%s7 + $0x50] sm:$0xf]
  %v2246 = vld [vmem:[%s7 + $0x54] sm:$0xff]
  %v2247 = vld [vmem:[%s7 + $0x5c] sm:$0xff]
  %v2248 = vld [vmem:[%s7 + $0x64] sm:$0xff]
  %v2249 = vld [vmem:[%s7 + $0x6c] sm:$0xf]
  %v2250 = vld [vmem:[%s7 + $0x70] sm:$0xff]
  %v2251 = vld [vmem:[%s7 + $0x78] sm:$0xff]
  %v2252 = vld [vmem:[%s7 + $0x80] sm:$0xff]
  %v2253 = vld [vmem:[%s7 + $0x88] sm:$0xf]
  %v2254 = vld [vmem:[%s7 + $0x8c] sm:$0xff]
  %v2255 = vld [vmem:[%s7 + $0x94] sm:$0xff]
  %v2256 = vld [vmem:[%s7 + $0x9c] sm:$0xff]
  %v2257 = vld [vmem:[%s7 + $0xa4] sm:$0xf]
  %v2258 = vld [vmem:[%s7 + $0xa8] sm:$0xff]
  %v2259 = vld [vmem:[%s7 + $0xb0] sm:$0xff]
  %v2260 = vld [vmem:[%s7 + $0xb8] sm:$0xff]
  %v2261 = vld [vmem:[%s7 + $0xc0] sm:$0xf]
  %v2262 = vld [vmem:[%s7 + $0xc4] sm:$0xff]
  %v2263 = vld [vmem:[%s7 + $0xcc] sm:$0xff]
  %v2264 = vld [vmem:[%s7 + $0xd4] sm:$0xff]
  %v2265 = vld [vmem:[%s7 + $0xdc] sm:$0xf]
  %v2266 = vld [vmem:[%s7 + $0xe0] sm:$0xff]
  %v2267 = vld [vmem:[%s7 + $0xe8] sm:$0xff]
  %v2268 = vld [vmem:[%s7 + $0xf0] sm:$0xff]
  %v2269 = vld [vmem:[%s7 + $0xf8] sm:$0xf]
  %v2270 = vld [vmem:[%s7 + $0xfc] sm:$0xff]
  %v2271 = vld [vmem:[%s7 + $0x104] sm:$0xff]
  %v2272 = vld [vmem:[%s7 + $0x10c] sm:$0xff]
  %v2273 = vld [vmem:[%s7 + $0x114] sm:$0xf]
  %v2274 = vld [vmem:[%s7 + $0x118] sm:$0xff]
  %v2275 = vld [vmem:[%s7 + $0x120] sm:$0xff]
  %v2276 = vld [vmem:[%s7 + $0x128] sm:$0xff]
  %v2277 = vld [vmem:[%s7 + $0x130] sm:$0xf]
  %v2278 = vld [vmem:[%s7 + $0x134] sm:$0xff]
  %v2279 = vld [vmem:[%s7 + $0x13c] sm:$0xff]
  %v2280 = vld [vmem:[%s7 + $0x144] sm:$0xff]
  %v2281 = vld [vmem:[%s7 + $0x14c] sm:$0xf]
  %v2282 = vld [vmem:[%s7 + $0x150] sm:$0xff]
  %v2283 = vld [vmem:[%s7 + $0x158] sm:$0xff]
  %v2284 = vld [vmem:[%s7 + $0x160] sm:$0xff]
  %v2285 = vld [vmem:[%s7 + $0x168] sm:$0xf]
  %v2286 = vld [vmem:[%s7 + $0x16c] sm:$0xff]
  %v2287 = vld [vmem:[%s7 + $0x174] sm:$0xff]
  %v2288 = vld [vmem:[%s7 + $0x17c] sm:$0xff]
  %v2289 = vld [vmem:[%s7 + $0x184] sm:$0xf]
  %v2290 = vld [vmem:[%s7 + $0x188] sm:$0xff]
  %v2291 = vld [vmem:[%s7 + $0x190] sm:$0xff]
  %v2292 = vld [vmem:[%s7 + $0x198] sm:$0xff]
  %v2293 = vld [vmem:[%s7 + $0x1a0] sm:$0xf]
  %v2294 = vld [vmem:[%s7 + $0x1a4] sm:$0xff]
  %v2295 = vld [vmem:[%s7 + $0x1ac] sm:$0xff]
  %v2296 = vld [vmem:[%s7 + $0x1b4] sm:$0xff]
  %v2297 = vld [vmem:[%s7 + $0x1bc] sm:$0xf]
  %v2298 = vld [vmem:[%s7 + $0x1c0] sm:$0xff]
  %v2299 = vld [vmem:[%s7 + $0x1c8] sm:$0xff]
  %v2300 = vld [vmem:[%s7 + $0x1d0] sm:$0xff]
  %v2301 = vld [vmem:[%s7 + $0x1d8] sm:$0xf]
  %v2302 = vld [vmem:[%s7 + $0x1dc] sm:$0xff]
  %v2303 = vld [vmem:[%s7 + $0x1e4] sm:$0xff]
  %v2304 = vld [vmem:[%s7 + $0x1ec] sm:$0xff]
  %v2305 = vld [vmem:[%s7 + $0x1f4] sm:$0xf]
  %v2306 = vld [vmem:[%s7 + $0x1f8] sm:$0xff]
  %v2307 = vld [vmem:[%s7 + $0x200] sm:$0xff]
  %v2308 = vld [vmem:[%s7 + $0x208] sm:$0xff]
  %v2309 = vld [vmem:[%s7 + $0x210] sm:$0xf]
  %v2310 = vld [vmem:[%s7 + $0x214] sm:$0xff]
  %v2311 = vld [vmem:[%s7 + $0x21c] sm:$0xff]
  %v2312 = vld [vmem:[%s7 + $0x224] sm:$0xff]
  %v2313 = vld [vmem:[%s7 + $0x22c] sm:$0xf]
  %v2314 = vld [vmem:[%s7 + $0x230] sm:$0xff]
  %v2315 = vld [vmem:[%s7 + $0x238] sm:$0xff]
  %v2316 = vld [vmem:[%s7 + $0x240] sm:$0xff]
  %v2317 = vld [vmem:[%s7 + $0x248] sm:$0xf]
  %v2318 = vld [vmem:[%s7 + $0x24c] sm:$0xff]
  %v2319 = vld [vmem:[%s7 + $0x254] sm:$0xff]
  %v2320 = vld [vmem:[%s7 + $0x25c] sm:$0xff]
  %v2321 = vld [vmem:[%s7 + $0x264] sm:$0xf]
  %v2322 = vld [vmem:[%s7 + $0x268] sm:$0xff]
  %v2323 = vld [vmem:[%s7 + $0x270] sm:$0xff]
  %v2324 = vld [vmem:[%s7 + $0x278] sm:$0xff]
  %v2325 = vld [vmem:[%s7 + $0x280] sm:$0xf]
  %v2326 = vld [vmem:[%s7 + $0x284] sm:$0xff]
  %v2327 = vld [vmem:[%s7 + $0x28c] sm:$0xff]
  %v2328 = vld [vmem:[%s7 + $0x294] sm:$0xff]
  %v2329 = vld [vmem:[%s7 + $0x29c] sm:$0xf]
  %v2330 = vld [vmem:[%s7 + $0x2a0] sm:$0xff]
  %v2331 = vld [vmem:[%s7 + $0x2a8] sm:$0xff]
  %v2332 = vld [vmem:[%s7 + $0x2b0] sm:$0xff]
  %v2333 = vld [vmem:[%s7 + $0x2b8] sm:$0xf]
  %v2334 = vld [vmem:[%s7 + $0x2bc] sm:$0xff]
  %v2335 = vld [vmem:[%s7 + $0x2c4] sm:$0xff]
  %v2336 = vld [vmem:[%s7 + $0x2cc] sm:$0xff]
  %v2337 = vld [vmem:[%s7 + $0x2d4] sm:$0xf]
  %v2338 = vld [vmem:[%s7 + $0x2d8] sm:$0xff]
  %v2339 = vld [vmem:[%s7 + $0x2e0] sm:$0xff]
  %v2340 = vld [vmem:[%s7 + $0x2e8] sm:$0xff]
  %v2341 = vld [vmem:[%s7 + $0x2f0] sm:$0xf]
  %v2342 = vld [vmem:[%s7 + $0x2f4] sm:$0xff]
  %v2343 = vld [vmem:[%s7 + $0x2fc] sm:$0xff]
  %v2344 = vld [vmem:[%s7 + $0x304] sm:$0xff]
  %v2345 = vld [vmem:[%s7 + $0x30c] sm:$0xf]
  %v2346 = vld [vmem:[%s7 + $0x310] sm:$0xff]
  %v2347 = vld [vmem:[%s7 + $0x318] sm:$0xff]
  %v2348 = vld [vmem:[%s7 + $0x320] sm:$0xff]
  %v2349 = vld [vmem:[%s7 + $0x328] sm:$0xf]
  %v2350 = vld [vmem:[%s7 + $0x32c] sm:$0xff]
  %v2351 = vld [vmem:[%s7 + $0x334] sm:$0xff]
  %v2352 = vld [vmem:[%s7 + $0x33c] sm:$0xff]
  %v2353 = vld [vmem:[%s7 + $0x344] sm:$0xf]
  %v2354 = vld [vmem:[%s7 + $0x348] sm:$0xff]
  %v2355 = vld [vmem:[%s7 + $0x350] sm:$0xff]
  %v2356 = vld [vmem:[%s7 + $0x358] sm:$0xff]
  %v2357 = vld [vmem:[%s7 + $0x360] sm:$0xf]
  %v2358 = vld [vmem:[%s7 + $0x364] sm:$0xff]
  %v2359 = vld [vmem:[%s7 + $0x36c] sm:$0xff]
  %v2360 = vld [vmem:[%s7 + $0x374] sm:$0xff]
  %v2361 = vld [vmem:[%s7 + $0x37c] sm:$0xf]
  %v2362 = vld [vmem:[%s7 + $0x380] sm:$0xff]
  %v2363 = vld [vmem:[%s7 + $0x388] sm:$0xff]
  %v2364 = vld [vmem:[%s7 + $0x390] sm:$0xff]
  %v2365 = vld [vmem:[%s7 + $0x398] sm:$0xf]
  %v2366 = vld [vmem:[%s7 + $0x39c] sm:$0xff]
  %v2367 = vld [vmem:[%s7 + $0x3a4] sm:$0xff]
  %v2368 = vld [vmem:[%s7 + $0x3ac] sm:$0xff]
  %v2369 = vld [vmem:[%s7 + $0x3b4] sm:$0xf]
  %v2370 = vld [vmem:[%s7 + $0x3b8] sm:$0xff]
  %v2371 = vld [vmem:[%s7 + $0x3c0] sm:$0xff]
  %v2372 = vld [vmem:[%s7 + $0x3c8] sm:$0xff]
  %v2373 = vld [vmem:[%s7 + $0x3d0] sm:$0xf]
  %v2374 = vld [vmem:[%s7 + $0x3d4] sm:$0xff]
  %v2375 = vld [vmem:[%s7 + $0x3dc] sm:$0xff]
  %v2376 = vld [vmem:[%s7 + $0x3e4] sm:$0xff]
  %v2377 = vld [vmem:[%s7 + $0x3ec] sm:$0xf]
  %v2378 = vld [vmem:[%s7 + $0x3f0] sm:$0xff]
  %v2379 = vld [vmem:[%s7 + $0x3f8] sm:$0xff]
  %v2380 = vld [vmem:[%s7 + $0x400] sm:$0xff]
  %v2381 = vld [vmem:[%s7 + $0x408] sm:$0xf]
  %v2382 = vld [vmem:[%s7 + $0x40c] sm:$0xff]
  %v2383 = vld [vmem:[%s7 + $0x414] sm:$0xff]
  %v2384 = vld [vmem:[%s7 + $0x41c] sm:$0xff]
  %v2385 = vld [vmem:[%s7 + $0x424] sm:$0xf]
  %v2386 = vld [vmem:[%s7 + $0x428] sm:$0xff]
  %v2387 = vld [vmem:[%s7 + $0x430] sm:$0xff]
  %v2388 = vld [vmem:[%s7 + $0x438] sm:$0xff]
  %v2389 = vld [vmem:[%s7 + $0x440] sm:$0xf]
  %v2390 = vld [vmem:[%s7 + $0x444] sm:$0xff]
  %v2391 = vld [vmem:[%s7 + $0x44c] sm:$0xff]
  %v2392 = vld [vmem:[%s7 + $0x454] sm:$0xff]
  %v2393 = vld [vmem:[%s7 + $0x45c] sm:$0xf]
  %v2394 = vld [vmem:[%s7 + $0x460] sm:$0xff]
  %v2395 = vld [vmem:[%s7 + $0x468] sm:$0xff]
  %v2396 = vld [vmem:[%s7 + $0x470] sm:$0xff]
  %v2397 = vld [vmem:[%s7 + $0x478] sm:$0xf]
  %v2398 = vld [vmem:[%s7 + $0x47c] sm:$0xff]
  %v2399 = vld [vmem:[%s7 + $0x484] sm:$0xff]
  %v2400 = vld [vmem:[%s7 + $0x48c] sm:$0xff]
  %v2401 = vld [vmem:[%s7 + $0x494] sm:$0xf]
  %v2402 = vld [vmem:[%s7 + $0x498] sm:$0xff]
  %v2403 = vld [vmem:[%s7 + $0x4a0] sm:$0xff]
  %v2404 = vld [vmem:[%s7 + $0x4a8] sm:$0xff]
  %v2405 = vld [vmem:[%s7 + $0x4b0] sm:$0xf]
  %v2406 = vld [vmem:[%s7 + $0x4b4] sm:$0xff]
  %v2407 = vld [vmem:[%s7 + $0x4bc] sm:$0xff]
  %v2408 = vld [vmem:[%s7 + $0x4c4] sm:$0xff]
  %v2409 = vld [vmem:[%s7 + $0x4cc] sm:$0xf]
  %v2410 = vld [vmem:[%s7 + $0x4d0] sm:$0xff]
  %v2411 = vld [vmem:[%s7 + $0x4d8] sm:$0xff]
  %v2412 = vld [vmem:[%s7 + $0x4e0] sm:$0xff]
  %v2413 = vld [vmem:[%s7 + $0x4e8] sm:$0xf]
  %v2414 = vld [vmem:[%s7 + $0x4ec] sm:$0xff]
  %v2415 = vld [vmem:[%s7 + $0x4f4] sm:$0xff]
  %v2416 = vld [vmem:[%s7 + $0x4fc] sm:$0xff]
  %v2417 = vld [vmem:[%s7 + $0x504] sm:$0xf]
  %v2418 = vld [vmem:[%s7 + $0x508] sm:$0xff]
  %v2419 = vld [vmem:[%s7 + $0x510] sm:$0xff]
  %v2420 = vld [vmem:[%s7 + $0x518] sm:$0xff]
  %v2421 = vld [vmem:[%s7 + $0x520] sm:$0xf]
  %v2422 = vld [vmem:[%s7 + $0x524] sm:$0xff]
  %v2423 = vld [vmem:[%s7 + $0x52c] sm:$0xff]
  %v2424 = vld [vmem:[%s7 + $0x534] sm:$0xff]
  %v2425 = vld [vmem:[%s7 + $0x53c] sm:$0xf]
  %v2426 = vld [vmem:[%s7 + $0x540] sm:$0xff]
  %v2427 = vld [vmem:[%s7 + $0x548] sm:$0xff]
  %v2428 = vld [vmem:[%s7 + $0x550] sm:$0xff]
  %v2429 = vld [vmem:[%s7 + $0x558] sm:$0xf]
  %v2430 = vld [vmem:[%s7 + $0x55c] sm:$0xff]
  %v2431 = vld [vmem:[%s7 + $0x564] sm:$0xff]
  %v2432 = vld [vmem:[%s7 + $0x56c] sm:$0xff]
  %v2433 = vld [vmem:[%s7 + $0x574] sm:$0xf]
  %v2434 = vld [vmem:[%s7 + $0x578] sm:$0xff]
  %v2435 = vld [vmem:[%s7 + $0x580] sm:$0xff]
  %v2436 = vld [vmem:[%s7 + $0x588] sm:$0xff]
  %v2437 = vld [vmem:[%s7 + $0x590] sm:$0xf]
  %v2438 = vld [vmem:[%s7 + $0x594] sm:$0xff]
  %v2439 = vld [vmem:[%s7 + $0x59c] sm:$0xff]
  %v2440 = vld [vmem:[%s7 + $0x5a4] sm:$0xff]
  %v2441 = vld [vmem:[%s7 + $0x5ac] sm:$0xf]
  %v2442 = vld [vmem:[%s7 + $0x5b0] sm:$0xff]
  %v2443 = vld [vmem:[%s7 + $0x5b8] sm:$0xff]
  %v2444 = vld [vmem:[%s7 + $0x5c0] sm:$0xff]
  %v2445 = vld [vmem:[%s7 + $0x5c8] sm:$0xf]
  %v2446 = vld [vmem:[%s7 + $0x5cc] sm:$0xff]
  %v2447 = vld [vmem:[%s7 + $0x5d4] sm:$0xff]
  %v2448 = vld [vmem:[%s7 + $0x5dc] sm:$0xff]
  %v2449 = vld [vmem:[%s7 + $0x5e4] sm:$0xf]
  %v2450 = vld [vmem:[%s7 + $0x5e8] sm:$0xff]
  %v2451 = vld [vmem:[%s7 + $0x5f0] sm:$0xff]
  %v2452 = vld [vmem:[%s7 + $0x5f8] sm:$0xff]
  %v2453 = vld [vmem:[%s7 + $0x600] sm:$0xf]
  %v2454 = vld [vmem:[%s7 + $0x604] sm:$0xff]
  %v2455 = vld [vmem:[%s7 + $0x60c] sm:$0xff]
  %v2456 = vld [vmem:[%s7 + $0x614] sm:$0xff]
  %v2457 = vld [vmem:[%s7 + $0x61c] sm:$0xf]
  %v2458 = vld [vmem:[%s7 + $0x620] sm:$0xff]
  %v2459 = vld [vmem:[%s7 + $0x628] sm:$0xff]
  %v2460 = vld [vmem:[%s7 + $0x630] sm:$0xff]
  %v2461 = vld [vmem:[%s7 + $0x638] sm:$0xf]
  %v2462 = vld [vmem:[%s7 + $0x63c] sm:$0xff]
  %v2463 = vld [vmem:[%s7 + $0x644] sm:$0xff]
  %v2464 = vld [vmem:[%s7 + $0x64c] sm:$0xff]
  %v2465 = vld [vmem:[%s7 + $0x654] sm:$0xf]
  %v2466 = vld [vmem:[%s7 + $0x658] sm:$0xff]
  %v2467 = vld [vmem:[%s7 + $0x660] sm:$0xff]
  %v2468 = vld [vmem:[%s7 + $0x668] sm:$0xff]
  %v2469 = vld [vmem:[%s7 + $0x670] sm:$0xf]
  %v2470 = vld [vmem:[%s7 + $0x674] sm:$0xff]
  %v2471 = vld [vmem:[%s7 + $0x67c] sm:$0xff]
  %v2472 = vld [vmem:[%s7 + $0x684] sm:$0xff]
  %v2473 = vld [vmem:[%s7 + $0x68c] sm:$0xf]
  %v2474 = vld [vmem:[%s7 + $0x690] sm:$0xff]
  %v2475 = vld [vmem:[%s7 + $0x698] sm:$0xff]
  %v2476 = vld [vmem:[%s7 + $0x6a0] sm:$0xff]
  %v2477 = vld [vmem:[%s7 + $0x6a8] sm:$0xf]
  %v2478 = vld [vmem:[%s7 + $0x6ac] sm:$0xff]
  %v2479 = vld [vmem:[%s7 + $0x6b4] sm:$0xff]
  %v2480 = vld [vmem:[%s7 + $0x6bc] sm:$0xff]
  %v2481 = vld [vmem:[%s7 + $0x6c4] sm:$0xf]
  %v2482 = vld [vmem:[%s7 + $0x6c8] sm:$0xff]
  %v2483 = vld [vmem:[%s7 + $0x6d0] sm:$0xff]
  %v2484 = vld [vmem:[%s7 + $0x6d8] sm:$0xff]
  %v2485 = vld [vmem:[%s7 + $0x6e0] sm:$0xf]
  %v2486 = vld [vmem:[%s7 + $0x6e4] sm:$0xff]
  %v2487 = vld [vmem:[%s7 + $0x6ec] sm:$0xff]
  %v2488 = vld [vmem:[%s7 + $0x6f4] sm:$0xff]
  %v2489 = vld [vmem:[%s7 + $0x6fc] sm:$0xf]
  %v2490 = vld [vmem:[%s8] sm:$0x7f]
  %v2492 = vlaneseq
  %v2493 = vshrl.u32 %v2492, 7
  %v2494 = vsub.s32 0, %v2493
  %v2495 = vrot.slane %v2490, %v2494
  %v2496 = vlaneseq
  %v2497 = vshrl.u32 %v2496, 7
  %v2498 = vsub.s32 1, %v2497
  %v2499 = vrot.slane %v2490, %v2498
  %v2500 = vlaneseq
  %v2501 = vshrl.u32 %v2500, 7
  %v2502 = vsub.s32 2, %v2501
  %v2503 = vrot.slane %v2490, %v2502
  %v2504 = vlaneseq
  %v2505 = vshrl.u32 %v2504, 7
  %v2506 = vsub.s32 3, %v2505
  %v2507 = vrot.slane %v2490, %v2506
  %v2508 = vlaneseq
  %v2509 = vshrl.u32 %v2508, 7
  %v2510 = vsub.s32 4, %v2509
  %v2511 = vrot.slane %v2490, %v2510
  %v2512 = vlaneseq
  %v2513 = vshrl.u32 %v2512, 7
  %v2514 = vsub.s32 5, %v2513
  %v2515 = vrot.slane %v2490, %v2514
  %v2516 = vlaneseq
  %v2517 = vshrl.u32 %v2516, 7
  %v2518 = vsub.s32 6, %v2517
  %v2519 = vrot.slane %v2490, %v2518
  %v2783 = vunpack.c.l.b16 %v2234
  %v2784 = vunpack.c.h.b16 %v2234
  %v2785 = vunpack.c.l.b16 %v2235
  %v2786 = vunpack.c.h.b16 %v2235
  %v2787 = vunpack.c.l.b16 %v2236
  %v2788 = vunpack.c.h.b16 %v2236
  %v2789 = vunpack.c.l.b16 %v2237
  %v2790 = vunpack.c.l.b16 %v2238
  %v2791 = vunpack.c.h.b16 %v2238
  %v2792 = vunpack.c.l.b16 %v2239
  %v2793 = vunpack.c.h.b16 %v2239
  %v2794 = vunpack.c.l.b16 %v2240
  %v2795 = vunpack.c.h.b16 %v2240
  %v2796 = vunpack.c.l.b16 %v2241
  %v2797 = vunpack.c.l.b16 %v2242
  %v2798 = vunpack.c.h.b16 %v2242
  %v2799 = vunpack.c.l.b16 %v2243
  %v2800 = vunpack.c.h.b16 %v2243
  %v2801 = vunpack.c.l.b16 %v2244
  %v2802 = vunpack.c.h.b16 %v2244
  %v2803 = vunpack.c.l.b16 %v2245
  %v2804 = vunpack.c.l.b16 %v2246
  %v2805 = vunpack.c.h.b16 %v2246
  %v2806 = vunpack.c.l.b16 %v2247
  %v2807 = vunpack.c.h.b16 %v2247
  %v2808 = vunpack.c.l.b16 %v2248
  %v2809 = vunpack.c.h.b16 %v2248
  %v2810 = vunpack.c.l.b16 %v2249
  %v2811 = vunpack.c.l.b16 %v2250
  %v2812 = vunpack.c.h.b16 %v2250
  %v2813 = vunpack.c.l.b16 %v2251
  %v2814 = vunpack.c.h.b16 %v2251
  %v2815 = vunpack.c.l.b16 %v2252
  %v2816 = vunpack.c.h.b16 %v2252
  %v2817 = vunpack.c.l.b16 %v2253
  %v2818 = vunpack.c.l.b16 %v2254
  %v2819 = vunpack.c.h.b16 %v2254
  %v2820 = vunpack.c.l.b16 %v2255
  %v2821 = vunpack.c.h.b16 %v2255
  %v2822 = vunpack.c.l.b16 %v2256
  %v2823 = vunpack.c.h.b16 %v2256
  %v2824 = vunpack.c.l.b16 %v2257
  %v2825 = vunpack.c.l.b16 %v2258
  %v2826 = vunpack.c.h.b16 %v2258
  %v2827 = vunpack.c.l.b16 %v2259
  %v2828 = vunpack.c.h.b16 %v2259
  %v2829 = vunpack.c.l.b16 %v2260
  %v2830 = vunpack.c.h.b16 %v2260
  %v2831 = vunpack.c.l.b16 %v2261
  %v2832 = vunpack.c.l.b16 %v2262
  %v2833 = vunpack.c.h.b16 %v2262
  %v2834 = vunpack.c.l.b16 %v2263
  %v2835 = vunpack.c.h.b16 %v2263
  %v2836 = vunpack.c.l.b16 %v2264
  %v2837 = vunpack.c.h.b16 %v2264
  %v2838 = vunpack.c.l.b16 %v2265
  %v2839 = vunpack.c.l.b16 %v2266
  %v2840 = vunpack.c.h.b16 %v2266
  %v2841 = vunpack.c.l.b16 %v2267
  %v2842 = vunpack.c.h.b16 %v2267
  %v2843 = vunpack.c.l.b16 %v2268
  %v2844 = vunpack.c.h.b16 %v2268
  %v2845 = vunpack.c.l.b16 %v2269
  %v2846 = vunpack.c.l.b16 %v2270
  %v2847 = vunpack.c.h.b16 %v2270
  %v2848 = vunpack.c.l.b16 %v2271
  %v2849 = vunpack.c.h.b16 %v2271
  %v2850 = vunpack.c.l.b16 %v2272
  %v2851 = vunpack.c.h.b16 %v2272
  %v2852 = vunpack.c.l.b16 %v2273
  %v2853 = vunpack.c.l.b16 %v2274
  %v2854 = vunpack.c.h.b16 %v2274
  %v2855 = vunpack.c.l.b16 %v2275
  %v2856 = vunpack.c.h.b16 %v2275
  %v2857 = vunpack.c.l.b16 %v2276
  %v2858 = vunpack.c.h.b16 %v2276
  %v2859 = vunpack.c.l.b16 %v2277
  %v2860 = vunpack.c.l.b16 %v2278
  %v2861 = vunpack.c.h.b16 %v2278
  %v2862 = vunpack.c.l.b16 %v2279
  %v2863 = vunpack.c.h.b16 %v2279
  %v2864 = vunpack.c.l.b16 %v2280
  %v2865 = vunpack.c.h.b16 %v2280
  %v2866 = vunpack.c.l.b16 %v2281
  %v2867 = vunpack.c.l.b16 %v2282
  %v2868 = vunpack.c.h.b16 %v2282
  %v2869 = vunpack.c.l.b16 %v2283
  %v2870 = vunpack.c.h.b16 %v2283
  %v2871 = vunpack.c.l.b16 %v2284
  %v2872 = vunpack.c.h.b16 %v2284
  %v2873 = vunpack.c.l.b16 %v2285
  %v2874 = vunpack.c.l.b16 %v2286
  %v2875 = vunpack.c.h.b16 %v2286
  %v2876 = vunpack.c.l.b16 %v2287
  %v2877 = vunpack.c.h.b16 %v2287
  %v2878 = vunpack.c.l.b16 %v2288
  %v2879 = vunpack.c.h.b16 %v2288
  %v2880 = vunpack.c.l.b16 %v2289
  %v2881 = vunpack.c.l.b16 %v2290
  %v2882 = vunpack.c.h.b16 %v2290
  %v2883 = vunpack.c.l.b16 %v2291
  %v2884 = vunpack.c.h.b16 %v2291
  %v2885 = vunpack.c.l.b16 %v2292
  %v2886 = vunpack.c.h.b16 %v2292
  %v2887 = vunpack.c.l.b16 %v2293
  %v2888 = vunpack.c.l.b16 %v2294
  %v2889 = vunpack.c.h.b16 %v2294
  %v2890 = vunpack.c.l.b16 %v2295
  %v2891 = vunpack.c.h.b16 %v2295
  %v2892 = vunpack.c.l.b16 %v2296
  %v2893 = vunpack.c.h.b16 %v2296
  %v2894 = vunpack.c.l.b16 %v2297
  %v2895 = vunpack.c.l.b16 %v2298
  %v2896 = vunpack.c.h.b16 %v2298
  %v2897 = vunpack.c.l.b16 %v2299
  %v2898 = vunpack.c.h.b16 %v2299
  %v2899 = vunpack.c.l.b16 %v2300
  %v2900 = vunpack.c.h.b16 %v2300
  %v2901 = vunpack.c.l.b16 %v2301
  %v2902 = vunpack.c.l.b16 %v2302
  %v2903 = vunpack.c.h.b16 %v2302
  %v2904 = vunpack.c.l.b16 %v2303
  %v2905 = vunpack.c.h.b16 %v2303
  %v2906 = vunpack.c.l.b16 %v2304
  %v2907 = vunpack.c.h.b16 %v2304
  %v2908 = vunpack.c.l.b16 %v2305
  %v2909 = vunpack.c.l.b16 %v2306
  %v2910 = vunpack.c.h.b16 %v2306
  %v2911 = vunpack.c.l.b16 %v2307
  %v2912 = vunpack.c.h.b16 %v2307
  %v2913 = vunpack.c.l.b16 %v2308
  %v2914 = vunpack.c.h.b16 %v2308
  %v2915 = vunpack.c.l.b16 %v2309
  %v2916 = vunpack.c.l.b16 %v2310
  %v2917 = vunpack.c.h.b16 %v2310
  %v2918 = vunpack.c.l.b16 %v2311
  %v2919 = vunpack.c.h.b16 %v2311
  %v2920 = vunpack.c.l.b16 %v2312
  %v2921 = vunpack.c.h.b16 %v2312
  %v2922 = vunpack.c.l.b16 %v2313
  %v2923 = vunpack.c.l.b16 %v2314
  %v2924 = vunpack.c.h.b16 %v2314
  %v2925 = vunpack.c.l.b16 %v2315
  %v2926 = vunpack.c.h.b16 %v2315
  %v2927 = vunpack.c.l.b16 %v2316
  %v2928 = vunpack.c.h.b16 %v2316
  %v2929 = vunpack.c.l.b16 %v2317
  %v2930 = vunpack.c.l.b16 %v2318
  %v2931 = vunpack.c.h.b16 %v2318
  %v2932 = vunpack.c.l.b16 %v2319
  %v2933 = vunpack.c.h.b16 %v2319
  %v2934 = vunpack.c.l.b16 %v2320
  %v2935 = vunpack.c.h.b16 %v2320
  %v2936 = vunpack.c.l.b16 %v2321
  %v2937 = vunpack.c.l.b16 %v2322
  %v2938 = vunpack.c.h.b16 %v2322
  %v2939 = vunpack.c.l.b16 %v2323
  %v2940 = vunpack.c.h.b16 %v2323
  %v2941 = vunpack.c.l.b16 %v2324
  %v2942 = vunpack.c.h.b16 %v2324
  %v2943 = vunpack.c.l.b16 %v2325
  %v2944 = vunpack.c.l.b16 %v2326
  %v2945 = vunpack.c.h.b16 %v2326
  %v2946 = vunpack.c.l.b16 %v2327
  %v2947 = vunpack.c.h.b16 %v2327
  %v2948 = vunpack.c.l.b16 %v2328
  %v2949 = vunpack.c.h.b16 %v2328
  %v2950 = vunpack.c.l.b16 %v2329
  %v2951 = vunpack.c.l.b16 %v2330
  %v2952 = vunpack.c.h.b16 %v2330
  %v2953 = vunpack.c.l.b16 %v2331
  %v2954 = vunpack.c.h.b16 %v2331
  %v2955 = vunpack.c.l.b16 %v2332
  %v2956 = vunpack.c.h.b16 %v2332
  %v2957 = vunpack.c.l.b16 %v2333
  %v2958 = vunpack.c.l.b16 %v2334
  %v2959 = vunpack.c.h.b16 %v2334
  %v2960 = vunpack.c.l.b16 %v2335
  %v2961 = vunpack.c.h.b16 %v2335
  %v2962 = vunpack.c.l.b16 %v2336
  %v2963 = vunpack.c.h.b16 %v2336
  %v2964 = vunpack.c.l.b16 %v2337
  %v2965 = vunpack.c.l.b16 %v2338
  %v2966 = vunpack.c.h.b16 %v2338
  %v2967 = vunpack.c.l.b16 %v2339
  %v2968 = vunpack.c.h.b16 %v2339
  %v2969 = vunpack.c.l.b16 %v2340
  %v2970 = vunpack.c.h.b16 %v2340
  %v2971 = vunpack.c.l.b16 %v2341
  %v2972 = vunpack.c.l.b16 %v2342
  %v2973 = vunpack.c.h.b16 %v2342
  %v2974 = vunpack.c.l.b16 %v2343
  %v2975 = vunpack.c.h.b16 %v2343
  %v2976 = vunpack.c.l.b16 %v2344
  %v2977 = vunpack.c.h.b16 %v2344
  %v2978 = vunpack.c.l.b16 %v2345
  %v2979 = vunpack.c.l.b16 %v2346
  %v2980 = vunpack.c.h.b16 %v2346
  %v2981 = vunpack.c.l.b16 %v2347
  %v2982 = vunpack.c.h.b16 %v2347
  %v2983 = vunpack.c.l.b16 %v2348
  %v2984 = vunpack.c.h.b16 %v2348
  %v2985 = vunpack.c.l.b16 %v2349
  %v2986 = vunpack.c.l.b16 %v2350
  %v2987 = vunpack.c.h.b16 %v2350
  %v2988 = vunpack.c.l.b16 %v2351
  %v2989 = vunpack.c.h.b16 %v2351
  %v2990 = vunpack.c.l.b16 %v2352
  %v2991 = vunpack.c.h.b16 %v2352
  %v2992 = vunpack.c.l.b16 %v2353
  %v2993 = vunpack.c.l.b16 %v2354
  %v2994 = vunpack.c.h.b16 %v2354
  %v2995 = vunpack.c.l.b16 %v2355
  %v2996 = vunpack.c.h.b16 %v2355
  %v2997 = vunpack.c.l.b16 %v2356
  %v2998 = vunpack.c.h.b16 %v2356
  %v2999 = vunpack.c.l.b16 %v2357
  %v3000 = vunpack.c.l.b16 %v2358
  %v3001 = vunpack.c.h.b16 %v2358
  %v3002 = vunpack.c.l.b16 %v2359
  %v3003 = vunpack.c.h.b16 %v2359
  %v3004 = vunpack.c.l.b16 %v2360
  %v3005 = vunpack.c.h.b16 %v2360
  %v3006 = vunpack.c.l.b16 %v2361
  %v3007 = vunpack.c.l.b16 %v2362
  %v3008 = vunpack.c.h.b16 %v2362
  %v3009 = vunpack.c.l.b16 %v2363
  %v3010 = vunpack.c.h.b16 %v2363
  %v3011 = vunpack.c.l.b16 %v2364
  %v3012 = vunpack.c.h.b16 %v2364
  %v3013 = vunpack.c.l.b16 %v2365
  %v3014 = vunpack.c.l.b16 %v2366
  %v3015 = vunpack.c.h.b16 %v2366
  %v3016 = vunpack.c.l.b16 %v2367
  %v3017 = vunpack.c.h.b16 %v2367
  %v3018 = vunpack.c.l.b16 %v2368
  %v3019 = vunpack.c.h.b16 %v2368
  %v3020 = vunpack.c.l.b16 %v2369
  %v3021 = vunpack.c.l.b16 %v2370
  %v3022 = vunpack.c.h.b16 %v2370
  %v3023 = vunpack.c.l.b16 %v2371
  %v3024 = vunpack.c.h.b16 %v2371
  %v3025 = vunpack.c.l.b16 %v2372
  %v3026 = vunpack.c.h.b16 %v2372
  %v3027 = vunpack.c.l.b16 %v2373
  %v3028 = vunpack.c.l.b16 %v2374
  %v3029 = vunpack.c.h.b16 %v2374
  %v3030 = vunpack.c.l.b16 %v2375
  %v3031 = vunpack.c.h.b16 %v2375
  %v3032 = vunpack.c.l.b16 %v2376
  %v3033 = vunpack.c.h.b16 %v2376
  %v3034 = vunpack.c.l.b16 %v2377
  %v3035 = vunpack.c.l.b16 %v2378
  %v3036 = vunpack.c.h.b16 %v2378
  %v3037 = vunpack.c.l.b16 %v2379
  %v3038 = vunpack.c.h.b16 %v2379
  %v3039 = vunpack.c.l.b16 %v2380
  %v3040 = vunpack.c.h.b16 %v2380
  %v3041 = vunpack.c.l.b16 %v2381
  %v3042 = vunpack.c.l.b16 %v2382
  %v3043 = vunpack.c.h.b16 %v2382
  %v3044 = vunpack.c.l.b16 %v2383
  %v3045 = vunpack.c.h.b16 %v2383
  %v3046 = vunpack.c.l.b16 %v2384
  %v3047 = vunpack.c.h.b16 %v2384
  %v3048 = vunpack.c.l.b16 %v2385
  %v3049 = vunpack.c.l.b16 %v2386
  %v3050 = vunpack.c.h.b16 %v2386
  %v3051 = vunpack.c.l.b16 %v2387
  %v3052 = vunpack.c.h.b16 %v2387
  %v3053 = vunpack.c.l.b16 %v2388
  %v3054 = vunpack.c.h.b16 %v2388
  %v3055 = vunpack.c.l.b16 %v2389
  %v3056 = vunpack.c.l.b16 %v2390
  %v3057 = vunpack.c.h.b16 %v2390
  %v3058 = vunpack.c.l.b16 %v2391
  %v3059 = vunpack.c.h.b16 %v2391
  %v3060 = vunpack.c.l.b16 %v2392
  %v3061 = vunpack.c.h.b16 %v2392
  %v3062 = vunpack.c.l.b16 %v2393
  %v3063 = vunpack.c.l.b16 %v2394
  %v3064 = vunpack.c.h.b16 %v2394
  %v3065 = vunpack.c.l.b16 %v2395
  %v3066 = vunpack.c.h.b16 %v2395
  %v3067 = vunpack.c.l.b16 %v2396
  %v3068 = vunpack.c.h.b16 %v2396
  %v3069 = vunpack.c.l.b16 %v2397
  %v3070 = vunpack.c.l.b16 %v2398
  %v3071 = vunpack.c.h.b16 %v2398
  %v3072 = vunpack.c.l.b16 %v2399
  %v3073 = vunpack.c.h.b16 %v2399
  %v3074 = vunpack.c.l.b16 %v2400
  %v3075 = vunpack.c.h.b16 %v2400
  %v3076 = vunpack.c.l.b16 %v2401
  %v3077 = vunpack.c.l.b16 %v2402
  %v3078 = vunpack.c.h.b16 %v2402
  %v3079 = vunpack.c.l.b16 %v2403
  %v3080 = vunpack.c.h.b16 %v2403
  %v3081 = vunpack.c.l.b16 %v2404
  %v3082 = vunpack.c.h.b16 %v2404
  %v3083 = vunpack.c.l.b16 %v2405
  %v3084 = vunpack.c.l.b16 %v2406
  %v3085 = vunpack.c.h.b16 %v2406
  %v3086 = vunpack.c.l.b16 %v2407
  %v3087 = vunpack.c.h.b16 %v2407
  %v3088 = vunpack.c.l.b16 %v2408
  %v3089 = vunpack.c.h.b16 %v2408
  %v3090 = vunpack.c.l.b16 %v2409
  %v3091 = vunpack.c.l.b16 %v2410
  %v3092 = vunpack.c.h.b16 %v2410
  %v3093 = vunpack.c.l.b16 %v2411
  %v3094 = vunpack.c.h.b16 %v2411
  %v3095 = vunpack.c.l.b16 %v2412
  %v3096 = vunpack.c.h.b16 %v2412
  %v3097 = vunpack.c.l.b16 %v2413
  %v3098 = vunpack.c.l.b16 %v2414
  %v3099 = vunpack.c.h.b16 %v2414
  %v3100 = vunpack.c.l.b16 %v2415
  %v3101 = vunpack.c.h.b16 %v2415
  %v3102 = vunpack.c.l.b16 %v2416
  %v3103 = vunpack.c.h.b16 %v2416
  %v3104 = vunpack.c.l.b16 %v2417
  %v3105 = vunpack.c.l.b16 %v2418
  %v3106 = vunpack.c.h.b16 %v2418
  %v3107 = vunpack.c.l.b16 %v2419
  %v3108 = vunpack.c.h.b16 %v2419
  %v3109 = vunpack.c.l.b16 %v2420
  %v3110 = vunpack.c.h.b16 %v2420
  %v3111 = vunpack.c.l.b16 %v2421
  %v3112 = vunpack.c.l.b16 %v2422
  %v3113 = vunpack.c.h.b16 %v2422
  %v3114 = vunpack.c.l.b16 %v2423
  %v3115 = vunpack.c.h.b16 %v2423
  %v3116 = vunpack.c.l.b16 %v2424
  %v3117 = vunpack.c.h.b16 %v2424
  %v3118 = vunpack.c.l.b16 %v2425
  %v3119 = vunpack.c.l.b16 %v2426
  %v3120 = vunpack.c.h.b16 %v2426
  %v3121 = vunpack.c.l.b16 %v2427
  %v3122 = vunpack.c.h.b16 %v2427
  %v3123 = vunpack.c.l.b16 %v2428
  %v3124 = vunpack.c.h.b16 %v2428
  %v3125 = vunpack.c.l.b16 %v2429
  %v3126 = vunpack.c.l.b16 %v2430
  %v3127 = vunpack.c.h.b16 %v2430
  %v3128 = vunpack.c.l.b16 %v2431
  %v3129 = vunpack.c.h.b16 %v2431
  %v3130 = vunpack.c.l.b16 %v2432
  %v3131 = vunpack.c.h.b16 %v2432
  %v3132 = vunpack.c.l.b16 %v2433
  %v3133 = vunpack.c.l.b16 %v2434
  %v3134 = vunpack.c.h.b16 %v2434
  %v3135 = vunpack.c.l.b16 %v2435
  %v3136 = vunpack.c.h.b16 %v2435
  %v3137 = vunpack.c.l.b16 %v2436
  %v3138 = vunpack.c.h.b16 %v2436
  %v3139 = vunpack.c.l.b16 %v2437
  %v3140 = vunpack.c.l.b16 %v2438
  %v3141 = vunpack.c.h.b16 %v2438
  %v3142 = vunpack.c.l.b16 %v2439
  %v3143 = vunpack.c.h.b16 %v2439
  %v3144 = vunpack.c.l.b16 %v2440
  %v3145 = vunpack.c.h.b16 %v2440
  %v3146 = vunpack.c.l.b16 %v2441
  %v3147 = vunpack.c.l.b16 %v2442
  %v3148 = vunpack.c.h.b16 %v2442
  %v3149 = vunpack.c.l.b16 %v2443
  %v3150 = vunpack.c.h.b16 %v2443
  %v3151 = vunpack.c.l.b16 %v2444
  %v3152 = vunpack.c.h.b16 %v2444
  %v3153 = vunpack.c.l.b16 %v2445
  %v3154 = vunpack.c.l.b16 %v2446
  %v3155 = vunpack.c.h.b16 %v2446
  %v3156 = vunpack.c.l.b16 %v2447
  %v3157 = vunpack.c.h.b16 %v2447
  %v3158 = vunpack.c.l.b16 %v2448
  %v3159 = vunpack.c.h.b16 %v2448
  %v3160 = vunpack.c.l.b16 %v2449
  %v3161 = vunpack.c.l.b16 %v2450
  %v3162 = vunpack.c.h.b16 %v2450
  %v3163 = vunpack.c.l.b16 %v2451
  %v3164 = vunpack.c.h.b16 %v2451
  %v3165 = vunpack.c.l.b16 %v2452
  %v3166 = vunpack.c.h.b16 %v2452
  %v3167 = vunpack.c.l.b16 %v2453
  %v3168 = vunpack.c.l.b16 %v2454
  %v3169 = vunpack.c.h.b16 %v2454
  %v3170 = vunpack.c.l.b16 %v2455
  %v3171 = vunpack.c.h.b16 %v2455
  %v3172 = vunpack.c.l.b16 %v2456
  %v3173 = vunpack.c.h.b16 %v2456
  %v3174 = vunpack.c.l.b16 %v2457
  %v3175 = vunpack.c.l.b16 %v2458
  %v3176 = vunpack.c.h.b16 %v2458
  %v3177 = vunpack.c.l.b16 %v2459
  %v3178 = vunpack.c.h.b16 %v2459
  %v3179 = vunpack.c.l.b16 %v2460
  %v3180 = vunpack.c.h.b16 %v2460
  %v3181 = vunpack.c.l.b16 %v2461
  %v3182 = vunpack.c.l.b16 %v2462
  %v3183 = vunpack.c.h.b16 %v2462
  %v3184 = vunpack.c.l.b16 %v2463
  %v3185 = vunpack.c.h.b16 %v2463
  %v3186 = vunpack.c.l.b16 %v2464
  %v3187 = vunpack.c.h.b16 %v2464
  %v3188 = vunpack.c.l.b16 %v2465
  %v3189 = vunpack.c.l.b16 %v2466
  %v3190 = vunpack.c.h.b16 %v2466
  %v3191 = vunpack.c.l.b16 %v2467
  %v3192 = vunpack.c.h.b16 %v2467
  %v3193 = vunpack.c.l.b16 %v2468
  %v3194 = vunpack.c.h.b16 %v2468
  %v3195 = vunpack.c.l.b16 %v2469
  %v3196 = vunpack.c.l.b16 %v2470
  %v3197 = vunpack.c.h.b16 %v2470
  %v3198 = vunpack.c.l.b16 %v2471
  %v3199 = vunpack.c.h.b16 %v2471
  %v3200 = vunpack.c.l.b16 %v2472
  %v3201 = vunpack.c.h.b16 %v2472
  %v3202 = vunpack.c.l.b16 %v2473
  %v3203 = vunpack.c.l.b16 %v2474
  %v3204 = vunpack.c.h.b16 %v2474
  %v3205 = vunpack.c.l.b16 %v2475
  %v3206 = vunpack.c.h.b16 %v2475
  %v3207 = vunpack.c.l.b16 %v2476
  %v3208 = vunpack.c.h.b16 %v2476
  %v3209 = vunpack.c.l.b16 %v2477
  %v3210 = vunpack.c.l.b16 %v2478
  %v3211 = vunpack.c.h.b16 %v2478
  %v3212 = vunpack.c.l.b16 %v2479
  %v3213 = vunpack.c.h.b16 %v2479
  %v3214 = vunpack.c.l.b16 %v2480
  %v3215 = vunpack.c.h.b16 %v2480
  %v3216 = vunpack.c.l.b16 %v2481
  %v3217 = vunpack.c.l.b16 %v2482
  %v3218 = vunpack.c.h.b16 %v2482
  %v3219 = vunpack.c.l.b16 %v2483
  %v3220 = vunpack.c.h.b16 %v2483
  %v3221 = vunpack.c.l.b16 %v2484
  %v3222 = vunpack.c.h.b16 %v2484
  %v3223 = vunpack.c.l.b16 %v2485
  %v3224 = vunpack.c.l.b16 %v2486
  %v3225 = vunpack.c.h.b16 %v2486
  %v3226 = vunpack.c.l.b16 %v2487
  %v3227 = vunpack.c.h.b16 %v2487
  %v3228 = vunpack.c.l.b16 %v2488
  %v3229 = vunpack.c.h.b16 %v2488
  %v3230 = vunpack.c.l.b16 %v2489
  %v3231 = vpack.c.b16 %v2790, %v2783
  %v3232 = vpack.c.b16 %v2791, %v2784
  %v3233 = vpack.c.b16 %v2792, %v2785
  %v3234 = vpack.c.b16 %v2793, %v2786
  %v3235 = vpack.c.b16 %v2794, %v2787
  %v3236 = vpack.c.b16 %v2795, %v2788
  %v3237 = vpack.c.b16 %v2796, %v2789
  %v3238 = vpack.c.b16 %v2804, %v2797
  %v3239 = vpack.c.b16 %v2805, %v2798
  %v3240 = vpack.c.b16 %v2806, %v2799
  %v3241 = vpack.c.b16 %v2807, %v2800
  %v3242 = vpack.c.b16 %v2808, %v2801
  %v3243 = vpack.c.b16 %v2809, %v2802
  %v3244 = vpack.c.b16 %v2810, %v2803
  %v3245 = vpack.c.b16 %v2818, %v2811
  %v3246 = vpack.c.b16 %v2819, %v2812
  %v3247 = vpack.c.b16 %v2820, %v2813
  %v3248 = vpack.c.b16 %v2821, %v2814
  %v3249 = vpack.c.b16 %v2822, %v2815
  %v3250 = vpack.c.b16 %v2823, %v2816
  %v3251 = vpack.c.b16 %v2824, %v2817
  %v3252 = vpack.c.b16 %v2832, %v2825
  %v3253 = vpack.c.b16 %v2833, %v2826
  %v3254 = vpack.c.b16 %v2834, %v2827
  %v3255 = vpack.c.b16 %v2835, %v2828
  %v3256 = vpack.c.b16 %v2836, %v2829
  %v3257 = vpack.c.b16 %v2837, %v2830
  %v3258 = vpack.c.b16 %v2838, %v2831
  %v3259 = vpack.c.b16 %v2846, %v2839
  %v3260 = vpack.c.b16 %v2847, %v2840
  %v3261 = vpack.c.b16 %v2848, %v2841
  %v3262 = vpack.c.b16 %v2849, %v2842
  %v3263 = vpack.c.b16 %v2850, %v2843
  %v3264 = vpack.c.b16 %v2851, %v2844
  %v3265 = vpack.c.b16 %v2852, %v2845
  %v3266 = vpack.c.b16 %v2860, %v2853
  %v3267 = vpack.c.b16 %v2861, %v2854
  %v3268 = vpack.c.b16 %v2862, %v2855
  %v3269 = vpack.c.b16 %v2863, %v2856
  %v3270 = vpack.c.b16 %v2864, %v2857
  %v3271 = vpack.c.b16 %v2865, %v2858
  %v3272 = vpack.c.b16 %v2866, %v2859
  %v3273 = vpack.c.b16 %v2874, %v2867
  %v3274 = vpack.c.b16 %v2875, %v2868
  %v3275 = vpack.c.b16 %v2876, %v2869
  %v3276 = vpack.c.b16 %v2877, %v2870
  %v3277 = vpack.c.b16 %v2878, %v2871
  %v3278 = vpack.c.b16 %v2879, %v2872
  %v3279 = vpack.c.b16 %v2880, %v2873
  %v3280 = vpack.c.b16 %v2888, %v2881
  %v3281 = vpack.c.b16 %v2889, %v2882
  %v3282 = vpack.c.b16 %v2890, %v2883
  %v3283 = vpack.c.b16 %v2891, %v2884
  %v3284 = vpack.c.b16 %v2892, %v2885
  %v3285 = vpack.c.b16 %v2893, %v2886
  %v3286 = vpack.c.b16 %v2894, %v2887
  %v3287 = vpack.c.b16 %v2902, %v2895
  %v3288 = vpack.c.b16 %v2903, %v2896
  %v3289 = vpack.c.b16 %v2904, %v2897
  %v3290 = vpack.c.b16 %v2905, %v2898
  %v3291 = vpack.c.b16 %v2906, %v2899
  %v3292 = vpack.c.b16 %v2907, %v2900
  %v3293 = vpack.c.b16 %v2908, %v2901
  %v3294 = vpack.c.b16 %v2916, %v2909
  %v3295 = vpack.c.b16 %v2917, %v2910
  %v3296 = vpack.c.b16 %v2918, %v2911
  %v3297 = vpack.c.b16 %v2919, %v2912
  %v3298 = vpack.c.b16 %v2920, %v2913
  %v3299 = vpack.c.b16 %v2921, %v2914
  %v3300 = vpack.c.b16 %v2922, %v2915
  %v3301 = vpack.c.b16 %v2930, %v2923
  %v3302 = vpack.c.b16 %v2931, %v2924
  %v3303 = vpack.c.b16 %v2932, %v2925
  %v3304 = vpack.c.b16 %v2933, %v2926
  %v3305 = vpack.c.b16 %v2934, %v2927
  %v3306 = vpack.c.b16 %v2935, %v2928
  %v3307 = vpack.c.b16 %v2936, %v2929
  %v3308 = vpack.c.b16 %v2944, %v2937
  %v3309 = vpack.c.b16 %v2945, %v2938
  %v3310 = vpack.c.b16 %v2946, %v2939
  %v3311 = vpack.c.b16 %v2947, %v2940
  %v3312 = vpack.c.b16 %v2948, %v2941
  %v3313 = vpack.c.b16 %v2949, %v2942
  %v3314 = vpack.c.b16 %v2950, %v2943
  %v3315 = vpack.c.b16 %v2958, %v2951
  %v3316 = vpack.c.b16 %v2959, %v2952
  %v3317 = vpack.c.b16 %v2960, %v2953
  %v3318 = vpack.c.b16 %v2961, %v2954
  %v3319 = vpack.c.b16 %v2962, %v2955
  %v3320 = vpack.c.b16 %v2963, %v2956
  %v3321 = vpack.c.b16 %v2964, %v2957
  %v3322 = vpack.c.b16 %v2972, %v2965
  %v3323 = vpack.c.b16 %v2973, %v2966
  %v3324 = vpack.c.b16 %v2974, %v2967
  %v3325 = vpack.c.b16 %v2975, %v2968
  %v3326 = vpack.c.b16 %v2976, %v2969
  %v3327 = vpack.c.b16 %v2977, %v2970
  %v3328 = vpack.c.b16 %v2978, %v2971
  %v3329 = vpack.c.b16 %v2986, %v2979
  %v3330 = vpack.c.b16 %v2987, %v2980
  %v3331 = vpack.c.b16 %v2988, %v2981
  %v3332 = vpack.c.b16 %v2989, %v2982
  %v3333 = vpack.c.b16 %v2990, %v2983
  %v3334 = vpack.c.b16 %v2991, %v2984
  %v3335 = vpack.c.b16 %v2992, %v2985
  %v3336 = vpack.c.b16 %v3000, %v2993
  %v3337 = vpack.c.b16 %v3001, %v2994
  %v3338 = vpack.c.b16 %v3002, %v2995
  %v3339 = vpack.c.b16 %v3003, %v2996
  %v3340 = vpack.c.b16 %v3004, %v2997
  %v3341 = vpack.c.b16 %v3005, %v2998
  %v3342 = vpack.c.b16 %v3006, %v2999
  %v3343 = vpack.c.b16 %v3014, %v3007
  %v3344 = vpack.c.b16 %v3015, %v3008
  %v3345 = vpack.c.b16 %v3016, %v3009
  %v3346 = vpack.c.b16 %v3017, %v3010
  %v3347 = vpack.c.b16 %v3018, %v3011
  %v3348 = vpack.c.b16 %v3019, %v3012
  %v3349 = vpack.c.b16 %v3020, %v3013
  %v3350 = vpack.c.b16 %v3028, %v3021
  %v3351 = vpack.c.b16 %v3029, %v3022
  %v3352 = vpack.c.b16 %v3030, %v3023
  %v3353 = vpack.c.b16 %v3031, %v3024
  %v3354 = vpack.c.b16 %v3032, %v3025
  %v3355 = vpack.c.b16 %v3033, %v3026
  %v3356 = vpack.c.b16 %v3034, %v3027
  %v3357 = vpack.c.b16 %v3042, %v3035
  %v3358 = vpack.c.b16 %v3043, %v3036
  %v3359 = vpack.c.b16 %v3044, %v3037
  %v3360 = vpack.c.b16 %v3045, %v3038
  %v3361 = vpack.c.b16 %v3046, %v3039
  %v3362 = vpack.c.b16 %v3047, %v3040
  %v3363 = vpack.c.b16 %v3048, %v3041
  %v3364 = vpack.c.b16 %v3056, %v3049
  %v3365 = vpack.c.b16 %v3057, %v3050
  %v3366 = vpack.c.b16 %v3058, %v3051
  %v3367 = vpack.c.b16 %v3059, %v3052
  %v3368 = vpack.c.b16 %v3060, %v3053
  %v3369 = vpack.c.b16 %v3061, %v3054
  %v3370 = vpack.c.b16 %v3062, %v3055
  %v3371 = vpack.c.b16 %v3070, %v3063
  %v3372 = vpack.c.b16 %v3071, %v3064
  %v3373 = vpack.c.b16 %v3072, %v3065
  %v3374 = vpack.c.b16 %v3073, %v3066
  %v3375 = vpack.c.b16 %v3074, %v3067
  %v3376 = vpack.c.b16 %v3075, %v3068
  %v3377 = vpack.c.b16 %v3076, %v3069
  %v3378 = vpack.c.b16 %v3084, %v3077
  %v3379 = vpack.c.b16 %v3085, %v3078
  %v3380 = vpack.c.b16 %v3086, %v3079
  %v3381 = vpack.c.b16 %v3087, %v3080
  %v3382 = vpack.c.b16 %v3088, %v3081
  %v3383 = vpack.c.b16 %v3089, %v3082
  %v3384 = vpack.c.b16 %v3090, %v3083
  %v3385 = vpack.c.b16 %v3098, %v3091
  %v3386 = vpack.c.b16 %v3099, %v3092
  %v3387 = vpack.c.b16 %v3100, %v3093
  %v3388 = vpack.c.b16 %v3101, %v3094
  %v3389 = vpack.c.b16 %v3102, %v3095
  %v3390 = vpack.c.b16 %v3103, %v3096
  %v3391 = vpack.c.b16 %v3104, %v3097
  %v3392 = vpack.c.b16 %v3112, %v3105
  %v3393 = vpack.c.b16 %v3113, %v3106
  %v3394 = vpack.c.b16 %v3114, %v3107
  %v3395 = vpack.c.b16 %v3115, %v3108
  %v3396 = vpack.c.b16 %v3116, %v3109
  %v3397 = vpack.c.b16 %v3117, %v3110
  %v3398 = vpack.c.b16 %v3118, %v3111
  %v3399 = vpack.c.b16 %v3126, %v3119
  %v3400 = vpack.c.b16 %v3127, %v3120
  %v3401 = vpack.c.b16 %v3128, %v3121
  %v3402 = vpack.c.b16 %v3129, %v3122
  %v3403 = vpack.c.b16 %v3130, %v3123
  %v3404 = vpack.c.b16 %v3131, %v3124
  %v3405 = vpack.c.b16 %v3132, %v3125
  %v3406 = vpack.c.b16 %v3140, %v3133
  %v3407 = vpack.c.b16 %v3141, %v3134
  %v3408 = vpack.c.b16 %v3142, %v3135
  %v3409 = vpack.c.b16 %v3143, %v3136
  %v3410 = vpack.c.b16 %v3144, %v3137
  %v3411 = vpack.c.b16 %v3145, %v3138
  %v3412 = vpack.c.b16 %v3146, %v3139
  %v3413 = vpack.c.b16 %v3154, %v3147
  %v3414 = vpack.c.b16 %v3155, %v3148
  %v3415 = vpack.c.b16 %v3156, %v3149
  %v3416 = vpack.c.b16 %v3157, %v3150
  %v3417 = vpack.c.b16 %v3158, %v3151
  %v3418 = vpack.c.b16 %v3159, %v3152
  %v3419 = vpack.c.b16 %v3160, %v3153
  %v3420 = vpack.c.b16 %v3168, %v3161
  %v3421 = vpack.c.b16 %v3169, %v3162
  %v3422 = vpack.c.b16 %v3170, %v3163
  %v3423 = vpack.c.b16 %v3171, %v3164
  %v3424 = vpack.c.b16 %v3172, %v3165
  %v3425 = vpack.c.b16 %v3173, %v3166
  %v3426 = vpack.c.b16 %v3174, %v3167
  %v3427 = vpack.c.b16 %v3182, %v3175
  %v3428 = vpack.c.b16 %v3183, %v3176
  %v3429 = vpack.c.b16 %v3184, %v3177
  %v3430 = vpack.c.b16 %v3185, %v3178
  %v3431 = vpack.c.b16 %v3186, %v3179
  %v3432 = vpack.c.b16 %v3187, %v3180
  %v3433 = vpack.c.b16 %v3188, %v3181
  %v3434 = vpack.c.b16 %v3196, %v3189
  %v3435 = vpack.c.b16 %v3197, %v3190
  %v3436 = vpack.c.b16 %v3198, %v3191
  %v3437 = vpack.c.b16 %v3199, %v3192
  %v3438 = vpack.c.b16 %v3200, %v3193
  %v3439 = vpack.c.b16 %v3201, %v3194
  %v3440 = vpack.c.b16 %v3202, %v3195
  %v3441 = vpack.c.b16 %v3210, %v3203
  %v3442 = vpack.c.b16 %v3211, %v3204
  %v3443 = vpack.c.b16 %v3212, %v3205
  %v3444 = vpack.c.b16 %v3213, %v3206
  %v3445 = vpack.c.b16 %v3214, %v3207
  %v3446 = vpack.c.b16 %v3215, %v3208
  %v3447 = vpack.c.b16 %v3216, %v3209
  %v3448 = vpack.c.b16 %v3224, %v3217
  %v3449 = vpack.c.b16 %v3225, %v3218
  %v3450 = vpack.c.b16 %v3226, %v3219
  %v3451 = vpack.c.b16 %v3227, %v3220
  %v3452 = vpack.c.b16 %v3228, %v3221
  %v3453 = vpack.c.b16 %v3229, %v3222
  %v3454 = vpack.c.b16 %v3230, %v3223
  %3679 = vmatprep.subr.bf16.mxu0 %v3232
  %3680 = vmatpush1.bf16.msra.mxu0 %v3231
  %3681 = vmatprep.subr.bf16.mxu0 %v3239
  %3682 = vmatpush1.bf16.msra.mxu0 %v3238
  %3683 = vmatprep.subr.bf16.mxu0 %v3246
  %3684 = vmatpush1.bf16.msra.mxu0 %v3245
  %3685 = vmatprep.subr.bf16.mxu0 %v3253
  %3686 = vmatpush1.bf16.msra.mxu0 %v3252
  %3687 = vmatprep.subr.bf16.mxu0 %v3260
  %3688 = vmatpush1.bf16.msra.mxu0 %v3259
  %3689 = vmatprep.subr.bf16.mxu0 %v3267
  %3690 = vmatpush1.bf16.msra.mxu0 %v3266
  %3691 = vmatprep.subr.bf16.mxu0 %v3274
  %3692 = vmatpush1.bf16.msra.mxu0 %v3273
  %3693 = vmatprep.subr.bf16.mxu0 %v3281
  %3694 = vmatpush1.bf16.msra.mxu0 %v3280
  %3695 = vmatprep.subr.bf16.mxu0 %v3288
  %3696 = vmatpush1.bf16.msra.mxu0 %v3287
  %3697 = vmatprep.subr.bf16.mxu0 %v3295
  %3698 = vmatpush1.bf16.msra.mxu0 %v3294
  %3699 = vmatprep.subr.bf16.mxu0 %v3302
  %3700 = vmatpush1.bf16.msra.mxu0 %v3301
  %3701 = vmatprep.subr.bf16.mxu0 %v3309
  %3702 = vmatpush1.bf16.msra.mxu0 %v3308
  %3703 = vmatprep.subr.bf16.mxu0 %v3316
  %3704 = vmatpush1.bf16.msra.mxu0 %v3315
  %3705 = vmatprep.subr.bf16.mxu0 %v3323
  %3706 = vmatpush1.bf16.msra.mxu0 %v3322
  %3707 = vmatprep.subr.bf16.mxu0 %v3330
  %3708 = vmatpush1.bf16.msra.mxu0 %v3329
  %3709 = vmatprep.subr.bf16.mxu0 %v3337
  %3710 = vmatpush1.bf16.msra.mxu0 %v3336
  %3711 = vmatprep.mubr.bf16.mxu0 %v2231
  %3712 = vmatmul.mubr.bf16.gmra.mrb[0].mxu0 %v2230
  %v3713 = vpop.f32.mrb[0].mxu0
  %v3714 = vadd.f32 %v2495, %v3713
  %v3715 = vpop.f32.mrb[0].mxu0
  %v3716 = vadd.f32 %v2499, %v3715
  %v3717 = vpop.f32.mrb[0].mxu0
  %v3718 = vpop.f32.mrb[0].mxu0
  %3719 = vdwg.mxu0
  %3720 = vmatprep.subr.bf16.mxu0 %v3344
  %3721 = vmatpush1.bf16.msra.mxu0 %v3343
  %3722 = vmatprep.subr.bf16.mxu0 %v3351
  %3723 = vmatpush1.bf16.msra.mxu0 %v3350
  %3724 = vmatprep.subr.bf16.mxu0 %v3358
  %3725 = vmatpush1.bf16.msra.mxu0 %v3357
  %3726 = vmatprep.subr.bf16.mxu0 %v3365
  %3727 = vmatpush1.bf16.msra.mxu0 %v3364
  %3728 = vmatprep.subr.bf16.mxu0 %v3372
  %3729 = vmatpush1.bf16.msra.mxu0 %v3371
  %3730 = vmatprep.subr.bf16.mxu0 %v3379
  %3731 = vmatpush1.bf16.msra.mxu0 %v3378
  %3732 = vmatprep.subr.bf16.mxu0 %v3386
  %3733 = vmatpush1.bf16.msra.mxu0 %v3385
  %3734 = vmatprep.subr.bf16.mxu0 %v3393
  %3735 = vmatpush1.bf16.msra.mxu0 %v3392
  %3736 = vmatprep.subr.bf16.mxu0 %v3400
  %3737 = vmatpush1.bf16.msra.mxu0 %v3399
  %3738 = vmatprep.subr.bf16.mxu0 %v3407
  %3739 = vmatpush1.bf16.msra.mxu0 %v3406
  %3740 = vmatprep.subr.bf16.mxu0 %v3414
  %3741 = vmatpush1.bf16.msra.mxu0 %v3413
  %3742 = vmatprep.subr.bf16.mxu0 %v3421
  %3743 = vmatpush1.bf16.msra.mxu0 %v3420
  %3744 = vmatprep.subr.bf16.mxu0 %v3428
  %3745 = vmatpush1.bf16.msra.mxu0 %v3427
  %3746 = vmatprep.subr.bf16.mxu0 %v3435
  %3747 = vmatpush1.bf16.msra.mxu0 %v3434
  %3748 = vmatprep.subr.bf16.mxu0 %v3442
  %3749 = vmatpush1.bf16.msra.mxu0 %v3441
  %3750 = vmatprep.subr.bf16.mxu0 %v3449
  %3751 = vmatpush1.bf16.msra.mxu0 %v3448
  %3752 = vmatprep.mubr.bf16.mxu0 %v2233
  %3753 = vmatmul.mubr.bf16.gmra.mrb[0].mxu0 %v2232
  %v3754 = vpop.f32.mrb[0].mxu0
  %v3755 = vadd.f32 %v3714, %v3754
  %v3756 = vpop.f32.mrb[0].mxu0
  %v3757 = vadd.f32 %v3716, %v3756
  %v3758 = vpop.f32.mrb[0].mxu0
  %v3759 = vpop.f32.mrb[0].mxu0
  %3760 = vdwg.mxu0
  %3761 = vmatprep.subr.bf16.mxu0 %v3234
  %3762 = vmatpush1.bf16.msra.mxu0 %v3233
  %3763 = vmatprep.subr.bf16.mxu0 %v3241
  %3764 = vmatpush1.bf16.msra.mxu0 %v3240
  %3765 = vmatprep.subr.bf16.mxu0 %v3248
  %3766 = vmatpush1.bf16.msra.mxu0 %v3247
  %3767 = vmatprep.subr.bf16.mxu0 %v3255
  %3768 = vmatpush1.bf16.msra.mxu0 %v3254
  %3769 = vmatprep.subr.bf16.mxu0 %v3262
  %3770 = vmatpush1.bf16.msra.mxu0 %v3261
  %3771 = vmatprep.subr.bf16.mxu0 %v3269
  %3772 = vmatpush1.bf16.msra.mxu0 %v3268
  %3773 = vmatprep.subr.bf16.mxu0 %v3276
  %3774 = vmatpush1.bf16.msra.mxu0 %v3275
  %3775 = vmatprep.subr.bf16.mxu0 %v3283
  %3776 = vmatpush1.bf16.msra.mxu0 %v3282
  %3777 = vmatprep.subr.bf16.mxu0 %v3290
  %3778 = vmatpush1.bf16.msra.mxu0 %v3289
  %3779 = vmatprep.subr.bf16.mxu0 %v3297
  %3780 = vmatpush1.bf16.msra.mxu0 %v3296
  %3781 = vmatprep.subr.bf16.mxu0 %v3304
  %3782 = vmatpush1.bf16.msra.mxu0 %v3303
  %3783 = vmatprep.subr.bf16.mxu0 %v3311
  %3784 = vmatpush1.bf16.msra.mxu0 %v3310
  %3785 = vmatprep.subr.bf16.mxu0 %v3318
  %3786 = vmatpush1.bf16.msra.mxu0 %v3317
  %3787 = vmatprep.subr.bf16.mxu0 %v3325
  %3788 = vmatpush1.bf16.msra.mxu0 %v3324
  %3789 = vmatprep.subr.bf16.mxu0 %v3332
  %3790 = vmatpush1.bf16.msra.mxu0 %v3331
  %3791 = vmatprep.subr.bf16.mxu0 %v3339
  %3792 = vmatpush1.bf16.msra.mxu0 %v3338
  %3793 = vmatprep.mubr.bf16.mxu0 %v2231
  %3794 = vmatmul.mubr.bf16.gmra.mrb[0].mxu0 %v2230
  %v3795 = vpop.f32.mrb[0].mxu0
  %v3796 = vadd.f32 %v2503, %v3795
  %v3797 = vpop.f32.mrb[0].mxu0
  %v3798 = vadd.f32 %v2507, %v3797
  %v3799 = vpop.f32.mrb[0].mxu0
  %v3800 = vpop.f32.mrb[0].mxu0
  %3801 = vdwg.mxu0
  %3802 = vmatprep.subr.bf16.mxu0 %v3346
  %3803 = vmatpush1.bf16.msra.mxu0 %v3345
  %3804 = vmatprep.subr.bf16.mxu0 %v3353
  %3805 = vmatpush1.bf16.msra.mxu0 %v3352
  %3806 = vmatprep.subr.bf16.mxu0 %v3360
  %3807 = vmatpush1.bf16.msra.mxu0 %v3359
  %3808 = vmatprep.subr.bf16.mxu0 %v3367
  %3809 = vmatpush1.bf16.msra.mxu0 %v3366
  %3810 = vmatprep.subr.bf16.mxu0 %v3374
  %3811 = vmatpush1.bf16.msra.mxu0 %v3373
  %3812 = vmatprep.subr.bf16.mxu0 %v3381
  %3813 = vmatpush1.bf16.msra.mxu0 %v3380
  %3814 = vmatprep.subr.bf16.mxu0 %v3388
  %3815 = vmatpush1.bf16.msra.mxu0 %v3387
  %3816 = vmatprep.subr.bf16.mxu0 %v3395
  %3817 = vmatpush1.bf16.msra.mxu0 %v3394
  %3818 = vmatprep.subr.bf16.mxu0 %v3402
  %3819 = vmatpush1.bf16.msra.mxu0 %v3401
  %3820 = vmatprep.subr.bf16.mxu0 %v3409
  %3821 = vmatpush1.bf16.msra.mxu0 %v3408
  %3822 = vmatprep.subr.bf16.mxu0 %v3416
  %3823 = vmatpush1.bf16.msra.mxu0 %v3415
  %3824 = vmatprep.subr.bf16.mxu0 %v3423
  %3825 = vmatpush1.bf16.msra.mxu0 %v3422
  %3826 = vmatprep.subr.bf16.mxu0 %v3430
  %3827 = vmatpush1.bf16.msra.mxu0 %v3429
  %3828 = vmatprep.subr.bf16.mxu0 %v3437
  %3829 = vmatpush1.bf16.msra.mxu0 %v3436
  %3830 = vmatprep.subr.bf16.mxu0 %v3444
  %3831 = vmatpush1.bf16.msra.mxu0 %v3443
  %3832 = vmatprep.subr.bf16.mxu0 %v3451
  %3833 = vmatpush1.bf16.msra.mxu0 %v3450
  %3834 = vmatprep.mubr.bf16.mxu0 %v2233
  %3835 = vmatmul.mubr.bf16.gmra.mrb[0].mxu0 %v2232
  %v3836 = vpop.f32.mrb[0].mxu0
  %v3837 = vadd.f32 %v3796, %v3836
  %v3838 = vpop.f32.mrb[0].mxu0
  %v3839 = vadd.f32 %v3798, %v3838
  %v3840 = vpop.f32.mrb[0].mxu0
  %v3841 = vpop.f32.mrb[0].mxu0
  %3842 = vdwg.mxu0
  %3843 = vmatprep.subr.bf16.mxu0 %v3236
  %3844 = vmatpush1.bf16.msra.mxu0 %v3235
  %3845 = vmatprep.subr.bf16.mxu0 %v3243
  %3846 = vmatpush1.bf16.msra.mxu0 %v3242
  %3847 = vmatprep.subr.bf16.mxu0 %v3250
  %3848 = vmatpush1.bf16.msra.mxu0 %v3249
  %3849 = vmatprep.subr.bf16.mxu0 %v3257
  %3850 = vmatpush1.bf16.msra.mxu0 %v3256
  %3851 = vmatprep.subr.bf16.mxu0 %v3264
  %3852 = vmatpush1.bf16.msra.mxu0 %v3263
  %3853 = vmatprep.subr.bf16.mxu0 %v3271
  %3854 = vmatpush1.bf16.msra.mxu0 %v3270
  %3855 = vmatprep.subr.bf16.mxu0 %v3278
  %3856 = vmatpush1.bf16.msra.mxu0 %v3277
  %3857 = vmatprep.subr.bf16.mxu0 %v3285
  %3858 = vmatpush1.bf16.msra.mxu0 %v3284
  %3859 = vmatprep.subr.bf16.mxu0 %v3292
  %3860 = vmatpush1.bf16.msra.mxu0 %v3291
  %3861 = vmatprep.subr.bf16.mxu0 %v3299
  %3862 = vmatpush1.bf16.msra.mxu0 %v3298
  %3863 = vmatprep.subr.bf16.mxu0 %v3306
  %3864 = vmatpush1.bf16.msra.mxu0 %v3305
  %3865 = vmatprep.subr.bf16.mxu0 %v3313
  %3866 = vmatpush1.bf16.msra.mxu0 %v3312
  %3867 = vmatprep.subr.bf16.mxu0 %v3320
  %3868 = vmatpush1.bf16.msra.mxu0 %v3319
  %3869 = vmatprep.subr.bf16.mxu0 %v3327
  %3870 = vmatpush1.bf16.msra.mxu0 %v3326
  %3871 = vmatprep.subr.bf16.mxu0 %v3334
  %3872 = vmatpush1.bf16.msra.mxu0 %v3333
  %3873 = vmatprep.subr.bf16.mxu0 %v3341
  %3874 = vmatpush1.bf16.msra.mxu0 %v3340
  %3875 = vmatprep.mubr.bf16.mxu0 %v2231
  %3876 = vmatmul.mubr.bf16.gmra.mrb[0].mxu0 %v2230
  %v3877 = vpop.f32.mrb[0].mxu0
  %v3878 = vadd.f32 %v2511, %v3877
  %v3879 = vpop.f32.mrb[0].mxu0
  %v3880 = vadd.f32 %v2515, %v3879
  %v3881 = vpop.f32.mrb[0].mxu0
  %v3882 = vpop.f32.mrb[0].mxu0
  %3883 = vdwg.mxu0
  %3884 = vmatprep.subr.bf16.mxu0 %v3348
  %3885 = vmatpush1.bf16.msra.mxu0 %v3347
  %3886 = vmatprep.subr.bf16.mxu0 %v3355
  %3887 = vmatpush1.bf16.msra.mxu0 %v3354
  %3888 = vmatprep.subr.bf16.mxu0 %v3362
  %3889 = vmatpush1.bf16.msra.mxu0 %v3361
  %3890 = vmatprep.subr.bf16.mxu0 %v3369
  %3891 = vmatpush1.bf16.msra.mxu0 %v3368
  %3892 = vmatprep.subr.bf16.mxu0 %v3376
  %3893 = vmatpush1.bf16.msra.mxu0 %v3375
  %3894 = vmatprep.subr.bf16.mxu0 %v3383
  %3895 = vmatpush1.bf16.msra.mxu0 %v3382
  %3896 = vmatprep.subr.bf16.mxu0 %v3390
  %3897 = vmatpush1.bf16.msra.mxu0 %v3389
  %3898 = vmatprep.subr.bf16.mxu0 %v3397
  %3899 = vmatpush1.bf16.msra.mxu0 %v3396
  %3900 = vmatprep.subr.bf16.mxu0 %v3404
  %3901 = vmatpush1.bf16.msra.mxu0 %v3403
  %3902 = vmatprep.subr.bf16.mxu0 %v3411
  %3903 = vmatpush1.bf16.msra.mxu0 %v3410
  %3904 = vmatprep.subr.bf16.mxu0 %v3418
  %3905 = vmatpush1.bf16.msra.mxu0 %v3417
  %3906 = vmatprep.subr.bf16.mxu0 %v3425
  %3907 = vmatpush1.bf16.msra.mxu0 %v3424
  %3908 = vmatprep.subr.bf16.mxu0 %v3432
  %3909 = vmatpush1.bf16.msra.mxu0 %v3431
  %3910 = vmatprep.subr.bf16.mxu0 %v3439
  %3911 = vmatpush1.bf16.msra.mxu0 %v3438
  %3912 = vmatprep.subr.bf16.mxu0 %v3446
  %3913 = vmatpush1.bf16.msra.mxu0 %v3445
  %3914 = vmatprep.subr.bf16.mxu0 %v3453
  %3915 = vmatpush1.bf16.msra.mxu0 %v3452
  %3916 = vmatprep.mubr.bf16.mxu0 %v2233
  %3917 = vmatmul.mubr.bf16.gmra.mrb[0].mxu0 %v2232
  %v3918 = vpop.f32.mrb[0].mxu0
  %v3919 = vadd.f32 %v3878, %v3918
  %v3920 = vpop.f32.mrb[0].mxu0
  %v3921 = vadd.f32 %v3880, %v3920
  %v3922 = vpop.f32.mrb[0].mxu0
  %v3923 = vpop.f32.mrb[0].mxu0
  %3924 = vdwg.mxu0
  %3925 = vmatprep.subr.bf16.mxu0 0
  %3926 = vmatpush1.bf16.msra.mxu0 %v3237
  %3927 = vmatprep.subr.bf16.mxu0 0
  %3928 = vmatpush1.bf16.msra.mxu0 %v3244
  %3929 = vmatprep.subr.bf16.mxu0 0
  %3930 = vmatpush1.bf16.msra.mxu0 %v3251
  %3931 = vmatprep.subr.bf16.mxu0 0
  %3932 = vmatpush1.bf16.msra.mxu0 %v3258
  %3933 = vmatprep.subr.bf16.mxu0 0
  %3934 = vmatpush1.bf16.msra.mxu0 %v3265
  %3935 = vmatprep.subr.bf16.mxu0 0
  %3936 = vmatpush1.bf16.msra.mxu0 %v3272
  %3937 = vmatprep.subr.bf16.mxu0 0
  %3938 = vmatpush1.bf16.msra.mxu0 %v3279
  %3939 = vmatprep.subr.bf16.mxu0 0
  %3940 = vmatpush1.bf16.msra.mxu0 %v3286
  %3941 = vmatprep.subr.bf16.mxu0 0
  %3942 = vmatpush1.bf16.msra.mxu0 %v3293
  %3943 = vmatprep.subr.bf16.mxu0 0
  %3944 = vmatpush1.bf16.msra.mxu0 %v3300
  %3945 = vmatprep.subr.bf16.mxu0 0
  %3946 = vmatpush1.bf16.msra.mxu0 %v3307
  %3947 = vmatprep.subr.bf16.mxu0 0
  %3948 = vmatpush1.bf16.msra.mxu0 %v3314
  %3949 = vmatprep.subr.bf16.mxu0 0
  %3950 = vmatpush1.bf16.msra.mxu0 %v3321
  %3951 = vmatprep.subr.bf16.mxu0 0
  %3952 = vmatpush1.bf16.msra.mxu0 %v3328
  %3953 = vmatprep.subr.bf16.mxu0 0
  %3954 = vmatpush1.bf16.msra.mxu0 %v3335
  %3955 = vmatprep.subr.bf16.mxu0 0
  %3956 = vmatpush1.bf16.msra.mxu0 %v3342
  %3957 = vmatprep.mubr.bf16.mxu0 %v2231
  %3958 = vmatmul.mubr.bf16.gmra.mrb[0].mxu0 %v2230
  %v3959 = vpop.f32.mrb[0].mxu0
  %v3960 = vadd.f32 %v2519, %v3959
  %v3961 = vpop.f32.mrb[0].mxu0
  %v3962 = vpop.f32.mrb[0].mxu0
  %v3963 = vpop.f32.mrb[0].mxu0
  %3964 = vdwg.mxu0
  %3965 = vmatprep.subr.bf16.mxu0 0
  %3966 = vmatpush1.bf16.msra.mxu0 %v3349
  %3967 = vmatprep.subr.bf16.mxu0 0
  %3968 = vmatpush1.bf16.msra.mxu0 %v3356
  %3969 = vmatprep.subr.bf16.mxu0 0
  %3970 = vmatpush1.bf16.msra.mxu0 %v3363
  %3971 = vmatprep.subr.bf16.mxu0 0
  %3972 = vmatpush1.bf16.msra.mxu0 %v3370
  %3973 = vmatprep.subr.bf16.mxu0 0
  %3974 = vmatpush1.bf16.msra.mxu0 %v3377
  %3975 = vmatprep.subr.bf16.mxu0 0
  %3976 = vmatpush1.bf16.msra.mxu0 %v3384
  %3977 = vmatprep.subr.bf16.mxu0 0
  %3978 = vmatpush1.bf16.msra.mxu0 %v3391
  %3979 = vmatprep.subr.bf16.mxu0 0
  %3980 = vmatpush1.bf16.msra.mxu0 %v3398
  %3981 = vmatprep.subr.bf16.mxu0 0
  %3982 = vmatpush1.bf16.msra.mxu0 %v3405
  %3983 = vmatprep.subr.bf16.mxu0 0
  %3984 = vmatpush1.bf16.msra.mxu0 %v3412
  %3985 = vmatprep.subr.bf16.mxu0 0
  %3986 = vmatpush1.bf16.msra.mxu0 %v3419
  %3987 = vmatprep.subr.bf16.mxu0 0
  %3988 = vmatpush1.bf16.msra.mxu0 %v3426
  %3989 = vmatprep.subr.bf16.mxu0 0
  %3990 = vmatpush1.bf16.msra.mxu0 %v3433
  %3991 = vmatprep.subr.bf16.mxu0 0
  %3992 = vmatpush1.bf16.msra.mxu0 %v3440
  %3993 = vmatprep.subr.bf16.mxu0 0
  %3994 = vmatpush1.bf16.msra.mxu0 %v3447
  %3995 = vmatprep.subr.bf16.mxu0 0
  %3996 = vmatpush1.bf16.msra.mxu0 %v3454
  %3997 = vmatprep.mubr.bf16.mxu0 %v2233
  %3998 = vmatmul.mubr.bf16.gmra.mrb[0].mxu0 %v2232
  %v3999 = vpop.f32.mrb[0].mxu0
  %v4000 = vadd.f32 %v3960, %v3999
  %v4001 = vpop.f32.mrb[0].mxu0
  %v4002 = vpop.f32.mrb[0].mxu0
  %v4003 = vpop.f32.mrb[0].mxu0
  %4004 = vdwg.mxu0
  %v4005 = vsub.f32 0.0, %v3755
  %v4006 = vsub.f32 0.0, %v3757
  %v4007 = vsub.f32 0.0, %v3837
  %v4008 = vsub.f32 0.0, %v3839
  %v4009 = vsub.f32 0.0, %v3919
  %v4010 = vsub.f32 0.0, %v3921
  %v4011 = vsub.f32 0.0, %v4000
  %v4012 = vmul.f32 %v4005, 1.442695
  %v4013 = vpow.pop %v4012
  %v4014 = vmul.f32 %v4006, 1.442695
  %v4015 = vpow.pop %v4014
  %v4016 = vmul.f32 %v4007, 1.442695
  %v4017 = vpow.pop %v4016
  %v4018 = vmul.f32 %v4008, 1.442695
  %v4019 = vpow.pop %v4018
  %v4020 = vmul.f32 %v4009, 1.442695
  %v4021 = vpow.pop %v4020
  %v4022 = vmul.f32 %v4010, 1.442695
  %v4023 = vpow.pop %v4022
  %v4024 = vmul.f32 %v4011, 1.442695
  %v4025 = vpow.pop %v4024
  %v4026 = vadd.f32 %v4013, 1.0
  %v4027 = vadd.f32 %v4015, 1.0
  %v4028 = vadd.f32 %v4017, 1.0
  %v4029 = vadd.f32 %v4019, 1.0
  %v4030 = vadd.f32 %v4021, 1.0
  %v4031 = vadd.f32 %v4023, 1.0
  %v4032 = vadd.f32 %v4025, 1.0
  %v4033 = vrcp.pop %v4026
  %v4034 = vrcp.pop %v4027
  %v4035 = vrcp.pop %v4028
  %v4036 = vrcp.pop %v4029
  %v4037 = vrcp.pop %v4030
  %v4038 = vrcp.pop %v4031
  %v4039 = vrcp.pop %v4032
  %4040 = vst [vmem:[%s9] sm:$0xff] %v4033
  %4041 = vst [vmem:[%s9 + $0x8] sm:$0xff] %v4034
  %4042 = vst [vmem:[%s9 + $0x10] sm:$0xff] %v4035
  %4043 = vst [vmem:[%s9 + $0x18] sm:$0xff] %v4036
  %4044 = vst [vmem:[%s9 + $0x20] sm:$0xff] %v4037
  %4045 = vst [vmem:[%s9 + $0x28] sm:$0xff] %v4038
  %4046 = vst.msk [vmem:[%s9 + $0x30] sm:$0xff] %vm1245, %v4039
  // Predicated region
  $region38: #{ae_contrastive_forward.1} parent=0 // pred_check
    _
  $region39: #{ae_contrastive_forward.1} parent=0 // pred_check_branch
    %4048 = sbr.rel (0) target = $region41
  $region40: #{ae_contrastive_forward.1} parent=0 // pred_region
    _
  $region41: #{ae_contrastive_forward.1} parent=0 // pred_fallthru
    _
  // Predicated region
  $region42: #{ae_contrastive_forward.1} parent=0 // pred_check
    _
  $region43: #{ae_contrastive_forward.1} parent=0 // pred_check_branch
    %4050 = sbr.rel (0) target = $region45
  $region44: #{ae_contrastive_forward.1} parent=0 // pred_region
    _
  $region45: #{ae_contrastive_forward.1} parent=0 // pred_fallthru
    _

</llo_original>
